<compile_context>
chip_gen: v5e
topology: v5e:2x2
jax: 0.10.0
libtpu: 0.0.40
codegen_flags: <defaults>
</compile_context>

<pallas_src>
import jax
import jax.numpy as jnp
from jax.experimental import pallas as pl
from jax.experimental.pallas import tpu as pltpu


# -----------------------------------------------------------------------------
# Fused forward (NCHW in, NCHW out, matching the PyTorch module)
# -----------------------------------------------------------------------------
def dvdnet_forward(x_nchw, params):
    N, C, H, W = x_nchw.shape
    nf = params["w1"].shape[1]
    out_nc = params["w_ft"].shape[1]
    assert H % 2 == 0, "interlaced frames need even height"
    assert C == out_nc and C == params["w1"].shape[2]

    Wp = W + 2                  # padded row width (one zero column each side)
    HH = H // 2                 # rows per field
    RH = HH + 2                 # padded half-rows (+1 real pad row, +1 overrun row)
    S_in = RH * Wp              # flat length of one padded half-image
    Lh = HH * Wp                # flat length of one field of conv outputs

    # ---- parity-split, zero-padded, flattened input (3-channel glue, cheap) ----
    xp = jnp.pad(x_nchw, ((0, 0), (0, 0), (1, 1), (1, 1)))               # (N,C,H+2,Wp)
    halves = jnp.stack([xp[:, :, 0::2, :], xp[:, :, 1::2, :]], axis=1)   # (N,2,C,HH+1,Wp)
    halves = jnp.pad(halves, ((0, 0), (0, 0), (0, 0), (0, 1), (0, 0)))   # overrun row
    x_split = halves.reshape(N, 2, C, S_in).astype(jnp.bfloat16)

    # ---- fuse the two branches into a single set of weights ----
    wb = jnp.concatenate([params["w_bt"], params["w_bb"]], axis=1)       # (9, nf, nf//2)
    bb = jnp.concatenate([params["b_bt"], params["b_bb"]], axis=0)       # (nf, 1)
    zblk = jnp.zeros_like(params["w_ft"])                                # (9, out_nc, nf//2)
    wf = jnp.concatenate(                                                # block-diagonal
        [jnp.concatenate([params["w_ft"], zblk], axis=2),
         jnp.concatenate([zblk, params["w_fb"]], axis=2)], axis=1)       # (9, 2*out_nc, nf)
    bf = jnp.concatenate([params["b_ft"], params["b_fb"]], axis=0)       # (2*out_nc, 1)

    weights = [params["w1"], params["b1"], params["w2"], params["b2"],
               params["w3"], params["b3"], wb, bb, wf, bf]

    # -------------------------------------------------------------------------
    # Kernel: one grid step == one image; all features stay in VMEM.
    # Each padded feature buffer is (2, C, RH*Wp): index 0 = even padded rows,
    # index 1 = odd padded rows, flattened row-major with width Wp.
    # -------------------------------------------------------------------------
    def kernel(x_ref, w1_ref, b1_ref, w2_ref, b2_ref, w3_ref, b3_ref,
               wb_ref, bb_ref, wf_ref, bf_ref, out_ref, pad_a, pad_h, pad_b):
        # Lanes whose flat column index is a real image column (not a pad column).
        col = jax.lax.broadcasted_iota(jnp.int32, (1, Lh), 1) % Wp
        valid = col < W

        # Re-zero only the tiny pad strips the masked interior writes never
        # touch (top pad row + first left-pad column + bottom pad row).  Done
        # every grid step so the kernel is correct under megacore grid splits.
        for buf in (pad_a, pad_h, pad_b):
            cb = buf.shape[1]
            buf[0, :, pl.ds(0, Wp + 1)] = jnp.zeros((cb, Wp + 1), buf.dtype)
            buf[1, :, pl.ds(0, 1)] = jnp.zeros((cb, 1), buf.dtype)
            buf[1, :, pl.ds(Lh, Wp)] = jnp.zeros((cb, Wp), buf.dtype)

        def conv3x3(load_tap, w9, p):
            # 3x3 conv producing the parity-`p` output rows as (Cout, Lh) f32.
            # Tap (kh, kw) for output row 2r+p reads padded row 2r+p+kh, which in
            # the parity-split flat layout is a plain lane-offset slice.
            acc = None
            for kh in range(3):
                sp, dr = (p + kh) % 2, (p + kh) // 2
                for kw in range(3):
                    tap = load_tap(sp, dr * Wp + kw)                 # (Cin, Lh) bf16
                    d = jnp.dot(w9[kh * 3 + kw], tap,
                                preferred_element_type=jnp.float32)
                    acc = d if acc is None else acc + d
            return acc

        def store_field(dst, p, val_f32):
            # Output row 2r+p -> padded row 2r+p+1 of the next buffer.  Masking
            # pad-column lanes to zero keeps the destination's zero padding.
            v = jnp.where(valid, val_f32, 0.0).astype(dst.dtype)
            dst[1 - p, :, pl.ds(1 + p * Wp, Lh)] = v

        x_tap = lambda sp, off: x_ref[0, sp, :, pl.ds(off, Lh)]
        a_tap = lambda sp, off: pad_a[sp, :, pl.ds(off, Lh)]
        h_tap = lambda sp, off: pad_h[sp, :, pl.ds(off, Lh)]
        b_tap = lambda sp, off: pad_b[sp, :, pl.ds(off, Lh)]

        w1, b1 = w1_ref[...], b1_ref[...]
        w2, b2 = w2_ref[...], b2_ref[...]
        w3, b3 = w3_ref[0], b3_ref[...]
        wbv, bbv = wb_ref[...], bb_ref[...]
        wfv, bfv = wf_ref[...], bf_ref[...]

        # Shared trunk: conv3x3+ReLU -> conv3x3+ReLU -> conv1x1
        for p in (0, 1):
            f1 = jnp.maximum(conv3x3(x_tap, w1, p) + b1, 0.0)
            store_field(pad_a, p, f1)
        for p in (0, 1):
            f2 = jnp.maximum(conv3x3(a_tap, w2, p) + b2, 0.0).astype(jnp.bfloat16)
            h = jnp.dot(w3, f2, preferred_element_type=jnp.float32) + b3
            store_field(pad_h, p, h)
        # Both branch 3x3 convs fused into one 2x-wide conv.
        for p in (0, 1):
            fb = conv3x3(h_tap, wbv, p) + bbv
            store_field(pad_b, p, fb)
        # Fused final stride-(2,1) convs: their outputs are exactly the p=0
        # rows of a stride-1 conv, so only that parity is computed.
        out_ref[0] = conv3x3(b_tap, wfv, 0) + bfv

    grid_spec = pltpu.PrefetchScalarGridSpec(
        num_scalar_prefetch=0,
        grid=(N,),
        in_specs=[pl.BlockSpec((1, 2, C, S_in), lambda n: (n, 0, 0, 0))]
                 + [pl.BlockSpec(w.shape, lambda n, _nd=w.ndim: (0,) * _nd)
                    for w in weights],
        out_specs=pl.BlockSpec((1, 2 * out_nc, Lh), lambda n: (n, 0, 0)),
        scratch_shapes=[
            pltpu.VMEM((2, nf, S_in), jnp.bfloat16),        # padded conv1 output
            pltpu.VMEM((2, nf // 2, S_in), jnp.bfloat16),   # padded trunk output
            pltpu.VMEM((2, nf, S_in), jnp.bfloat16),        # padded fused-branch output
        ])

    yz = pl.pallas_call(
        kernel,
        out_shape=jax.ShapeDtypeStruct((N, 2 * out_nc, Lh), jnp.float32),
        grid_spec=grid_spec,
        compiler_params=pltpu.CompilerParams(
            dimension_semantics=("parallel",),
            vmem_limit_bytes=48 * 1024 * 1024),
    )(x_split, *weights)

    # TODO(synk): for real frame sizes add an H-tiled grid axis (with per-conv
    # row halos) so per-image VMEM residency fits v7x's 64 MiB and both
    # TensorCores get work even at N=1.

    # ---- replace_field: splice computed half-fields with pass-through fields ----
    yz = yz.reshape(N, 2 * out_nc, HH, Wp)[:, :, :, :W]     # drop pad columns
    y_half, z_half = yz[:, :out_nc], yz[:, out_nc:]
    x_even, x_odd = x_nchw[:, :, 0::2, :], x_nchw[:, :, 1::2, :]
    y_full = jnp.stack([x_even, y_half], axis=3).reshape(N, out_nc, H, W)
    z_full = jnp.stack([z_half, x_odd], axis=3).reshape(N, out_nc, H, W)
    return y_full, z_full


# -----------------------------------------------------------------------------
# Deterministic parameter init.  Weight layout: (K*K, Cout, Cin) bf16,
# bias (Cout, 1) f32.  Tap index t = kh*3 + kw.
# -----------------------------------------------------------------------------
def _init_conv(key, k, cin, cout):
    kw_, kb_ = jax.random.split(key)
    fan_in = k * k * cin
    w = (jax.random.normal(kw_, (k * k, cout, cin), jnp.float32)
         * (1.0 / (fan_in ** 0.5))).astype(jnp.bfloat16)
    b = 0.01 * jax.random.normal(kb_, (cout, 1), jnp.float32)
    return w, b


def init_dvdnet_params(key, in_nc=3, out_nc=3, nf=16):
    keys = jax.random.split(key, 7)
    p = {}
    p["w1"], p["b1"] = _init_conv(keys[0], 3, in_nc, nf)            # conv_fea_1
    p["w2"], p["b2"] = _init_conv(keys[1], 3, nf, nf)               # conv_fea_2
    p["w3"], p["b3"] = _init_conv(keys[2], 1, nf, nf // 2)          # conv_fea_3 (1x1)
    p["w_bt"], p["b_bt"] = _init_conv(keys[3], 3, nf // 2, nf // 2)  # branch top
    p["w_bb"], p["b_bb"] = _init_conv(keys[4], 3, nf // 2, nf // 2)  # branch bottom
    p["w_ft"], p["b_ft"] = _init_conv(keys[5], 3, nf // 2, out_nc)   # final top, stride (2,1)
    p["w_fb"], p["b_fb"] = _init_conv(keys[6], 3, nf // 2, out_nc)   # final bottom, stride (2,1)
    return p


# -----------------------------------------------------------------------------
# Pure-JAX reference (mirrors the PyTorch module, incl. replace_field, with the
# kernel's bf16-operand / f32-accumulate rounding points).
# -----------------------------------------------------------------------------
def _conv_ref(x, w9, b, stride=(1, 1)):
    k = 3 if w9.shape[0] == 9 else 1
    w = (w9.astype(jnp.float32)
         .reshape(k, k, w9.shape[1], w9.shape[2])
         .transpose(2, 3, 0, 1))                                    # OIHW
    pad = (k - 1) // 2
    y = jax.lax.conv_general_dilated(
        x, w, window_strides=stride, padding=((pad, pad), (pad, pad)),
        dimension_numbers=("NCHW", "OIHW", "NCHW"),
        precision=jax.lax.Precision.HIGHEST)
    return y + b.reshape(1, -1, 1, 1)


def _bf16(x):
    return x.astype(jnp.bfloat16).astype(jnp.float32)


def _vertical_upscale(x, upfield=True):
    n, c, h, w = x.shape
    z = jnp.zeros_like(x)
    out = jnp.concatenate([x, z] if upfield else [z, x], axis=3)
    return out.reshape(n, c, h * 2, w)


def _replace_field(x, inp, upfield=True):
    upper, lower = inp[:, :, 0::2, :], inp[:, :, 1::2, :]
    if upfield:
        return _vertical_upscale(x, False) + _vertical_upscale(upper, True)
    return _vertical_upscale(x, True) + _vertical_upscale(lower, False)


def dvdnet_reference(x, p):
    a = _bf16(x)
    f1 = _bf16(jnp.maximum(_conv_ref(a, p["w1"], p["b1"]), 0.0))
    f2 = _bf16(jnp.maximum(_conv_ref(f1, p["w2"], p["b2"]), 0.0))
    h = _bf16(_conv_ref(f2, p["w3"], p["b3"]))
    bt = _bf16(_conv_ref(h, p["w_bt"], p["b_bt"]))
    bb = _bf16(_conv_ref(h, p["w_bb"], p["b_bb"]))
    y = _conv_ref(bt, p["w_ft"], p["b_ft"], stride=(2, 1))
    z = _conv_ref(bb, p["w_fb"], p["b_fb"], stride=(2, 1))
    return _replace_field(y, x, upfield=True), _replace_field(z, x, upfield=False)


if __name__ == "__main__":
    key = jax.random.PRNGKey(0)
    k_x, k_p = jax.random.split(key)

    N, C, H, W = 2, 3, 16, 16          # small, even height (interlaced frames)
    x = jax.random.normal(k_x, (N, C, H, W), jnp.float32)
    params = init_dvdnet_params(k_p, in_nc=C, out_nc=C, nf=16)

    fwd = jax.jit(dvdnet_forward)
    y_full, z_full = fwd(x, params)
    jax.block_until_ready((y_full, z_full))

    assert y_full.shape == (N, C, H, W) and z_full.shape == (N, C, H, W)
    # replace_field pass-through fields must be the exact input fields.
    assert bool(jnp.all(y_full[:, :, 0::2, :] == x[:, :, 0::2, :]))
    assert bool(jnp.all(z_full[:, :, 1::2, :] == x[:, :, 1::2, :]))

    # Full numeric check against the pure-JAX reference of the PyTorch module.
    y_ref, z_ref = dvdnet_reference(x, params)
    assert bool(jnp.allclose(y_full, y_ref, atol=2e-3, rtol=2e-3)), \
        float(jnp.max(jnp.abs(y_full - y_ref)))
    assert bool(jnp.allclose(z_full, z_ref, atol=2e-3, rtol=2e-3)), \
        float(jnp.max(jnp.abs(z_full - z_ref)))

    print("KERNEL_OK")
</pallas_src>

<mosaic_0001>
module attributes {stable_mosaic.version = 11 : i64} {
  func.func @kernel(%arg0: i32, %arg1: memref<1x2x3x180xbf16, #tpu.memory_space<vmem>>, %arg2: memref<9x16x3xbf16, #tpu.memory_space<vmem>>, %arg3: memref<16x1xf32, #tpu.memory_space<vmem>>, %arg4: memref<9x16x16xbf16, #tpu.memory_space<vmem>>, %arg5: memref<16x1xf32, #tpu.memory_space<vmem>>, %arg6: memref<1x8x16xbf16, #tpu.memory_space<vmem>>, %arg7: memref<8x1xf32, #tpu.memory_space<vmem>>, %arg8: memref<9x16x8xbf16, #tpu.memory_space<vmem>>, %arg9: memref<16x1xf32, #tpu.memory_space<vmem>>, %arg10: memref<9x6x16xbf16, #tpu.memory_space<vmem>>, %arg11: memref<6x1xf32, #tpu.memory_space<vmem>>, %arg12: memref<1x6x144xf32, #tpu.memory_space<vmem>>, %arg13: memref<2x16x180xbf16, #tpu.memory_space<vmem>>, %arg14: memref<2x8x180xbf16, #tpu.memory_space<vmem>>, %arg15: memref<2x16x180xbf16, #tpu.memory_space<vmem>>) attributes {dimension_semantics = [#tpu.dimension_semantics<parallel>], iteration_bounds = array<i64: 2>, scalar_prefetch = 0 : i64, scratch_operands = 3 : i64, tpu.core_type = #tpu.core_type<tc>, window_params = [{transform_indices = @transform_0, window_bounds = array<i64: 1, 2, 3, 180>}, {pipeline_mode = #tpu.pipeline_mode<synchronous>, transform_indices = @transform_1, window_bounds = array<i64: 9, 16, 3>}, {pipeline_mode = #tpu.pipeline_mode<synchronous>, transform_indices = @transform_2, window_bounds = array<i64: 16, 1>}, {pipeline_mode = #tpu.pipeline_mode<synchronous>, transform_indices = @transform_3, window_bounds = array<i64: 9, 16, 16>}, {pipeline_mode = #tpu.pipeline_mode<synchronous>, transform_indices = @transform_4, window_bounds = array<i64: 16, 1>}, {pipeline_mode = #tpu.pipeline_mode<synchronous>, transform_indices = @transform_5, window_bounds = array<i64: 1, 8, 16>}, {pipeline_mode = #tpu.pipeline_mode<synchronous>, transform_indices = @transform_6, window_bounds = array<i64: 8, 1>}, {pipeline_mode = #tpu.pipeline_mode<synchronous>, transform_indices = @transform_7, window_bounds = array<i64: 9, 16, 8>}, {pipeline_mode = #tpu.pipeline_mode<synchronous>, transform_indices = @transform_8, window_bounds = array<i64: 16, 1>}, {pipeline_mode = #tpu.pipeline_mode<synchronous>, transform_indices = @transform_9, window_bounds = array<i64: 9, 6, 16>}, {pipeline_mode = #tpu.pipeline_mode<synchronous>, transform_indices = @transform_10, window_bounds = array<i64: 6, 1>}, {transform_indices = @transform_11, window_bounds = array<i64: 1, 6, 144>}]} {
    %0 = tpu.iota {dimensions = array<i32: 1>} : vector<1x144xi32>
    %c18_i32 = arith.constant 18 : i32
    %c0_i32 = arith.constant 0 : i32
    %1 = arith.cmpi eq, %c18_i32, %c0_i32 : i32
    %c1_i32 = arith.constant 1 : i32
    %2 = arith.select %1, %c1_i32, %c18_i32 : i32
    %3 = vector.broadcast %2 : i32 to vector<1x144xi32>
    %4 = arith.remsi %0, %3 : vector<1x144xi32>
    %c0_i32_0 = arith.constant 0 : i32
    %5 = vector.broadcast %c0_i32_0 : i32 to vector<1x144xi32>
    %6 = arith.cmpi ne, %4, %5 : vector<1x144xi32>
    %c0_i32_1 = arith.constant 0 : i32
    %7 = vector.broadcast %c0_i32_1 : i32 to vector<1x144xi32>
    %8 = arith.cmpi slt, %4, %7 : vector<1x144xi32>
    %c0_i32_2 = arith.constant 0 : i32
    %9 = arith.cmpi slt, %2, %c0_i32_2 : i32
    %10 = vector.broadcast %9 : i1 to vector<1x144xi1>
    %11 = vector.broadcast %10 : vector<1x144xi1> to vector<1x144xi1>
    %12 = arith.xori %8, %11 : vector<1x144xi1>
    %13 = arith.andi %12, %6 : vector<1x144xi1>
    %14 = vector.broadcast %2 : i32 to vector<1x144xi32>
    %15 = arith.addi %4, %14 : vector<1x144xi32>
    %16 = arith.select %13, %15, %4 : vector<1x144xi1>, vector<1x144xi32>
    %c16_i32 = arith.constant 16 : i32
    %17 = vector.broadcast %c16_i32 : i32 to vector<1x144xi32>
    %18 = arith.cmpi slt, %16, %17 : vector<1x144xi32>
    %cst = arith.constant 0.000000e+00 : bf16
    %19 = vector.broadcast %cst : bf16 to vector<16x19xbf16>
    %c0 = arith.constant 0 : index
    %c0_3 = arith.constant 0 : index
    %c0_4 = arith.constant 0 : index
    %20 = vector.load %arg13[%c0, %c0_3, %c0_4] : memref<2x16x180xbf16, #tpu.memory_space<vmem>>, vector<1x16x19xbf16>
    %21 = vector.shape_cast %20 : vector<1x16x19xbf16> to vector<16x19xbf16>
    %22 = vector.shape_cast %19 : vector<16x19xbf16> to vector<1x16x19xbf16>
    tpu.vector_store %arg13[%c0, %c0_3, %c0_4], %22 {strides = array<i32>} : memref<2x16x180xbf16, #tpu.memory_space<vmem>>, vector<1x16x19xbf16>,
    %cst_5 = arith.constant 0.000000e+00 : bf16
    %23 = vector.broadcast %cst_5 : bf16 to vector<16x1xbf16>
    %c1 = arith.constant 1 : index
    %c0_6 = arith.constant 0 : index
    %c0_7 = arith.constant 0 : index
    %24 = vector.load %arg13[%c1, %c0_6, %c0_7] : memref<2x16x180xbf16, #tpu.memory_space<vmem>>, vector<1x16x1xbf16>
    %25 = vector.shape_cast %24 : vector<1x16x1xbf16> to vector<16x1xbf16>
    %26 = vector.shape_cast %23 : vector<16x1xbf16> to vector<1x16x1xbf16>
    tpu.vector_store %arg13[%c1, %c0_6, %c0_7], %26 {strides = array<i32>} : memref<2x16x180xbf16, #tpu.memory_space<vmem>>, vector<1x16x1xbf16>,
    %cst_8 = arith.constant 0.000000e+00 : bf16
    %27 = vector.broadcast %cst_8 : bf16 to vector<16x18xbf16>
    %c1_9 = arith.constant 1 : index
    %c0_10 = arith.constant 0 : index
    %c144 = arith.constant 144 : index
    %28 = vector.load %arg13[%c1_9, %c0_10, %c144] : memref<2x16x180xbf16, #tpu.memory_space<vmem>>, vector<1x16x18xbf16>
    %29 = vector.shape_cast %28 : vector<1x16x18xbf16> to vector<16x18xbf16>
    %30 = vector.shape_cast %27 : vector<16x18xbf16> to vector<1x16x18xbf16>
    tpu.vector_store %arg13[%c1_9, %c0_10, %c144], %30 {strides = array<i32>} : memref<2x16x180xbf16, #tpu.memory_space<vmem>>, vector<1x16x18xbf16>,
    %cst_11 = arith.constant 0.000000e+00 : bf16
    %31 = vector.broadcast %cst_11 : bf16 to vector<8x19xbf16>
    %c0_12 = arith.constant 0 : index
    %c0_13 = arith.constant 0 : index
    %c0_14 = arith.constant 0 : index
    %32 = vector.load %arg14[%c0_12, %c0_13, %c0_14] : memref<2x8x180xbf16, #tpu.memory_space<vmem>>, vector<1x8x19xbf16>
    %33 = vector.shape_cast %32 : vector<1x8x19xbf16> to vector<8x19xbf16>
    %34 = vector.shape_cast %31 : vector<8x19xbf16> to vector<1x8x19xbf16>
    tpu.vector_store %arg14[%c0_12, %c0_13, %c0_14], %34 {strides = array<i32>} : memref<2x8x180xbf16, #tpu.memory_space<vmem>>, vector<1x8x19xbf16>,
    %cst_15 = arith.constant 0.000000e+00 : bf16
    %35 = vector.broadcast %cst_15 : bf16 to vector<8x1xbf16>
    %c1_16 = arith.constant 1 : index
    %c0_17 = arith.constant 0 : index
    %c0_18 = arith.constant 0 : index
    %36 = vector.load %arg14[%c1_16, %c0_17, %c0_18] : memref<2x8x180xbf16, #tpu.memory_space<vmem>>, vector<1x8x1xbf16>
    %37 = vector.shape_cast %36 : vector<1x8x1xbf16> to vector<8x1xbf16>
    %38 = vector.shape_cast %35 : vector<8x1xbf16> to vector<1x8x1xbf16>
    tpu.vector_store %arg14[%c1_16, %c0_17, %c0_18], %38 {strides = array<i32>} : memref<2x8x180xbf16, #tpu.memory_space<vmem>>, vector<1x8x1xbf16>,
    %cst_19 = arith.constant 0.000000e+00 : bf16
    %39 = vector.broadcast %cst_19 : bf16 to vector<8x18xbf16>
    %c1_20 = arith.constant 1 : index
    %c0_21 = arith.constant 0 : index
    %c144_22 = arith.constant 144 : index
    %40 = vector.load %arg14[%c1_20, %c0_21, %c144_22] : memref<2x8x180xbf16, #tpu.memory_space<vmem>>, vector<1x8x18xbf16>
    %41 = vector.shape_cast %40 : vector<1x8x18xbf16> to vector<8x18xbf16>
    %42 = vector.shape_cast %39 : vector<8x18xbf16> to vector<1x8x18xbf16>
    tpu.vector_store %arg14[%c1_20, %c0_21, %c144_22], %42 {strides = array<i32>} : memref<2x8x180xbf16, #tpu.memory_space<vmem>>, vector<1x8x18xbf16>,
    %cst_23 = arith.constant 0.000000e+00 : bf16
    %43 = vector.broadcast %cst_23 : bf16 to vector<16x19xbf16>
    %c0_24 = arith.constant 0 : index
    %c0_25 = arith.constant 0 : index
    %c0_26 = arith.constant 0 : index
    %44 = vector.load %arg15[%c0_24, %c0_25, %c0_26] : memref<2x16x180xbf16, #tpu.memory_space<vmem>>, vector<1x16x19xbf16>
    %45 = vector.shape_cast %44 : vector<1x16x19xbf16> to vector<16x19xbf16>
    %46 = vector.shape_cast %43 : vector<16x19xbf16> to vector<1x16x19xbf16>
    tpu.vector_store %arg15[%c0_24, %c0_25, %c0_26], %46 {strides = array<i32>} : memref<2x16x180xbf16, #tpu.memory_space<vmem>>, vector<1x16x19xbf16>,
    %cst_27 = arith.constant 0.000000e+00 : bf16
    %47 = vector.broadcast %cst_27 : bf16 to vector<16x1xbf16>
    %c1_28 = arith.constant 1 : index
    %c0_29 = arith.constant 0 : index
    %c0_30 = arith.constant 0 : index
    %48 = vector.load %arg15[%c1_28, %c0_29, %c0_30] : memref<2x16x180xbf16, #tpu.memory_space<vmem>>, vector<1x16x1xbf16>
    %49 = vector.shape_cast %48 : vector<1x16x1xbf16> to vector<16x1xbf16>
    %50 = vector.shape_cast %47 : vector<16x1xbf16> to vector<1x16x1xbf16>
    tpu.vector_store %arg15[%c1_28, %c0_29, %c0_30], %50 {strides = array<i32>} : memref<2x16x180xbf16, #tpu.memory_space<vmem>>, vector<1x16x1xbf16>,
    %cst_31 = arith.constant 0.000000e+00 : bf16
    %51 = vector.broadcast %cst_31 : bf16 to vector<16x18xbf16>
    %c1_32 = arith.constant 1 : index
    %c0_33 = arith.constant 0 : index
    %c144_34 = arith.constant 144 : index
    %52 = vector.load %arg15[%c1_32, %c0_33, %c144_34] : memref<2x16x180xbf16, #tpu.memory_space<vmem>>, vector<1x16x18xbf16>
    %53 = vector.shape_cast %52 : vector<1x16x18xbf16> to vector<16x18xbf16>
    %54 = vector.shape_cast %51 : vector<16x18xbf16> to vector<1x16x18xbf16>
    tpu.vector_store %arg15[%c1_32, %c0_33, %c144_34], %54 {strides = array<i32>} : memref<2x16x180xbf16, #tpu.memory_space<vmem>>, vector<1x16x18xbf16>,
    %c0_35 = arith.constant 0 : index
    %c0_36 = arith.constant 0 : index
    %c0_37 = arith.constant 0 : index
    %55 = vector.load %arg2[%c0_35, %c0_36, %c0_37] : memref<9x16x3xbf16, #tpu.memory_space<vmem>>, vector<9x16x3xbf16>
    %c0_38 = arith.constant 0 : index
    %c0_39 = arith.constant 0 : index
    %56 = vector.load %arg3[%c0_38, %c0_39] : memref<16x1xf32, #tpu.memory_space<vmem>>, vector<16x1xf32>
    %c0_40 = arith.constant 0 : index
    %c0_41 = arith.constant 0 : index
    %c0_42 = arith.constant 0 : index
    %57 = vector.load %arg4[%c0_40, %c0_41, %c0_42] : memref<9x16x16xbf16, #tpu.memory_space<vmem>>, vector<9x16x16xbf16>
    %c0_43 = arith.constant 0 : index
    %c0_44 = arith.constant 0 : index
    %58 = vector.load %arg5[%c0_43, %c0_44] : memref<16x1xf32, #tpu.memory_space<vmem>>, vector<16x1xf32>
    %c0_45 = arith.constant 0 : index
    %c0_46 = arith.constant 0 : index
    %c0_47 = arith.constant 0 : index
    %59 = vector.load %arg6[%c0_45, %c0_46, %c0_47] : memref<1x8x16xbf16, #tpu.memory_space<vmem>>, vector<1x8x16xbf16>
    %60 = vector.shape_cast %59 : vector<1x8x16xbf16> to vector<8x16xbf16>
    %c0_48 = arith.constant 0 : index
    %c0_49 = arith.constant 0 : index
    %61 = vector.load %arg7[%c0_48, %c0_49] : memref<8x1xf32, #tpu.memory_space<vmem>>, vector<8x1xf32>
    %c0_50 = arith.constant 0 : index
    %c0_51 = arith.constant 0 : index
    %c0_52 = arith.constant 0 : index
    %62 = vector.load %arg8[%c0_50, %c0_51, %c0_52] : memref<9x16x8xbf16, #tpu.memory_space<vmem>>, vector<9x16x8xbf16>
    %c0_53 = arith.constant 0 : index
    %c0_54 = arith.constant 0 : index
    %63 = vector.load %arg9[%c0_53, %c0_54] : memref<16x1xf32, #tpu.memory_space<vmem>>, vector<16x1xf32>
    %c0_55 = arith.constant 0 : index
    %c0_56 = arith.constant 0 : index
    %c0_57 = arith.constant 0 : index
    %64 = vector.load %arg10[%c0_55, %c0_56, %c0_57] : memref<9x6x16xbf16, #tpu.memory_space<vmem>>, vector<9x6x16xbf16>
    %c0_58 = arith.constant 0 : index
    %c0_59 = arith.constant 0 : index
    %65 = vector.load %arg11[%c0_58, %c0_59] : memref<6x1xf32, #tpu.memory_space<vmem>>, vector<6x1xf32>
    %c0_60 = arith.constant 0 : index
    %c0_61 = arith.constant 0 : index
    %c0_62 = arith.constant 0 : index
    %c0_63 = arith.constant 0 : index
    %66 = vector.load %arg1[%c0_60, %c0_61, %c0_62, %c0_63] : memref<1x2x3x180xbf16, #tpu.memory_space<vmem>>, vector<1x1x3x144xbf16>
    %67 = vector.shape_cast %66 : vector<1x1x3x144xbf16> to vector<3x144xbf16>
    %68 = vector.extract_strided_slice %55 {offsets = [0, 0, 0], sizes = [1, 16, 3], strides = [1, 1, 1]} : vector<9x16x3xbf16> to vector<1x16x3xbf16>
    %69 = vector.shape_cast %68 : vector<1x16x3xbf16> to vector<16x3xbf16>
    %cst_64 = arith.constant dense<0.000000e+00> : vector<16x144xf32>
    %70 = tpu.matmul %69, %67, %cst_64 {dimension_numbers = #tpu.dot_dimension_numbers<[1], [0], [0], [1], [0, 0, 1, 1], [], []>} : vector<16x3xbf16>, vector<3x144xbf16>, vector<16x144xf32> -> vector<16x144xf32>
    %c0_65 = arith.constant 0 : index
    %c0_66 = arith.constant 0 : index
    %c0_67 = arith.constant 0 : index
    %c1_68 = arith.constant 1 : index
    %71 = vector.load %arg1[%c0_65, %c0_66, %c0_67, %c1_68] : memref<1x2x3x180xbf16, #tpu.memory_space<vmem>>, vector<1x1x3x144xbf16>
    %72 = vector.shape_cast %71 : vector<1x1x3x144xbf16> to vector<3x144xbf16>
    %73 = vector.extract_strided_slice %55 {offsets = [1, 0, 0], sizes = [1, 16, 3], strides = [1, 1, 1]} : vector<9x16x3xbf16> to vector<1x16x3xbf16>
    %74 = vector.shape_cast %73 : vector<1x16x3xbf16> to vector<16x3xbf16>
    %cst_69 = arith.constant dense<0.000000e+00> : vector<16x144xf32>
    %75 = tpu.matmul %74, %72, %cst_69 {dimension_numbers = #tpu.dot_dimension_numbers<[1], [0], [0], [1], [0, 0, 1, 1], [], []>} : vector<16x3xbf16>, vector<3x144xbf16>, vector<16x144xf32> -> vector<16x144xf32>
    %76 = arith.addf %70, %75 : vector<16x144xf32>
    %c0_70 = arith.constant 0 : index
    %c0_71 = arith.constant 0 : index
    %c0_72 = arith.constant 0 : index
    %c2 = arith.constant 2 : index
    %77 = vector.load %arg1[%c0_70, %c0_71, %c0_72, %c2] : memref<1x2x3x180xbf16, #tpu.memory_space<vmem>>, vector<1x1x3x144xbf16>
    %78 = vector.shape_cast %77 : vector<1x1x3x144xbf16> to vector<3x144xbf16>
    %79 = vector.extract_strided_slice %55 {offsets = [2, 0, 0], sizes = [1, 16, 3], strides = [1, 1, 1]} : vector<9x16x3xbf16> to vector<1x16x3xbf16>
    %80 = vector.shape_cast %79 : vector<1x16x3xbf16> to vector<16x3xbf16>
    %cst_73 = arith.constant dense<0.000000e+00> : vector<16x144xf32>
    %81 = tpu.matmul %80, %78, %cst_73 {dimension_numbers = #tpu.dot_dimension_numbers<[1], [0], [0], [1], [0, 0, 1, 1], [], []>} : vector<16x3xbf16>, vector<3x144xbf16>, vector<16x144xf32> -> vector<16x144xf32>
    %82 = arith.addf %76, %81 : vector<16x144xf32>
    %c0_74 = arith.constant 0 : index
    %c1_75 = arith.constant 1 : index
    %c0_76 = arith.constant 0 : index
    %c0_77 = arith.constant 0 : index
    %83 = vector.load %arg1[%c0_74, %c1_75, %c0_76, %c0_77] : memref<1x2x3x180xbf16, #tpu.memory_space<vmem>>, vector<1x1x3x144xbf16>
    %84 = vector.shape_cast %83 : vector<1x1x3x144xbf16> to vector<3x144xbf16>
    %85 = vector.extract_strided_slice %55 {offsets = [3, 0, 0], sizes = [1, 16, 3], strides = [1, 1, 1]} : vector<9x16x3xbf16> to vector<1x16x3xbf16>
    %86 = vector.shape_cast %85 : vector<1x16x3xbf16> to vector<16x3xbf16>
    %cst_78 = arith.constant dense<0.000000e+00> : vector<16x144xf32>
    %87 = tpu.matmul %86, %84, %cst_78 {dimension_numbers = #tpu.dot_dimension_numbers<[1], [0], [0], [1], [0, 0, 1, 1], [], []>} : vector<16x3xbf16>, vector<3x144xbf16>, vector<16x144xf32> -> vector<16x144xf32>
    %88 = arith.addf %82, %87 : vector<16x144xf32>
    %c0_79 = arith.constant 0 : index
    %c1_80 = arith.constant 1 : index
    %c0_81 = arith.constant 0 : index
    %c1_82 = arith.constant 1 : index
    %89 = vector.load %arg1[%c0_79, %c1_80, %c0_81, %c1_82] : memref<1x2x3x180xbf16, #tpu.memory_space<vmem>>, vector<1x1x3x144xbf16>
    %90 = vector.shape_cast %89 : vector<1x1x3x144xbf16> to vector<3x144xbf16>
    %91 = vector.extract_strided_slice %55 {offsets = [4, 0, 0], sizes = [1, 16, 3], strides = [1, 1, 1]} : vector<9x16x3xbf16> to vector<1x16x3xbf16>
    %92 = vector.shape_cast %91 : vector<1x16x3xbf16> to vector<16x3xbf16>
    %cst_83 = arith.constant dense<0.000000e+00> : vector<16x144xf32>
    %93 = tpu.matmul %92, %90, %cst_83 {dimension_numbers = #tpu.dot_dimension_numbers<[1], [0], [0], [1], [0, 0, 1, 1], [], []>} : vector<16x3xbf16>, vector<3x144xbf16>, vector<16x144xf32> -> vector<16x144xf32>
    %94 = arith.addf %88, %93 : vector<16x144xf32>
    %c0_84 = arith.constant 0 : index
    %c1_85 = arith.constant 1 : index
    %c0_86 = arith.constant 0 : index
    %c2_87 = arith.constant 2 : index
    %95 = vector.load %arg1[%c0_84, %c1_85, %c0_86, %c2_87] : memref<1x2x3x180xbf16, #tpu.memory_space<vmem>>, vector<1x1x3x144xbf16>
    %96 = vector.shape_cast %95 : vector<1x1x3x144xbf16> to vector<3x144xbf16>
    %97 = vector.extract_strided_slice %55 {offsets = [5, 0, 0], sizes = [1, 16, 3], strides = [1, 1, 1]} : vector<9x16x3xbf16> to vector<1x16x3xbf16>
    %98 = vector.shape_cast %97 : vector<1x16x3xbf16> to vector<16x3xbf16>
    %cst_88 = arith.constant dense<0.000000e+00> : vector<16x144xf32>
    %99 = tpu.matmul %98, %96, %cst_88 {dimension_numbers = #tpu.dot_dimension_numbers<[1], [0], [0], [1], [0, 0, 1, 1], [], []>} : vector<16x3xbf16>, vector<3x144xbf16>, vector<16x144xf32> -> vector<16x144xf32>
    %100 = arith.addf %94, %99 : vector<16x144xf32>
    %c0_89 = arith.constant 0 : index
    %c0_90 = arith.constant 0 : index
    %c0_91 = arith.constant 0 : index
    %c18 = arith.constant 18 : index
    %101 = vector.load %arg1[%c0_89, %c0_90, %c0_91, %c18] : memref<1x2x3x180xbf16, #tpu.memory_space<vmem>>, vector<1x1x3x144xbf16>
    %102 = vector.shape_cast %101 : vector<1x1x3x144xbf16> to vector<3x144xbf16>
    %103 = vector.extract_strided_slice %55 {offsets = [6, 0, 0], sizes = [1, 16, 3], strides = [1, 1, 1]} : vector<9x16x3xbf16> to vector<1x16x3xbf16>
    %104 = vector.shape_cast %103 : vector<1x16x3xbf16> to vector<16x3xbf16>
    %cst_92 = arith.constant dense<0.000000e+00> : vector<16x144xf32>
    %105 = tpu.matmul %104, %102, %cst_92 {dimension_numbers = #tpu.dot_dimension_numbers<[1], [0], [0], [1], [0, 0, 1, 1], [], []>} : vector<16x3xbf16>, vector<3x144xbf16>, vector<16x144xf32> -> vector<16x144xf32>
    %106 = arith.addf %100, %105 : vector<16x144xf32>
    %c0_93 = arith.constant 0 : index
    %c0_94 = arith.constant 0 : index
    %c0_95 = arith.constant 0 : index
    %c19 = arith.constant 19 : index
    %107 = vector.load %arg1[%c0_93, %c0_94, %c0_95, %c19] : memref<1x2x3x180xbf16, #tpu.memory_space<vmem>>, vector<1x1x3x144xbf16>
    %108 = vector.shape_cast %107 : vector<1x1x3x144xbf16> to vector<3x144xbf16>
    %109 = vector.extract_strided_slice %55 {offsets = [7, 0, 0], sizes = [1, 16, 3], strides = [1, 1, 1]} : vector<9x16x3xbf16> to vector<1x16x3xbf16>
    %110 = vector.shape_cast %109 : vector<1x16x3xbf16> to vector<16x3xbf16>
    %cst_96 = arith.constant dense<0.000000e+00> : vector<16x144xf32>
    %111 = tpu.matmul %110, %108, %cst_96 {dimension_numbers = #tpu.dot_dimension_numbers<[1], [0], [0], [1], [0, 0, 1, 1], [], []>} : vector<16x3xbf16>, vector<3x144xbf16>, vector<16x144xf32> -> vector<16x144xf32>
    %112 = arith.addf %106, %111 : vector<16x144xf32>
    %c0_97 = arith.constant 0 : index
    %c0_98 = arith.constant 0 : index
    %c0_99 = arith.constant 0 : index
    %c20 = arith.constant 20 : index
    %113 = vector.load %arg1[%c0_97, %c0_98, %c0_99, %c20] : memref<1x2x3x180xbf16, #tpu.memory_space<vmem>>, vector<1x1x3x144xbf16>
    %114 = vector.shape_cast %113 : vector<1x1x3x144xbf16> to vector<3x144xbf16>
    %115 = vector.extract_strided_slice %55 {offsets = [8, 0, 0], sizes = [1, 16, 3], strides = [1, 1, 1]} : vector<9x16x3xbf16> to vector<1x16x3xbf16>
    %116 = vector.shape_cast %115 : vector<1x16x3xbf16> to vector<16x3xbf16>
    %cst_100 = arith.constant dense<0.000000e+00> : vector<16x144xf32>
    %117 = tpu.matmul %116, %114, %cst_100 {dimension_numbers = #tpu.dot_dimension_numbers<[1], [0], [0], [1], [0, 0, 1, 1], [], []>} : vector<16x3xbf16>, vector<3x144xbf16>, vector<16x144xf32> -> vector<16x144xf32>
    %118 = arith.addf %112, %117 : vector<16x144xf32>
    %119 = vector.broadcast %56 : vector<16x1xf32> to vector<16x144xf32>
    %120 = arith.addf %118, %119 : vector<16x144xf32>
    %cst_101 = arith.constant 0.000000e+00 : f32
    %121 = vector.broadcast %cst_101 : f32 to vector<16x144xf32>
    %122 = arith.maximumf %120, %121 : vector<16x144xf32>
    %cst_102 = arith.constant 0.000000e+00 : f32
    %123 = vector.shape_cast %18 : vector<1x144xi1> to vector<1x144xi1>
    %124 = vector.broadcast %123 : vector<1x144xi1> to vector<16x144xi1>
    %125 = vector.broadcast %cst_102 : f32 to vector<16x144xf32>
    %126 = arith.select %124, %122, %125 : vector<16x144xi1>, vector<16x144xf32>
    %127 = arith.truncf %126 : vector<16x144xf32> to vector<16x144xbf16>
    %c1_103 = arith.constant 1 : index
    %c0_104 = arith.constant 0 : index
    %c1_105 = arith.constant 1 : index
    %128 = vector.load %arg13[%c1_103, %c0_104, %c1_105] : memref<2x16x180xbf16, #tpu.memory_space<vmem>>, vector<1x16x144xbf16>
    %129 = vector.shape_cast %128 : vector<1x16x144xbf16> to vector<16x144xbf16>
    %130 = vector.shape_cast %127 : vector<16x144xbf16> to vector<1x16x144xbf16>
    tpu.vector_store %arg13[%c1_103, %c0_104, %c1_105], %130 {strides = array<i32>} : memref<2x16x180xbf16, #tpu.memory_space<vmem>>, vector<1x16x144xbf16>,
    %c0_106 = arith.constant 0 : index
    %c1_107 = arith.constant 1 : index
    %c0_108 = arith.constant 0 : index
    %c0_109 = arith.constant 0 : index
    %131 = vector.load %arg1[%c0_106, %c1_107, %c0_108, %c0_109] : memref<1x2x3x180xbf16, #tpu.memory_space<vmem>>, vector<1x1x3x144xbf16>
    %132 = vector.shape_cast %131 : vector<1x1x3x144xbf16> to vector<3x144xbf16>
    %133 = vector.extract_strided_slice %55 {offsets = [0, 0, 0], sizes = [1, 16, 3], strides = [1, 1, 1]} : vector<9x16x3xbf16> to vector<1x16x3xbf16>
    %134 = vector.shape_cast %133 : vector<1x16x3xbf16> to vector<16x3xbf16>
    %cst_110 = arith.constant dense<0.000000e+00> : vector<16x144xf32>
    %135 = tpu.matmul %134, %132, %cst_110 {dimension_numbers = #tpu.dot_dimension_numbers<[1], [0], [0], [1], [0, 0, 1, 1], [], []>} : vector<16x3xbf16>, vector<3x144xbf16>, vector<16x144xf32> -> vector<16x144xf32>
    %c0_111 = arith.constant 0 : index
    %c1_112 = arith.constant 1 : index
    %c0_113 = arith.constant 0 : index
    %c1_114 = arith.constant 1 : index
    %136 = vector.load %arg1[%c0_111, %c1_112, %c0_113, %c1_114] : memref<1x2x3x180xbf16, #tpu.memory_space<vmem>>, vector<1x1x3x144xbf16>
    %137 = vector.shape_cast %136 : vector<1x1x3x144xbf16> to vector<3x144xbf16>
    %138 = vector.extract_strided_slice %55 {offsets = [1, 0, 0], sizes = [1, 16, 3], strides = [1, 1, 1]} : vector<9x16x3xbf16> to vector<1x16x3xbf16>
    %139 = vector.shape_cast %138 : vector<1x16x3xbf16> to vector<16x3xbf16>
    %cst_115 = arith.constant dense<0.000000e+00> : vector<16x144xf32>
    %140 = tpu.matmul %139, %137, %cst_115 {dimension_numbers = #tpu.dot_dimension_numbers<[1], [0], [0], [1], [0, 0, 1, 1], [], []>} : vector<16x3xbf16>, vector<3x144xbf16>, vector<16x144xf32> -> vector<16x144xf32>
    %141 = arith.addf %135, %140 : vector<16x144xf32>
    %c0_116 = arith.constant 0 : index
    %c1_117 = arith.constant 1 : index
    %c0_118 = arith.constant 0 : index
    %c2_119 = arith.constant 2 : index
    %142 = vector.load %arg1[%c0_116, %c1_117, %c0_118, %c2_119] : memref<1x2x3x180xbf16, #tpu.memory_space<vmem>>, vector<1x1x3x144xbf16>
    %143 = vector.shape_cast %142 : vector<1x1x3x144xbf16> to vector<3x144xbf16>
    %144 = vector.extract_strided_slice %55 {offsets = [2, 0, 0], sizes = [1, 16, 3], strides = [1, 1, 1]} : vector<9x16x3xbf16> to vector<1x16x3xbf16>
    %145 = vector.shape_cast %144 : vector<1x16x3xbf16> to vector<16x3xbf16>
    %cst_120 = arith.constant dense<0.000000e+00> : vector<16x144xf32>
    %146 = tpu.matmul %145, %143, %cst_120 {dimension_numbers = #tpu.dot_dimension_numbers<[1], [0], [0], [1], [0, 0, 1, 1], [], []>} : vector<16x3xbf16>, vector<3x144xbf16>, vector<16x144xf32> -> vector<16x144xf32>
    %147 = arith.addf %141, %146 : vector<16x144xf32>
    %c0_121 = arith.constant 0 : index
    %c0_122 = arith.constant 0 : index
    %c0_123 = arith.constant 0 : index
    %c18_124 = arith.constant 18 : index
    %148 = vector.load %arg1[%c0_121, %c0_122, %c0_123, %c18_124] : memref<1x2x3x180xbf16, #tpu.memory_space<vmem>>, vector<1x1x3x144xbf16>
    %149 = vector.shape_cast %148 : vector<1x1x3x144xbf16> to vector<3x144xbf16>
    %150 = vector.extract_strided_slice %55 {offsets = [3, 0, 0], sizes = [1, 16, 3], strides = [1, 1, 1]} : vector<9x16x3xbf16> to vector<1x16x3xbf16>
    %151 = vector.shape_cast %150 : vector<1x16x3xbf16> to vector<16x3xbf16>
    %cst_125 = arith.constant dense<0.000000e+00> : vector<16x144xf32>
    %152 = tpu.matmul %151, %149, %cst_125 {dimension_numbers = #tpu.dot_dimension_numbers<[1], [0], [0], [1], [0, 0, 1, 1], [], []>} : vector<16x3xbf16>, vector<3x144xbf16>, vector<16x144xf32> -> vector<16x144xf32>
    %153 = arith.addf %147, %152 : vector<16x144xf32>
    %c0_126 = arith.constant 0 : index
    %c0_127 = arith.constant 0 : index
    %c0_128 = arith.constant 0 : index
    %c19_129 = arith.constant 19 : index
    %154 = vector.load %arg1[%c0_126, %c0_127, %c0_128, %c19_129] : memref<1x2x3x180xbf16, #tpu.memory_space<vmem>>, vector<1x1x3x144xbf16>
    %155 = vector.shape_cast %154 : vector<1x1x3x144xbf16> to vector<3x144xbf16>
    %156 = vector.extract_strided_slice %55 {offsets = [4, 0, 0], sizes = [1, 16, 3], strides = [1, 1, 1]} : vector<9x16x3xbf16> to vector<1x16x3xbf16>
    %157 = vector.shape_cast %156 : vector<1x16x3xbf16> to vector<16x3xbf16>
    %cst_130 = arith.constant dense<0.000000e+00> : vector<16x144xf32>
    %158 = tpu.matmul %157, %155, %cst_130 {dimension_numbers = #tpu.dot_dimension_numbers<[1], [0], [0], [1], [0, 0, 1, 1], [], []>} : vector<16x3xbf16>, vector<3x144xbf16>, vector<16x144xf32> -> vector<16x144xf32>
    %159 = arith.addf %153, %158 : vector<16x144xf32>
    %c0_131 = arith.constant 0 : index
    %c0_132 = arith.constant 0 : index
    %c0_133 = arith.constant 0 : index
    %c20_134 = arith.constant 20 : index
    %160 = vector.load %arg1[%c0_131, %c0_132, %c0_133, %c20_134] : memref<1x2x3x180xbf16, #tpu.memory_space<vmem>>, vector<1x1x3x144xbf16>
    %161 = vector.shape_cast %160 : vector<1x1x3x144xbf16> to vector<3x144xbf16>
    %162 = vector.extract_strided_slice %55 {offsets = [5, 0, 0], sizes = [1, 16, 3], strides = [1, 1, 1]} : vector<9x16x3xbf16> to vector<1x16x3xbf16>
    %163 = vector.shape_cast %162 : vector<1x16x3xbf16> to vector<16x3xbf16>
    %cst_135 = arith.constant dense<0.000000e+00> : vector<16x144xf32>
    %164 = tpu.matmul %163, %161, %cst_135 {dimension_numbers = #tpu.dot_dimension_numbers<[1], [0], [0], [1], [0, 0, 1, 1], [], []>} : vector<16x3xbf16>, vector<3x144xbf16>, vector<16x144xf32> -> vector<16x144xf32>
    %165 = arith.addf %159, %164 : vector<16x144xf32>
    %c0_136 = arith.constant 0 : index
    %c1_137 = arith.constant 1 : index
    %c0_138 = arith.constant 0 : index
    %c18_139 = arith.constant 18 : index
    %166 = vector.load %arg1[%c0_136, %c1_137, %c0_138, %c18_139] : memref<1x2x3x180xbf16, #tpu.memory_space<vmem>>, vector<1x1x3x144xbf16>
    %167 = vector.shape_cast %166 : vector<1x1x3x144xbf16> to vector<3x144xbf16>
    %168 = vector.extract_strided_slice %55 {offsets = [6, 0, 0], sizes = [1, 16, 3], strides = [1, 1, 1]} : vector<9x16x3xbf16> to vector<1x16x3xbf16>
    %169 = vector.shape_cast %168 : vector<1x16x3xbf16> to vector<16x3xbf16>
    %cst_140 = arith.constant dense<0.000000e+00> : vector<16x144xf32>
    %170 = tpu.matmul %169, %167, %cst_140 {dimension_numbers = #tpu.dot_dimension_numbers<[1], [0], [0], [1], [0, 0, 1, 1], [], []>} : vector<16x3xbf16>, vector<3x144xbf16>, vector<16x144xf32> -> vector<16x144xf32>
    %171 = arith.addf %165, %170 : vector<16x144xf32>
    %c0_141 = arith.constant 0 : index
    %c1_142 = arith.constant 1 : index
    %c0_143 = arith.constant 0 : index
    %c19_144 = arith.constant 19 : index
    %172 = vector.load %arg1[%c0_141, %c1_142, %c0_143, %c19_144] : memref<1x2x3x180xbf16, #tpu.memory_space<vmem>>, vector<1x1x3x144xbf16>
    %173 = vector.shape_cast %172 : vector<1x1x3x144xbf16> to vector<3x144xbf16>
    %174 = vector.extract_strided_slice %55 {offsets = [7, 0, 0], sizes = [1, 16, 3], strides = [1, 1, 1]} : vector<9x16x3xbf16> to vector<1x16x3xbf16>
    %175 = vector.shape_cast %174 : vector<1x16x3xbf16> to vector<16x3xbf16>
    %cst_145 = arith.constant dense<0.000000e+00> : vector<16x144xf32>
    %176 = tpu.matmul %175, %173, %cst_145 {dimension_numbers = #tpu.dot_dimension_numbers<[1], [0], [0], [1], [0, 0, 1, 1], [], []>} : vector<16x3xbf16>, vector<3x144xbf16>, vector<16x144xf32> -> vector<16x144xf32>
    %177 = arith.addf %171, %176 : vector<16x144xf32>
    %c0_146 = arith.constant 0 : index
    %c1_147 = arith.constant 1 : index
    %c0_148 = arith.constant 0 : index
    %c20_149 = arith.constant 20 : index
    %178 = vector.load %arg1[%c0_146, %c1_147, %c0_148, %c20_149] : memref<1x2x3x180xbf16, #tpu.memory_space<vmem>>, vector<1x1x3x144xbf16>
    %179 = vector.shape_cast %178 : vector<1x1x3x144xbf16> to vector<3x144xbf16>
    %180 = vector.extract_strided_slice %55 {offsets = [8, 0, 0], sizes = [1, 16, 3], strides = [1, 1, 1]} : vector<9x16x3xbf16> to vector<1x16x3xbf16>
    %181 = vector.shape_cast %180 : vector<1x16x3xbf16> to vector<16x3xbf16>
    %cst_150 = arith.constant dense<0.000000e+00> : vector<16x144xf32>
    %182 = tpu.matmul %181, %179, %cst_150 {dimension_numbers = #tpu.dot_dimension_numbers<[1], [0], [0], [1], [0, 0, 1, 1], [], []>} : vector<16x3xbf16>, vector<3x144xbf16>, vector<16x144xf32> -> vector<16x144xf32>
    %183 = arith.addf %177, %182 : vector<16x144xf32>
    %184 = vector.broadcast %56 : vector<16x1xf32> to vector<16x144xf32>
    %185 = arith.addf %183, %184 : vector<16x144xf32>
    %cst_151 = arith.constant 0.000000e+00 : f32
    %186 = vector.broadcast %cst_151 : f32 to vector<16x144xf32>
    %187 = arith.maximumf %185, %186 : vector<16x144xf32>
    %cst_152 = arith.constant 0.000000e+00 : f32
    %188 = vector.shape_cast %18 : vector<1x144xi1> to vector<1x144xi1>
    %189 = vector.broadcast %188 : vector<1x144xi1> to vector<16x144xi1>
    %190 = vector.broadcast %cst_152 : f32 to vector<16x144xf32>
    %191 = arith.select %189, %187, %190 : vector<16x144xi1>, vector<16x144xf32>
    %192 = arith.truncf %191 : vector<16x144xf32> to vector<16x144xbf16>
    %c0_153 = arith.constant 0 : index
    %c0_154 = arith.constant 0 : index
    %c19_155 = arith.constant 19 : index
    %193 = vector.load %arg13[%c0_153, %c0_154, %c19_155] : memref<2x16x180xbf16, #tpu.memory_space<vmem>>, vector<1x16x144xbf16>
    %194 = vector.shape_cast %193 : vector<1x16x144xbf16> to vector<16x144xbf16>
    %195 = vector.shape_cast %192 : vector<16x144xbf16> to vector<1x16x144xbf16>
    tpu.vector_store %arg13[%c0_153, %c0_154, %c19_155], %195 {strides = array<i32>} : memref<2x16x180xbf16, #tpu.memory_space<vmem>>, vector<1x16x144xbf16>,
    %c0_156 = arith.constant 0 : index
    %c0_157 = arith.constant 0 : index
    %c0_158 = arith.constant 0 : index
    %196 = vector.load %arg13[%c0_156, %c0_157, %c0_158] : memref<2x16x180xbf16, #tpu.memory_space<vmem>>, vector<1x16x144xbf16>
    %197 = vector.shape_cast %196 : vector<1x16x144xbf16> to vector<16x144xbf16>
    %198 = vector.extract_strided_slice %57 {offsets = [0, 0, 0], sizes = [1, 16, 16], strides = [1, 1, 1]} : vector<9x16x16xbf16> to vector<1x16x16xbf16>
    %199 = vector.shape_cast %198 : vector<1x16x16xbf16> to vector<16x16xbf16>
    %cst_159 = arith.constant dense<0.000000e+00> : vector<16x144xf32>
    %200 = tpu.matmul %199, %197, %cst_159 {dimension_numbers = #tpu.dot_dimension_numbers<[1], [0], [0], [1], [0, 0, 1, 1], [], []>} : vector<16x16xbf16>, vector<16x144xbf16>, vector<16x144xf32> -> vector<16x144xf32>
    %c0_160 = arith.constant 0 : index
    %c0_161 = arith.constant 0 : index
    %c1_162 = arith.constant 1 : index
    %201 = vector.load %arg13[%c0_160, %c0_161, %c1_162] : memref<2x16x180xbf16, #tpu.memory_space<vmem>>, vector<1x16x144xbf16>
    %202 = vector.shape_cast %201 : vector<1x16x144xbf16> to vector<16x144xbf16>
    %203 = vector.extract_strided_slice %57 {offsets = [1, 0, 0], sizes = [1, 16, 16], strides = [1, 1, 1]} : vector<9x16x16xbf16> to vector<1x16x16xbf16>
    %204 = vector.shape_cast %203 : vector<1x16x16xbf16> to vector<16x16xbf16>
    %cst_163 = arith.constant dense<0.000000e+00> : vector<16x144xf32>
    %205 = tpu.matmul %204, %202, %cst_163 {dimension_numbers = #tpu.dot_dimension_numbers<[1], [0], [0], [1], [0, 0, 1, 1], [], []>} : vector<16x16xbf16>, vector<16x144xbf16>, vector<16x144xf32> -> vector<16x144xf32>
    %206 = arith.addf %200, %205 : vector<16x144xf32>
    %c0_164 = arith.constant 0 : index
    %c0_165 = arith.constant 0 : index
    %c2_166 = arith.constant 2 : index
    %207 = vector.load %arg13[%c0_164, %c0_165, %c2_166] : memref<2x16x180xbf16, #tpu.memory_space<vmem>>, vector<1x16x144xbf16>
    %208 = vector.shape_cast %207 : vector<1x16x144xbf16> to vector<16x144xbf16>
    %209 = vector.extract_strided_slice %57 {offsets = [2, 0, 0], sizes = [1, 16, 16], strides = [1, 1, 1]} : vector<9x16x16xbf16> to vector<1x16x16xbf16>
    %210 = vector.shape_cast %209 : vector<1x16x16xbf16> to vector<16x16xbf16>
    %cst_167 = arith.constant dense<0.000000e+00> : vector<16x144xf32>
    %211 = tpu.matmul %210, %208, %cst_167 {dimension_numbers = #tpu.dot_dimension_numbers<[1], [0], [0], [1], [0, 0, 1, 1], [], []>} : vector<16x16xbf16>, vector<16x144xbf16>, vector<16x144xf32> -> vector<16x144xf32>
    %212 = arith.addf %206, %211 : vector<16x144xf32>
    %c1_168 = arith.constant 1 : index
    %c0_169 = arith.constant 0 : index
    %c0_170 = arith.constant 0 : index
    %213 = vector.load %arg13[%c1_168, %c0_169, %c0_170] : memref<2x16x180xbf16, #tpu.memory_space<vmem>>, vector<1x16x144xbf16>
    %214 = vector.shape_cast %213 : vector<1x16x144xbf16> to vector<16x144xbf16>
    %215 = vector.extract_strided_slice %57 {offsets = [3, 0, 0], sizes = [1, 16, 16], strides = [1, 1, 1]} : vector<9x16x16xbf16> to vector<1x16x16xbf16>
    %216 = vector.shape_cast %215 : vector<1x16x16xbf16> to vector<16x16xbf16>
    %cst_171 = arith.constant dense<0.000000e+00> : vector<16x144xf32>
    %217 = tpu.matmul %216, %214, %cst_171 {dimension_numbers = #tpu.dot_dimension_numbers<[1], [0], [0], [1], [0, 0, 1, 1], [], []>} : vector<16x16xbf16>, vector<16x144xbf16>, vector<16x144xf32> -> vector<16x144xf32>
    %218 = arith.addf %212, %217 : vector<16x144xf32>
    %c1_172 = arith.constant 1 : index
    %c0_173 = arith.constant 0 : index
    %c1_174 = arith.constant 1 : index
    %219 = vector.load %arg13[%c1_172, %c0_173, %c1_174] : memref<2x16x180xbf16, #tpu.memory_space<vmem>>, vector<1x16x144xbf16>
    %220 = vector.shape_cast %219 : vector<1x16x144xbf16> to vector<16x144xbf16>
    %221 = vector.extract_strided_slice %57 {offsets = [4, 0, 0], sizes = [1, 16, 16], strides = [1, 1, 1]} : vector<9x16x16xbf16> to vector<1x16x16xbf16>
    %222 = vector.shape_cast %221 : vector<1x16x16xbf16> to vector<16x16xbf16>
    %cst_175 = arith.constant dense<0.000000e+00> : vector<16x144xf32>
    %223 = tpu.matmul %222, %220, %cst_175 {dimension_numbers = #tpu.dot_dimension_numbers<[1], [0], [0], [1], [0, 0, 1, 1], [], []>} : vector<16x16xbf16>, vector<16x144xbf16>, vector<16x144xf32> -> vector<16x144xf32>
    %224 = arith.addf %218, %223 : vector<16x144xf32>
    %c1_176 = arith.constant 1 : index
    %c0_177 = arith.constant 0 : index
    %c2_178 = arith.constant 2 : index
    %225 = vector.load %arg13[%c1_176, %c0_177, %c2_178] : memref<2x16x180xbf16, #tpu.memory_space<vmem>>, vector<1x16x144xbf16>
    %226 = vector.shape_cast %225 : vector<1x16x144xbf16> to vector<16x144xbf16>
    %227 = vector.extract_strided_slice %57 {offsets = [5, 0, 0], sizes = [1, 16, 16], strides = [1, 1, 1]} : vector<9x16x16xbf16> to vector<1x16x16xbf16>
    %228 = vector.shape_cast %227 : vector<1x16x16xbf16> to vector<16x16xbf16>
    %cst_179 = arith.constant dense<0.000000e+00> : vector<16x144xf32>
    %229 = tpu.matmul %228, %226, %cst_179 {dimension_numbers = #tpu.dot_dimension_numbers<[1], [0], [0], [1], [0, 0, 1, 1], [], []>} : vector<16x16xbf16>, vector<16x144xbf16>, vector<16x144xf32> -> vector<16x144xf32>
    %230 = arith.addf %224, %229 : vector<16x144xf32>
    %c0_180 = arith.constant 0 : index
    %c0_181 = arith.constant 0 : index
    %c18_182 = arith.constant 18 : index
    %231 = vector.load %arg13[%c0_180, %c0_181, %c18_182] : memref<2x16x180xbf16, #tpu.memory_space<vmem>>, vector<1x16x144xbf16>
    %232 = vector.shape_cast %231 : vector<1x16x144xbf16> to vector<16x144xbf16>
    %233 = vector.extract_strided_slice %57 {offsets = [6, 0, 0], sizes = [1, 16, 16], strides = [1, 1, 1]} : vector<9x16x16xbf16> to vector<1x16x16xbf16>
    %234 = vector.shape_cast %233 : vector<1x16x16xbf16> to vector<16x16xbf16>
    %cst_183 = arith.constant dense<0.000000e+00> : vector<16x144xf32>
    %235 = tpu.matmul %234, %232, %cst_183 {dimension_numbers = #tpu.dot_dimension_numbers<[1], [0], [0], [1], [0, 0, 1, 1], [], []>} : vector<16x16xbf16>, vector<16x144xbf16>, vector<16x144xf32> -> vector<16x144xf32>
    %236 = arith.addf %230, %235 : vector<16x144xf32>
    %c0_184 = arith.constant 0 : index
    %c0_185 = arith.constant 0 : index
    %c19_186 = arith.constant 19 : index
    %237 = vector.load %arg13[%c0_184, %c0_185, %c19_186] : memref<2x16x180xbf16, #tpu.memory_space<vmem>>, vector<1x16x144xbf16>
    %238 = vector.shape_cast %237 : vector<1x16x144xbf16> to vector<16x144xbf16>
    %239 = vector.extract_strided_slice %57 {offsets = [7, 0, 0], sizes = [1, 16, 16], strides = [1, 1, 1]} : vector<9x16x16xbf16> to vector<1x16x16xbf16>
    %240 = vector.shape_cast %239 : vector<1x16x16xbf16> to vector<16x16xbf16>
    %cst_187 = arith.constant dense<0.000000e+00> : vector<16x144xf32>
    %241 = tpu.matmul %240, %238, %cst_187 {dimension_numbers = #tpu.dot_dimension_numbers<[1], [0], [0], [1], [0, 0, 1, 1], [], []>} : vector<16x16xbf16>, vector<16x144xbf16>, vector<16x144xf32> -> vector<16x144xf32>
    %242 = arith.addf %236, %241 : vector<16x144xf32>
    %c0_188 = arith.constant 0 : index
    %c0_189 = arith.constant 0 : index
    %c20_190 = arith.constant 20 : index
    %243 = vector.load %arg13[%c0_188, %c0_189, %c20_190] : memref<2x16x180xbf16, #tpu.memory_space<vmem>>, vector<1x16x144xbf16>
    %244 = vector.shape_cast %243 : vector<1x16x144xbf16> to vector<16x144xbf16>
    %245 = vector.extract_strided_slice %57 {offsets = [8, 0, 0], sizes = [1, 16, 16], strides = [1, 1, 1]} : vector<9x16x16xbf16> to vector<1x16x16xbf16>
    %246 = vector.shape_cast %245 : vector<1x16x16xbf16> to vector<16x16xbf16>
    %cst_191 = arith.constant dense<0.000000e+00> : vector<16x144xf32>
    %247 = tpu.matmul %246, %244, %cst_191 {dimension_numbers = #tpu.dot_dimension_numbers<[1], [0], [0], [1], [0, 0, 1, 1], [], []>} : vector<16x16xbf16>, vector<16x144xbf16>, vector<16x144xf32> -> vector<16x144xf32>
    %248 = arith.addf %242, %247 : vector<16x144xf32>
    %249 = vector.broadcast %58 : vector<16x1xf32> to vector<16x144xf32>
    %250 = arith.addf %248, %249 : vector<16x144xf32>
    %cst_192 = arith.constant 0.000000e+00 : f32
    %251 = vector.broadcast %cst_192 : f32 to vector<16x144xf32>
    %252 = arith.maximumf %250, %251 : vector<16x144xf32>
    %253 = arith.truncf %252 : vector<16x144xf32> to vector<16x144xbf16>
    %cst_193 = arith.constant dense<0.000000e+00> : vector<8x144xf32>
    %254 = tpu.matmul %60, %253, %cst_193 {dimension_numbers = #tpu.dot_dimension_numbers<[1], [0], [0], [1], [0, 0, 1, 1], [], []>} : vector<8x16xbf16>, vector<16x144xbf16>, vector<8x144xf32> -> vector<8x144xf32>
    %255 = vector.broadcast %61 : vector<8x1xf32> to vector<8x144xf32>
    %256 = arith.addf %254, %255 : vector<8x144xf32>
    %cst_194 = arith.constant 0.000000e+00 : f32
    %257 = vector.shape_cast %18 : vector<1x144xi1> to vector<1x144xi1>
    %258 = vector.broadcast %257 : vector<1x144xi1> to vector<8x144xi1>
    %259 = vector.broadcast %cst_194 : f32 to vector<8x144xf32>
    %260 = arith.select %258, %256, %259 : vector<8x144xi1>, vector<8x144xf32>
    %261 = arith.truncf %260 : vector<8x144xf32> to vector<8x144xbf16>
    %c1_195 = arith.constant 1 : index
    %c0_196 = arith.constant 0 : index
    %c1_197 = arith.constant 1 : index
    %262 = vector.load %arg14[%c1_195, %c0_196, %c1_197] : memref<2x8x180xbf16, #tpu.memory_space<vmem>>, vector<1x8x144xbf16>
    %263 = vector.shape_cast %262 : vector<1x8x144xbf16> to vector<8x144xbf16>
    %264 = vector.shape_cast %261 : vector<8x144xbf16> to vector<1x8x144xbf16>
    tpu.vector_store %arg14[%c1_195, %c0_196, %c1_197], %264 {strides = array<i32>} : memref<2x8x180xbf16, #tpu.memory_space<vmem>>, vector<1x8x144xbf16>,
    %c1_198 = arith.constant 1 : index
    %c0_199 = arith.constant 0 : index
    %c0_200 = arith.constant 0 : index
    %265 = vector.load %arg13[%c1_198, %c0_199, %c0_200] : memref<2x16x180xbf16, #tpu.memory_space<vmem>>, vector<1x16x144xbf16>
    %266 = vector.shape_cast %265 : vector<1x16x144xbf16> to vector<16x144xbf16>
    %267 = vector.extract_strided_slice %57 {offsets = [0, 0, 0], sizes = [1, 16, 16], strides = [1, 1, 1]} : vector<9x16x16xbf16> to vector<1x16x16xbf16>
    %268 = vector.shape_cast %267 : vector<1x16x16xbf16> to vector<16x16xbf16>
    %cst_201 = arith.constant dense<0.000000e+00> : vector<16x144xf32>
    %269 = tpu.matmul %268, %266, %cst_201 {dimension_numbers = #tpu.dot_dimension_numbers<[1], [0], [0], [1], [0, 0, 1, 1], [], []>} : vector<16x16xbf16>, vector<16x144xbf16>, vector<16x144xf32> -> vector<16x144xf32>
    %c1_202 = arith.constant 1 : index
    %c0_203 = arith.constant 0 : index
    %c1_204 = arith.constant 1 : index
    %270 = vector.load %arg13[%c1_202, %c0_203, %c1_204] : memref<2x16x180xbf16, #tpu.memory_space<vmem>>, vector<1x16x144xbf16>
    %271 = vector.shape_cast %270 : vector<1x16x144xbf16> to vector<16x144xbf16>
    %272 = vector.extract_strided_slice %57 {offsets = [1, 0, 0], sizes = [1, 16, 16], strides = [1, 1, 1]} : vector<9x16x16xbf16> to vector<1x16x16xbf16>
    %273 = vector.shape_cast %272 : vector<1x16x16xbf16> to vector<16x16xbf16>
    %cst_205 = arith.constant dense<0.000000e+00> : vector<16x144xf32>
    %274 = tpu.matmul %273, %271, %cst_205 {dimension_numbers = #tpu.dot_dimension_numbers<[1], [0], [0], [1], [0, 0, 1, 1], [], []>} : vector<16x16xbf16>, vector<16x144xbf16>, vector<16x144xf32> -> vector<16x144xf32>
    %275 = arith.addf %269, %274 : vector<16x144xf32>
    %c1_206 = arith.constant 1 : index
    %c0_207 = arith.constant 0 : index
    %c2_208 = arith.constant 2 : index
    %276 = vector.load %arg13[%c1_206, %c0_207, %c2_208] : memref<2x16x180xbf16, #tpu.memory_space<vmem>>, vector<1x16x144xbf16>
    %277 = vector.shape_cast %276 : vector<1x16x144xbf16> to vector<16x144xbf16>
    %278 = vector.extract_strided_slice %57 {offsets = [2, 0, 0], sizes = [1, 16, 16], strides = [1, 1, 1]} : vector<9x16x16xbf16> to vector<1x16x16xbf16>
    %279 = vector.shape_cast %278 : vector<1x16x16xbf16> to vector<16x16xbf16>
    %cst_209 = arith.constant dense<0.000000e+00> : vector<16x144xf32>
    %280 = tpu.matmul %279, %277, %cst_209 {dimension_numbers = #tpu.dot_dimension_numbers<[1], [0], [0], [1], [0, 0, 1, 1], [], []>} : vector<16x16xbf16>, vector<16x144xbf16>, vector<16x144xf32> -> vector<16x144xf32>
    %281 = arith.addf %275, %280 : vector<16x144xf32>
    %c0_210 = arith.constant 0 : index
    %c0_211 = arith.constant 0 : index
    %c18_212 = arith.constant 18 : index
    %282 = vector.load %arg13[%c0_210, %c0_211, %c18_212] : memref<2x16x180xbf16, #tpu.memory_space<vmem>>, vector<1x16x144xbf16>
    %283 = vector.shape_cast %282 : vector<1x16x144xbf16> to vector<16x144xbf16>
    %284 = vector.extract_strided_slice %57 {offsets = [3, 0, 0], sizes = [1, 16, 16], strides = [1, 1, 1]} : vector<9x16x16xbf16> to vector<1x16x16xbf16>
    %285 = vector.shape_cast %284 : vector<1x16x16xbf16> to vector<16x16xbf16>
    %cst_213 = arith.constant dense<0.000000e+00> : vector<16x144xf32>
    %286 = tpu.matmul %285, %283, %cst_213 {dimension_numbers = #tpu.dot_dimension_numbers<[1], [0], [0], [1], [0, 0, 1, 1], [], []>} : vector<16x16xbf16>, vector<16x144xbf16>, vector<16x144xf32> -> vector<16x144xf32>
    %287 = arith.addf %281, %286 : vector<16x144xf32>
    %c0_214 = arith.constant 0 : index
    %c0_215 = arith.constant 0 : index
    %c19_216 = arith.constant 19 : index
    %288 = vector.load %arg13[%c0_214, %c0_215, %c19_216] : memref<2x16x180xbf16, #tpu.memory_space<vmem>>, vector<1x16x144xbf16>
    %289 = vector.shape_cast %288 : vector<1x16x144xbf16> to vector<16x144xbf16>
    %290 = vector.extract_strided_slice %57 {offsets = [4, 0, 0], sizes = [1, 16, 16], strides = [1, 1, 1]} : vector<9x16x16xbf16> to vector<1x16x16xbf16>
    %291 = vector.shape_cast %290 : vector<1x16x16xbf16> to vector<16x16xbf16>
    %cst_217 = arith.constant dense<0.000000e+00> : vector<16x144xf32>
    %292 = tpu.matmul %291, %289, %cst_217 {dimension_numbers = #tpu.dot_dimension_numbers<[1], [0], [0], [1], [0, 0, 1, 1], [], []>} : vector<16x16xbf16>, vector<16x144xbf16>, vector<16x144xf32> -> vector<16x144xf32>
    %293 = arith.addf %287, %292 : vector<16x144xf32>
    %c0_218 = arith.constant 0 : index
    %c0_219 = arith.constant 0 : index
    %c20_220 = arith.constant 20 : index
    %294 = vector.load %arg13[%c0_218, %c0_219, %c20_220] : memref<2x16x180xbf16, #tpu.memory_space<vmem>>, vector<1x16x144xbf16>
    %295 = vector.shape_cast %294 : vector<1x16x144xbf16> to vector<16x144xbf16>
    %296 = vector.extract_strided_slice %57 {offsets = [5, 0, 0], sizes = [1, 16, 16], strides = [1, 1, 1]} : vector<9x16x16xbf16> to vector<1x16x16xbf16>
    %297 = vector.shape_cast %296 : vector<1x16x16xbf16> to vector<16x16xbf16>
    %cst_221 = arith.constant dense<0.000000e+00> : vector<16x144xf32>
    %298 = tpu.matmul %297, %295, %cst_221 {dimension_numbers = #tpu.dot_dimension_numbers<[1], [0], [0], [1], [0, 0, 1, 1], [], []>} : vector<16x16xbf16>, vector<16x144xbf16>, vector<16x144xf32> -> vector<16x144xf32>
    %299 = arith.addf %293, %298 : vector<16x144xf32>
    %c1_222 = arith.constant 1 : index
    %c0_223 = arith.constant 0 : index
    %c18_224 = arith.constant 18 : index
    %300 = vector.load %arg13[%c1_222, %c0_223, %c18_224] : memref<2x16x180xbf16, #tpu.memory_space<vmem>>, vector<1x16x144xbf16>
    %301 = vector.shape_cast %300 : vector<1x16x144xbf16> to vector<16x144xbf16>
    %302 = vector.extract_strided_slice %57 {offsets = [6, 0, 0], sizes = [1, 16, 16], strides = [1, 1, 1]} : vector<9x16x16xbf16> to vector<1x16x16xbf16>
    %303 = vector.shape_cast %302 : vector<1x16x16xbf16> to vector<16x16xbf16>
    %cst_225 = arith.constant dense<0.000000e+00> : vector<16x144xf32>
    %304 = tpu.matmul %303, %301, %cst_225 {dimension_numbers = #tpu.dot_dimension_numbers<[1], [0], [0], [1], [0, 0, 1, 1], [], []>} : vector<16x16xbf16>, vector<16x144xbf16>, vector<16x144xf32> -> vector<16x144xf32>
    %305 = arith.addf %299, %304 : vector<16x144xf32>
    %c1_226 = arith.constant 1 : index
    %c0_227 = arith.constant 0 : index
    %c19_228 = arith.constant 19 : index
    %306 = vector.load %arg13[%c1_226, %c0_227, %c19_228] : memref<2x16x180xbf16, #tpu.memory_space<vmem>>, vector<1x16x144xbf16>
    %307 = vector.shape_cast %306 : vector<1x16x144xbf16> to vector<16x144xbf16>
    %308 = vector.extract_strided_slice %57 {offsets = [7, 0, 0], sizes = [1, 16, 16], strides = [1, 1, 1]} : vector<9x16x16xbf16> to vector<1x16x16xbf16>
    %309 = vector.shape_cast %308 : vector<1x16x16xbf16> to vector<16x16xbf16>
    %cst_229 = arith.constant dense<0.000000e+00> : vector<16x144xf32>
    %310 = tpu.matmul %309, %307, %cst_229 {dimension_numbers = #tpu.dot_dimension_numbers<[1], [0], [0], [1], [0, 0, 1, 1], [], []>} : vector<16x16xbf16>, vector<16x144xbf16>, vector<16x144xf32> -> vector<16x144xf32>
    %311 = arith.addf %305, %310 : vector<16x144xf32>
    %c1_230 = arith.constant 1 : index
    %c0_231 = arith.constant 0 : index
    %c20_232 = arith.constant 20 : index
    %312 = vector.load %arg13[%c1_230, %c0_231, %c20_232] : memref<2x16x180xbf16, #tpu.memory_space<vmem>>, vector<1x16x144xbf16>
    %313 = vector.shape_cast %312 : vector<1x16x144xbf16> to vector<16x144xbf16>
    %314 = vector.extract_strided_slice %57 {offsets = [8, 0, 0], sizes = [1, 16, 16], strides = [1, 1, 1]} : vector<9x16x16xbf16> to vector<1x16x16xbf16>
    %315 = vector.shape_cast %314 : vector<1x16x16xbf16> to vector<16x16xbf16>
    %cst_233 = arith.constant dense<0.000000e+00> : vector<16x144xf32>
    %316 = tpu.matmul %315, %313, %cst_233 {dimension_numbers = #tpu.dot_dimension_numbers<[1], [0], [0], [1], [0, 0, 1, 1], [], []>} : vector<16x16xbf16>, vector<16x144xbf16>, vector<16x144xf32> -> vector<16x144xf32>
    %317 = arith.addf %311, %316 : vector<16x144xf32>
    %318 = vector.broadcast %58 : vector<16x1xf32> to vector<16x144xf32>
    %319 = arith.addf %317, %318 : vector<16x144xf32>
    %cst_234 = arith.constant 0.000000e+00 : f32
    %320 = vector.broadcast %cst_234 : f32 to vector<16x144xf32>
    %321 = arith.maximumf %319, %320 : vector<16x144xf32>
    %322 = arith.truncf %321 : vector<16x144xf32> to vector<16x144xbf16>
    %cst_235 = arith.constant dense<0.000000e+00> : vector<8x144xf32>
    %323 = tpu.matmul %60, %322, %cst_235 {dimension_numbers = #tpu.dot_dimension_numbers<[1], [0], [0], [1], [0, 0, 1, 1], [], []>} : vector<8x16xbf16>, vector<16x144xbf16>, vector<8x144xf32> -> vector<8x144xf32>
    %324 = vector.broadcast %61 : vector<8x1xf32> to vector<8x144xf32>
    %325 = arith.addf %323, %324 : vector<8x144xf32>
    %cst_236 = arith.constant 0.000000e+00 : f32
    %326 = vector.shape_cast %18 : vector<1x144xi1> to vector<1x144xi1>
    %327 = vector.broadcast %326 : vector<1x144xi1> to vector<8x144xi1>
    %328 = vector.broadcast %cst_236 : f32 to vector<8x144xf32>
    %329 = arith.select %327, %325, %328 : vector<8x144xi1>, vector<8x144xf32>
    %330 = arith.truncf %329 : vector<8x144xf32> to vector<8x144xbf16>
    %c0_237 = arith.constant 0 : index
    %c0_238 = arith.constant 0 : index
    %c19_239 = arith.constant 19 : index
    %331 = vector.load %arg14[%c0_237, %c0_238, %c19_239] : memref<2x8x180xbf16, #tpu.memory_space<vmem>>, vector<1x8x144xbf16>
    %332 = vector.shape_cast %331 : vector<1x8x144xbf16> to vector<8x144xbf16>
    %333 = vector.shape_cast %330 : vector<8x144xbf16> to vector<1x8x144xbf16>
    tpu.vector_store %arg14[%c0_237, %c0_238, %c19_239], %333 {strides = array<i32>} : memref<2x8x180xbf16, #tpu.memory_space<vmem>>, vector<1x8x144xbf16>,
    %c0_240 = arith.constant 0 : index
    %c0_241 = arith.constant 0 : index
    %c0_242 = arith.constant 0 : index
    %334 = vector.load %arg14[%c0_240, %c0_241, %c0_242] : memref<2x8x180xbf16, #tpu.memory_space<vmem>>, vector<1x8x144xbf16>
    %335 = vector.shape_cast %334 : vector<1x8x144xbf16> to vector<8x144xbf16>
    %336 = vector.extract_strided_slice %62 {offsets = [0, 0, 0], sizes = [1, 16, 8], strides = [1, 1, 1]} : vector<9x16x8xbf16> to vector<1x16x8xbf16>
    %337 = vector.shape_cast %336 : vector<1x16x8xbf16> to vector<16x8xbf16>
    %cst_243 = arith.constant dense<0.000000e+00> : vector<16x144xf32>
    %338 = tpu.matmul %337, %335, %cst_243 {dimension_numbers = #tpu.dot_dimension_numbers<[1], [0], [0], [1], [0, 0, 1, 1], [], []>} : vector<16x8xbf16>, vector<8x144xbf16>, vector<16x144xf32> -> vector<16x144xf32>
    %c0_244 = arith.constant 0 : index
    %c0_245 = arith.constant 0 : index
    %c1_246 = arith.constant 1 : index
    %339 = vector.load %arg14[%c0_244, %c0_245, %c1_246] : memref<2x8x180xbf16, #tpu.memory_space<vmem>>, vector<1x8x144xbf16>
    %340 = vector.shape_cast %339 : vector<1x8x144xbf16> to vector<8x144xbf16>
    %341 = vector.extract_strided_slice %62 {offsets = [1, 0, 0], sizes = [1, 16, 8], strides = [1, 1, 1]} : vector<9x16x8xbf16> to vector<1x16x8xbf16>
    %342 = vector.shape_cast %341 : vector<1x16x8xbf16> to vector<16x8xbf16>
    %cst_247 = arith.constant dense<0.000000e+00> : vector<16x144xf32>
    %343 = tpu.matmul %342, %340, %cst_247 {dimension_numbers = #tpu.dot_dimension_numbers<[1], [0], [0], [1], [0, 0, 1, 1], [], []>} : vector<16x8xbf16>, vector<8x144xbf16>, vector<16x144xf32> -> vector<16x144xf32>
    %344 = arith.addf %338, %343 : vector<16x144xf32>
    %c0_248 = arith.constant 0 : index
    %c0_249 = arith.constant 0 : index
    %c2_250 = arith.constant 2 : index
    %345 = vector.load %arg14[%c0_248, %c0_249, %c2_250] : memref<2x8x180xbf16, #tpu.memory_space<vmem>>, vector<1x8x144xbf16>
    %346 = vector.shape_cast %345 : vector<1x8x144xbf16> to vector<8x144xbf16>
    %347 = vector.extract_strided_slice %62 {offsets = [2, 0, 0], sizes = [1, 16, 8], strides = [1, 1, 1]} : vector<9x16x8xbf16> to vector<1x16x8xbf16>
    %348 = vector.shape_cast %347 : vector<1x16x8xbf16> to vector<16x8xbf16>
    %cst_251 = arith.constant dense<0.000000e+00> : vector<16x144xf32>
    %349 = tpu.matmul %348, %346, %cst_251 {dimension_numbers = #tpu.dot_dimension_numbers<[1], [0], [0], [1], [0, 0, 1, 1], [], []>} : vector<16x8xbf16>, vector<8x144xbf16>, vector<16x144xf32> -> vector<16x144xf32>
    %350 = arith.addf %344, %349 : vector<16x144xf32>
    %c1_252 = arith.constant 1 : index
    %c0_253 = arith.constant 0 : index
    %c0_254 = arith.constant 0 : index
    %351 = vector.load %arg14[%c1_252, %c0_253, %c0_254] : memref<2x8x180xbf16, #tpu.memory_space<vmem>>, vector<1x8x144xbf16>
    %352 = vector.shape_cast %351 : vector<1x8x144xbf16> to vector<8x144xbf16>
    %353 = vector.extract_strided_slice %62 {offsets = [3, 0, 0], sizes = [1, 16, 8], strides = [1, 1, 1]} : vector<9x16x8xbf16> to vector<1x16x8xbf16>
    %354 = vector.shape_cast %353 : vector<1x16x8xbf16> to vector<16x8xbf16>
    %cst_255 = arith.constant dense<0.000000e+00> : vector<16x144xf32>
    %355 = tpu.matmul %354, %352, %cst_255 {dimension_numbers = #tpu.dot_dimension_numbers<[1], [0], [0], [1], [0, 0, 1, 1], [], []>} : vector<16x8xbf16>, vector<8x144xbf16>, vector<16x144xf32> -> vector<16x144xf32>
    %356 = arith.addf %350, %355 : vector<16x144xf32>
    %c1_256 = arith.constant 1 : index
    %c0_257 = arith.constant 0 : index
    %c1_258 = arith.constant 1 : index
    %357 = vector.load %arg14[%c1_256, %c0_257, %c1_258] : memref<2x8x180xbf16, #tpu.memory_space<vmem>>, vector<1x8x144xbf16>
    %358 = vector.shape_cast %357 : vector<1x8x144xbf16> to vector<8x144xbf16>
    %359 = vector.extract_strided_slice %62 {offsets = [4, 0, 0], sizes = [1, 16, 8], strides = [1, 1, 1]} : vector<9x16x8xbf16> to vector<1x16x8xbf16>
    %360 = vector.shape_cast %359 : vector<1x16x8xbf16> to vector<16x8xbf16>
    %cst_259 = arith.constant dense<0.000000e+00> : vector<16x144xf32>
    %361 = tpu.matmul %360, %358, %cst_259 {dimension_numbers = #tpu.dot_dimension_numbers<[1], [0], [0], [1], [0, 0, 1, 1], [], []>} : vector<16x8xbf16>, vector<8x144xbf16>, vector<16x144xf32> -> vector<16x144xf32>
    %362 = arith.addf %356, %361 : vector<16x144xf32>
    %c1_260 = arith.constant 1 : index
    %c0_261 = arith.constant 0 : index
    %c2_262 = arith.constant 2 : index
    %363 = vector.load %arg14[%c1_260, %c0_261, %c2_262] : memref<2x8x180xbf16, #tpu.memory_space<vmem>>, vector<1x8x144xbf16>
    %364 = vector.shape_cast %363 : vector<1x8x144xbf16> to vector<8x144xbf16>
    %365 = vector.extract_strided_slice %62 {offsets = [5, 0, 0], sizes = [1, 16, 8], strides = [1, 1, 1]} : vector<9x16x8xbf16> to vector<1x16x8xbf16>
    %366 = vector.shape_cast %365 : vector<1x16x8xbf16> to vector<16x8xbf16>
    %cst_263 = arith.constant dense<0.000000e+00> : vector<16x144xf32>
    %367 = tpu.matmul %366, %364, %cst_263 {dimension_numbers = #tpu.dot_dimension_numbers<[1], [0], [0], [1], [0, 0, 1, 1], [], []>} : vector<16x8xbf16>, vector<8x144xbf16>, vector<16x144xf32> -> vector<16x144xf32>
    %368 = arith.addf %362, %367 : vector<16x144xf32>
    %c0_264 = arith.constant 0 : index
    %c0_265 = arith.constant 0 : index
    %c18_266 = arith.constant 18 : index
    %369 = vector.load %arg14[%c0_264, %c0_265, %c18_266] : memref<2x8x180xbf16, #tpu.memory_space<vmem>>, vector<1x8x144xbf16>
    %370 = vector.shape_cast %369 : vector<1x8x144xbf16> to vector<8x144xbf16>
    %371 = vector.extract_strided_slice %62 {offsets = [6, 0, 0], sizes = [1, 16, 8], strides = [1, 1, 1]} : vector<9x16x8xbf16> to vector<1x16x8xbf16>
    %372 = vector.shape_cast %371 : vector<1x16x8xbf16> to vector<16x8xbf16>
    %cst_267 = arith.constant dense<0.000000e+00> : vector<16x144xf32>
    %373 = tpu.matmul %372, %370, %cst_267 {dimension_numbers = #tpu.dot_dimension_numbers<[1], [0], [0], [1], [0, 0, 1, 1], [], []>} : vector<16x8xbf16>, vector<8x144xbf16>, vector<16x144xf32> -> vector<16x144xf32>
    %374 = arith.addf %368, %373 : vector<16x144xf32>
    %c0_268 = arith.constant 0 : index
    %c0_269 = arith.constant 0 : index
    %c19_270 = arith.constant 19 : index
    %375 = vector.load %arg14[%c0_268, %c0_269, %c19_270] : memref<2x8x180xbf16, #tpu.memory_space<vmem>>, vector<1x8x144xbf16>
    %376 = vector.shape_cast %375 : vector<1x8x144xbf16> to vector<8x144xbf16>
    %377 = vector.extract_strided_slice %62 {offsets = [7, 0, 0], sizes = [1, 16, 8], strides = [1, 1, 1]} : vector<9x16x8xbf16> to vector<1x16x8xbf16>
    %378 = vector.shape_cast %377 : vector<1x16x8xbf16> to vector<16x8xbf16>
    %cst_271 = arith.constant dense<0.000000e+00> : vector<16x144xf32>
    %379 = tpu.matmul %378, %376, %cst_271 {dimension_numbers = #tpu.dot_dimension_numbers<[1], [0], [0], [1], [0, 0, 1, 1], [], []>} : vector<16x8xbf16>, vector<8x144xbf16>, vector<16x144xf32> -> vector<16x144xf32>
    %380 = arith.addf %374, %379 : vector<16x144xf32>
    %c0_272 = arith.constant 0 : index
    %c0_273 = arith.constant 0 : index
    %c20_274 = arith.constant 20 : index
    %381 = vector.load %arg14[%c0_272, %c0_273, %c20_274] : memref<2x8x180xbf16, #tpu.memory_space<vmem>>, vector<1x8x144xbf16>
    %382 = vector.shape_cast %381 : vector<1x8x144xbf16> to vector<8x144xbf16>
    %383 = vector.extract_strided_slice %62 {offsets = [8, 0, 0], sizes = [1, 16, 8], strides = [1, 1, 1]} : vector<9x16x8xbf16> to vector<1x16x8xbf16>
    %384 = vector.shape_cast %383 : vector<1x16x8xbf16> to vector<16x8xbf16>
    %cst_275 = arith.constant dense<0.000000e+00> : vector<16x144xf32>
    %385 = tpu.matmul %384, %382, %cst_275 {dimension_numbers = #tpu.dot_dimension_numbers<[1], [0], [0], [1], [0, 0, 1, 1], [], []>} : vector<16x8xbf16>, vector<8x144xbf16>, vector<16x144xf32> -> vector<16x144xf32>
    %386 = arith.addf %380, %385 : vector<16x144xf32>
    %387 = vector.broadcast %63 : vector<16x1xf32> to vector<16x144xf32>
    %388 = arith.addf %386, %387 : vector<16x144xf32>
    %cst_276 = arith.constant 0.000000e+00 : f32
    %389 = vector.shape_cast %18 : vector<1x144xi1> to vector<1x144xi1>
    %390 = vector.broadcast %389 : vector<1x144xi1> to vector<16x144xi1>
    %391 = vector.broadcast %cst_276 : f32 to vector<16x144xf32>
    %392 = arith.select %390, %388, %391 : vector<16x144xi1>, vector<16x144xf32>
    %393 = arith.truncf %392 : vector<16x144xf32> to vector<16x144xbf16>
    %c1_277 = arith.constant 1 : index
    %c0_278 = arith.constant 0 : index
    %c1_279 = arith.constant 1 : index
    %394 = vector.load %arg15[%c1_277, %c0_278, %c1_279] : memref<2x16x180xbf16, #tpu.memory_space<vmem>>, vector<1x16x144xbf16>
    %395 = vector.shape_cast %394 : vector<1x16x144xbf16> to vector<16x144xbf16>
    %396 = vector.shape_cast %393 : vector<16x144xbf16> to vector<1x16x144xbf16>
    tpu.vector_store %arg15[%c1_277, %c0_278, %c1_279], %396 {strides = array<i32>} : memref<2x16x180xbf16, #tpu.memory_space<vmem>>, vector<1x16x144xbf16>,
    %c1_280 = arith.constant 1 : index
    %c0_281 = arith.constant 0 : index
    %c0_282 = arith.constant 0 : index
    %397 = vector.load %arg14[%c1_280, %c0_281, %c0_282] : memref<2x8x180xbf16, #tpu.memory_space<vmem>>, vector<1x8x144xbf16>
    %398 = vector.shape_cast %397 : vector<1x8x144xbf16> to vector<8x144xbf16>
    %399 = vector.extract_strided_slice %62 {offsets = [0, 0, 0], sizes = [1, 16, 8], strides = [1, 1, 1]} : vector<9x16x8xbf16> to vector<1x16x8xbf16>
    %400 = vector.shape_cast %399 : vector<1x16x8xbf16> to vector<16x8xbf16>
    %cst_283 = arith.constant dense<0.000000e+00> : vector<16x144xf32>
    %401 = tpu.matmul %400, %398, %cst_283 {dimension_numbers = #tpu.dot_dimension_numbers<[1], [0], [0], [1], [0, 0, 1, 1], [], []>} : vector<16x8xbf16>, vector<8x144xbf16>, vector<16x144xf32> -> vector<16x144xf32>
    %c1_284 = arith.constant 1 : index
    %c0_285 = arith.constant 0 : index
    %c1_286 = arith.constant 1 : index
    %402 = vector.load %arg14[%c1_284, %c0_285, %c1_286] : memref<2x8x180xbf16, #tpu.memory_space<vmem>>, vector<1x8x144xbf16>
    %403 = vector.shape_cast %402 : vector<1x8x144xbf16> to vector<8x144xbf16>
    %404 = vector.extract_strided_slice %62 {offsets = [1, 0, 0], sizes = [1, 16, 8], strides = [1, 1, 1]} : vector<9x16x8xbf16> to vector<1x16x8xbf16>
    %405 = vector.shape_cast %404 : vector<1x16x8xbf16> to vector<16x8xbf16>
    %cst_287 = arith.constant dense<0.000000e+00> : vector<16x144xf32>
    %406 = tpu.matmul %405, %403, %cst_287 {dimension_numbers = #tpu.dot_dimension_numbers<[1], [0], [0], [1], [0, 0, 1, 1], [], []>} : vector<16x8xbf16>, vector<8x144xbf16>, vector<16x144xf32> -> vector<16x144xf32>
    %407 = arith.addf %401, %406 : vector<16x144xf32>
    %c1_288 = arith.constant 1 : index
    %c0_289 = arith.constant 0 : index
    %c2_290 = arith.constant 2 : index
    %408 = vector.load %arg14[%c1_288, %c0_289, %c2_290] : memref<2x8x180xbf16, #tpu.memory_space<vmem>>, vector<1x8x144xbf16>
    %409 = vector.shape_cast %408 : vector<1x8x144xbf16> to vector<8x144xbf16>
    %410 = vector.extract_strided_slice %62 {offsets = [2, 0, 0], sizes = [1, 16, 8], strides = [1, 1, 1]} : vector<9x16x8xbf16> to vector<1x16x8xbf16>
    %411 = vector.shape_cast %410 : vector<1x16x8xbf16> to vector<16x8xbf16>
    %cst_291 = arith.constant dense<0.000000e+00> : vector<16x144xf32>
    %412 = tpu.matmul %411, %409, %cst_291 {dimension_numbers = #tpu.dot_dimension_numbers<[1], [0], [0], [1], [0, 0, 1, 1], [], []>} : vector<16x8xbf16>, vector<8x144xbf16>, vector<16x144xf32> -> vector<16x144xf32>
    %413 = arith.addf %407, %412 : vector<16x144xf32>
    %c0_292 = arith.constant 0 : index
    %c0_293 = arith.constant 0 : index
    %c18_294 = arith.constant 18 : index
    %414 = vector.load %arg14[%c0_292, %c0_293, %c18_294] : memref<2x8x180xbf16, #tpu.memory_space<vmem>>, vector<1x8x144xbf16>
    %415 = vector.shape_cast %414 : vector<1x8x144xbf16> to vector<8x144xbf16>
    %416 = vector.extract_strided_slice %62 {offsets = [3, 0, 0], sizes = [1, 16, 8], strides = [1, 1, 1]} : vector<9x16x8xbf16> to vector<1x16x8xbf16>
    %417 = vector.shape_cast %416 : vector<1x16x8xbf16> to vector<16x8xbf16>
    %cst_295 = arith.constant dense<0.000000e+00> : vector<16x144xf32>
    %418 = tpu.matmul %417, %415, %cst_295 {dimension_numbers = #tpu.dot_dimension_numbers<[1], [0], [0], [1], [0, 0, 1, 1], [], []>} : vector<16x8xbf16>, vector<8x144xbf16>, vector<16x144xf32> -> vector<16x144xf32>
    %419 = arith.addf %413, %418 : vector<16x144xf32>
    %c0_296 = arith.constant 0 : index
    %c0_297 = arith.constant 0 : index
    %c19_298 = arith.constant 19 : index
    %420 = vector.load %arg14[%c0_296, %c0_297, %c19_298] : memref<2x8x180xbf16, #tpu.memory_space<vmem>>, vector<1x8x144xbf16>
    %421 = vector.shape_cast %420 : vector<1x8x144xbf16> to vector<8x144xbf16>
    %422 = vector.extract_strided_slice %62 {offsets = [4, 0, 0], sizes = [1, 16, 8], strides = [1, 1, 1]} : vector<9x16x8xbf16> to vector<1x16x8xbf16>
    %423 = vector.shape_cast %422 : vector<1x16x8xbf16> to vector<16x8xbf16>
    %cst_299 = arith.constant dense<0.000000e+00> : vector<16x144xf32>
    %424 = tpu.matmul %423, %421, %cst_299 {dimension_numbers = #tpu.dot_dimension_numbers<[1], [0], [0], [1], [0, 0, 1, 1], [], []>} : vector<16x8xbf16>, vector<8x144xbf16>, vector<16x144xf32> -> vector<16x144xf32>
    %425 = arith.addf %419, %424 : vector<16x144xf32>
    %c0_300 = arith.constant 0 : index
    %c0_301 = arith.constant 0 : index
    %c20_302 = arith.constant 20 : index
    %426 = vector.load %arg14[%c0_300, %c0_301, %c20_302] : memref<2x8x180xbf16, #tpu.memory_space<vmem>>, vector<1x8x144xbf16>
    %427 = vector.shape_cast %426 : vector<1x8x144xbf16> to vector<8x144xbf16>
    %428 = vector.extract_strided_slice %62 {offsets = [5, 0, 0], sizes = [1, 16, 8], strides = [1, 1, 1]} : vector<9x16x8xbf16> to vector<1x16x8xbf16>
    %429 = vector.shape_cast %428 : vector<1x16x8xbf16> to vector<16x8xbf16>
    %cst_303 = arith.constant dense<0.000000e+00> : vector<16x144xf32>
    %430 = tpu.matmul %429, %427, %cst_303 {dimension_numbers = #tpu.dot_dimension_numbers<[1], [0], [0], [1], [0, 0, 1, 1], [], []>} : vector<16x8xbf16>, vector<8x144xbf16>, vector<16x144xf32> -> vector<16x144xf32>
    %431 = arith.addf %425, %430 : vector<16x144xf32>
    %c1_304 = arith.constant 1 : index
    %c0_305 = arith.constant 0 : index
    %c18_306 = arith.constant 18 : index
    %432 = vector.load %arg14[%c1_304, %c0_305, %c18_306] : memref<2x8x180xbf16, #tpu.memory_space<vmem>>, vector<1x8x144xbf16>
    %433 = vector.shape_cast %432 : vector<1x8x144xbf16> to vector<8x144xbf16>
    %434 = vector.extract_strided_slice %62 {offsets = [6, 0, 0], sizes = [1, 16, 8], strides = [1, 1, 1]} : vector<9x16x8xbf16> to vector<1x16x8xbf16>
    %435 = vector.shape_cast %434 : vector<1x16x8xbf16> to vector<16x8xbf16>
    %cst_307 = arith.constant dense<0.000000e+00> : vector<16x144xf32>
    %436 = tpu.matmul %435, %433, %cst_307 {dimension_numbers = #tpu.dot_dimension_numbers<[1], [0], [0], [1], [0, 0, 1, 1], [], []>} : vector<16x8xbf16>, vector<8x144xbf16>, vector<16x144xf32> -> vector<16x144xf32>
    %437 = arith.addf %431, %436 : vector<16x144xf32>
    %c1_308 = arith.constant 1 : index
    %c0_309 = arith.constant 0 : index
    %c19_310 = arith.constant 19 : index
    %438 = vector.load %arg14[%c1_308, %c0_309, %c19_310] : memref<2x8x180xbf16, #tpu.memory_space<vmem>>, vector<1x8x144xbf16>
    %439 = vector.shape_cast %438 : vector<1x8x144xbf16> to vector<8x144xbf16>
    %440 = vector.extract_strided_slice %62 {offsets = [7, 0, 0], sizes = [1, 16, 8], strides = [1, 1, 1]} : vector<9x16x8xbf16> to vector<1x16x8xbf16>
    %441 = vector.shape_cast %440 : vector<1x16x8xbf16> to vector<16x8xbf16>
    %cst_311 = arith.constant dense<0.000000e+00> : vector<16x144xf32>
    %442 = tpu.matmul %441, %439, %cst_311 {dimension_numbers = #tpu.dot_dimension_numbers<[1], [0], [0], [1], [0, 0, 1, 1], [], []>} : vector<16x8xbf16>, vector<8x144xbf16>, vector<16x144xf32> -> vector<16x144xf32>
    %443 = arith.addf %437, %442 : vector<16x144xf32>
    %c1_312 = arith.constant 1 : index
    %c0_313 = arith.constant 0 : index
    %c20_314 = arith.constant 20 : index
    %444 = vector.load %arg14[%c1_312, %c0_313, %c20_314] : memref<2x8x180xbf16, #tpu.memory_space<vmem>>, vector<1x8x144xbf16>
    %445 = vector.shape_cast %444 : vector<1x8x144xbf16> to vector<8x144xbf16>
    %446 = vector.extract_strided_slice %62 {offsets = [8, 0, 0], sizes = [1, 16, 8], strides = [1, 1, 1]} : vector<9x16x8xbf16> to vector<1x16x8xbf16>
    %447 = vector.shape_cast %446 : vector<1x16x8xbf16> to vector<16x8xbf16>
    %cst_315 = arith.constant dense<0.000000e+00> : vector<16x144xf32>
    %448 = tpu.matmul %447, %445, %cst_315 {dimension_numbers = #tpu.dot_dimension_numbers<[1], [0], [0], [1], [0, 0, 1, 1], [], []>} : vector<16x8xbf16>, vector<8x144xbf16>, vector<16x144xf32> -> vector<16x144xf32>
    %449 = arith.addf %443, %448 : vector<16x144xf32>
    %450 = vector.broadcast %63 : vector<16x1xf32> to vector<16x144xf32>
    %451 = arith.addf %449, %450 : vector<16x144xf32>
    %cst_316 = arith.constant 0.000000e+00 : f32
    %452 = vector.shape_cast %18 : vector<1x144xi1> to vector<1x144xi1>
    %453 = vector.broadcast %452 : vector<1x144xi1> to vector<16x144xi1>
    %454 = vector.broadcast %cst_316 : f32 to vector<16x144xf32>
    %455 = arith.select %453, %451, %454 : vector<16x144xi1>, vector<16x144xf32>
    %456 = arith.truncf %455 : vector<16x144xf32> to vector<16x144xbf16>
    %c0_317 = arith.constant 0 : index
    %c0_318 = arith.constant 0 : index
    %c19_319 = arith.constant 19 : index
    %457 = vector.load %arg15[%c0_317, %c0_318, %c19_319] : memref<2x16x180xbf16, #tpu.memory_space<vmem>>, vector<1x16x144xbf16>
    %458 = vector.shape_cast %457 : vector<1x16x144xbf16> to vector<16x144xbf16>
    %459 = vector.shape_cast %456 : vector<16x144xbf16> to vector<1x16x144xbf16>
    tpu.vector_store %arg15[%c0_317, %c0_318, %c19_319], %459 {strides = array<i32>} : memref<2x16x180xbf16, #tpu.memory_space<vmem>>, vector<1x16x144xbf16>,
    %c0_320 = arith.constant 0 : index
    %c0_321 = arith.constant 0 : index
    %c0_322 = arith.constant 0 : index
    %460 = vector.load %arg15[%c0_320, %c0_321, %c0_322] : memref<2x16x180xbf16, #tpu.memory_space<vmem>>, vector<1x16x144xbf16>
    %461 = vector.shape_cast %460 : vector<1x16x144xbf16> to vector<16x144xbf16>
    %462 = vector.extract_strided_slice %64 {offsets = [0, 0, 0], sizes = [1, 6, 16], strides = [1, 1, 1]} : vector<9x6x16xbf16> to vector<1x6x16xbf16>
    %463 = vector.shape_cast %462 : vector<1x6x16xbf16> to vector<6x16xbf16>
    %cst_323 = arith.constant dense<0.000000e+00> : vector<6x144xf32>
    %464 = tpu.matmul %463, %461, %cst_323 {dimension_numbers = #tpu.dot_dimension_numbers<[1], [0], [0], [1], [0, 0, 1, 1], [], []>} : vector<6x16xbf16>, vector<16x144xbf16>, vector<6x144xf32> -> vector<6x144xf32>
    %c0_324 = arith.constant 0 : index
    %c0_325 = arith.constant 0 : index
    %c1_326 = arith.constant 1 : index
    %465 = vector.load %arg15[%c0_324, %c0_325, %c1_326] : memref<2x16x180xbf16, #tpu.memory_space<vmem>>, vector<1x16x144xbf16>
    %466 = vector.shape_cast %465 : vector<1x16x144xbf16> to vector<16x144xbf16>
    %467 = vector.extract_strided_slice %64 {offsets = [1, 0, 0], sizes = [1, 6, 16], strides = [1, 1, 1]} : vector<9x6x16xbf16> to vector<1x6x16xbf16>
    %468 = vector.shape_cast %467 : vector<1x6x16xbf16> to vector<6x16xbf16>
    %cst_327 = arith.constant dense<0.000000e+00> : vector<6x144xf32>
    %469 = tpu.matmul %468, %466, %cst_327 {dimension_numbers = #tpu.dot_dimension_numbers<[1], [0], [0], [1], [0, 0, 1, 1], [], []>} : vector<6x16xbf16>, vector<16x144xbf16>, vector<6x144xf32> -> vector<6x144xf32>
    %470 = arith.addf %464, %469 : vector<6x144xf32>
    %c0_328 = arith.constant 0 : index
    %c0_329 = arith.constant 0 : index
    %c2_330 = arith.constant 2 : index
    %471 = vector.load %arg15[%c0_328, %c0_329, %c2_330] : memref<2x16x180xbf16, #tpu.memory_space<vmem>>, vector<1x16x144xbf16>
    %472 = vector.shape_cast %471 : vector<1x16x144xbf16> to vector<16x144xbf16>
    %473 = vector.extract_strided_slice %64 {offsets = [2, 0, 0], sizes = [1, 6, 16], strides = [1, 1, 1]} : vector<9x6x16xbf16> to vector<1x6x16xbf16>
    %474 = vector.shape_cast %473 : vector<1x6x16xbf16> to vector<6x16xbf16>
    %cst_331 = arith.constant dense<0.000000e+00> : vector<6x144xf32>
    %475 = tpu.matmul %474, %472, %cst_331 {dimension_numbers = #tpu.dot_dimension_numbers<[1], [0], [0], [1], [0, 0, 1, 1], [], []>} : vector<6x16xbf16>, vector<16x144xbf16>, vector<6x144xf32> -> vector<6x144xf32>
    %476 = arith.addf %470, %475 : vector<6x144xf32>
    %c1_332 = arith.constant 1 : index
    %c0_333 = arith.constant 0 : index
    %c0_334 = arith.constant 0 : index
    %477 = vector.load %arg15[%c1_332, %c0_333, %c0_334] : memref<2x16x180xbf16, #tpu.memory_space<vmem>>, vector<1x16x144xbf16>
    %478 = vector.shape_cast %477 : vector<1x16x144xbf16> to vector<16x144xbf16>
    %479 = vector.extract_strided_slice %64 {offsets = [3, 0, 0], sizes = [1, 6, 16], strides = [1, 1, 1]} : vector<9x6x16xbf16> to vector<1x6x16xbf16>
    %480 = vector.shape_cast %479 : vector<1x6x16xbf16> to vector<6x16xbf16>
    %cst_335 = arith.constant dense<0.000000e+00> : vector<6x144xf32>
    %481 = tpu.matmul %480, %478, %cst_335 {dimension_numbers = #tpu.dot_dimension_numbers<[1], [0], [0], [1], [0, 0, 1, 1], [], []>} : vector<6x16xbf16>, vector<16x144xbf16>, vector<6x144xf32> -> vector<6x144xf32>
    %482 = arith.addf %476, %481 : vector<6x144xf32>
    %c1_336 = arith.constant 1 : index
    %c0_337 = arith.constant 0 : index
    %c1_338 = arith.constant 1 : index
    %483 = vector.load %arg15[%c1_336, %c0_337, %c1_338] : memref<2x16x180xbf16, #tpu.memory_space<vmem>>, vector<1x16x144xbf16>
    %484 = vector.shape_cast %483 : vector<1x16x144xbf16> to vector<16x144xbf16>
    %485 = vector.extract_strided_slice %64 {offsets = [4, 0, 0], sizes = [1, 6, 16], strides = [1, 1, 1]} : vector<9x6x16xbf16> to vector<1x6x16xbf16>
    %486 = vector.shape_cast %485 : vector<1x6x16xbf16> to vector<6x16xbf16>
    %cst_339 = arith.constant dense<0.000000e+00> : vector<6x144xf32>
    %487 = tpu.matmul %486, %484, %cst_339 {dimension_numbers = #tpu.dot_dimension_numbers<[1], [0], [0], [1], [0, 0, 1, 1], [], []>} : vector<6x16xbf16>, vector<16x144xbf16>, vector<6x144xf32> -> vector<6x144xf32>
    %488 = arith.addf %482, %487 : vector<6x144xf32>
    %c1_340 = arith.constant 1 : index
    %c0_341 = arith.constant 0 : index
    %c2_342 = arith.constant 2 : index
    %489 = vector.load %arg15[%c1_340, %c0_341, %c2_342] : memref<2x16x180xbf16, #tpu.memory_space<vmem>>, vector<1x16x144xbf16>
    %490 = vector.shape_cast %489 : vector<1x16x144xbf16> to vector<16x144xbf16>
    %491 = vector.extract_strided_slice %64 {offsets = [5, 0, 0], sizes = [1, 6, 16], strides = [1, 1, 1]} : vector<9x6x16xbf16> to vector<1x6x16xbf16>
    %492 = vector.shape_cast %491 : vector<1x6x16xbf16> to vector<6x16xbf16>
    %cst_343 = arith.constant dense<0.000000e+00> : vector<6x144xf32>
    %493 = tpu.matmul %492, %490, %cst_343 {dimension_numbers = #tpu.dot_dimension_numbers<[1], [0], [0], [1], [0, 0, 1, 1], [], []>} : vector<6x16xbf16>, vector<16x144xbf16>, vector<6x144xf32> -> vector<6x144xf32>
    %494 = arith.addf %488, %493 : vector<6x144xf32>
    %c0_344 = arith.constant 0 : index
    %c0_345 = arith.constant 0 : index
    %c18_346 = arith.constant 18 : index
    %495 = vector.load %arg15[%c0_344, %c0_345, %c18_346] : memref<2x16x180xbf16, #tpu.memory_space<vmem>>, vector<1x16x144xbf16>
    %496 = vector.shape_cast %495 : vector<1x16x144xbf16> to vector<16x144xbf16>
    %497 = vector.extract_strided_slice %64 {offsets = [6, 0, 0], sizes = [1, 6, 16], strides = [1, 1, 1]} : vector<9x6x16xbf16> to vector<1x6x16xbf16>
    %498 = vector.shape_cast %497 : vector<1x6x16xbf16> to vector<6x16xbf16>
    %cst_347 = arith.constant dense<0.000000e+00> : vector<6x144xf32>
    %499 = tpu.matmul %498, %496, %cst_347 {dimension_numbers = #tpu.dot_dimension_numbers<[1], [0], [0], [1], [0, 0, 1, 1], [], []>} : vector<6x16xbf16>, vector<16x144xbf16>, vector<6x144xf32> -> vector<6x144xf32>
    %500 = arith.addf %494, %499 : vector<6x144xf32>
    %c0_348 = arith.constant 0 : index
    %c0_349 = arith.constant 0 : index
    %c19_350 = arith.constant 19 : index
    %501 = vector.load %arg15[%c0_348, %c0_349, %c19_350] : memref<2x16x180xbf16, #tpu.memory_space<vmem>>, vector<1x16x144xbf16>
    %502 = vector.shape_cast %501 : vector<1x16x144xbf16> to vector<16x144xbf16>
    %503 = vector.extract_strided_slice %64 {offsets = [7, 0, 0], sizes = [1, 6, 16], strides = [1, 1, 1]} : vector<9x6x16xbf16> to vector<1x6x16xbf16>
    %504 = vector.shape_cast %503 : vector<1x6x16xbf16> to vector<6x16xbf16>
    %cst_351 = arith.constant dense<0.000000e+00> : vector<6x144xf32>
    %505 = tpu.matmul %504, %502, %cst_351 {dimension_numbers = #tpu.dot_dimension_numbers<[1], [0], [0], [1], [0, 0, 1, 1], [], []>} : vector<6x16xbf16>, vector<16x144xbf16>, vector<6x144xf32> -> vector<6x144xf32>
    %506 = arith.addf %500, %505 : vector<6x144xf32>
    %c0_352 = arith.constant 0 : index
    %c0_353 = arith.constant 0 : index
    %c20_354 = arith.constant 20 : index
    %507 = vector.load %arg15[%c0_352, %c0_353, %c20_354] : memref<2x16x180xbf16, #tpu.memory_space<vmem>>, vector<1x16x144xbf16>
    %508 = vector.shape_cast %507 : vector<1x16x144xbf16> to vector<16x144xbf16>
    %509 = vector.extract_strided_slice %64 {offsets = [8, 0, 0], sizes = [1, 6, 16], strides = [1, 1, 1]} : vector<9x6x16xbf16> to vector<1x6x16xbf16>
    %510 = vector.shape_cast %509 : vector<1x6x16xbf16> to vector<6x16xbf16>
    %cst_355 = arith.constant dense<0.000000e+00> : vector<6x144xf32>
    %511 = tpu.matmul %510, %508, %cst_355 {dimension_numbers = #tpu.dot_dimension_numbers<[1], [0], [0], [1], [0, 0, 1, 1], [], []>} : vector<6x16xbf16>, vector<16x144xbf16>, vector<6x144xf32> -> vector<6x144xf32>
    %512 = arith.addf %506, %511 : vector<6x144xf32>
    %513 = vector.broadcast %65 : vector<6x1xf32> to vector<6x144xf32>
    %514 = arith.addf %512, %513 : vector<6x144xf32>
    %c0_356 = arith.constant 0 : index
    %c0_357 = arith.constant 0 : index
    %c0_358 = arith.constant 0 : index
    %515 = vector.load %arg12[%c0_356, %c0_357, %c0_358] : memref<1x6x144xf32, #tpu.memory_space<vmem>>, vector<1x6x144xf32>
    %516 = vector.shape_cast %515 : vector<1x6x144xf32> to vector<6x144xf32>
    %517 = vector.shape_cast %514 : vector<6x144xf32> to vector<1x6x144xf32>
    tpu.vector_store %arg12[%c0_356, %c0_357, %c0_358], %517 {strides = array<i32>} : memref<1x6x144xf32, #tpu.memory_space<vmem>>, vector<1x6x144xf32>,
    return
  }
  func.func @transform_0(%arg0: i32) -> (i32, i32, i32, i32) {
    %c0_i32 = arith.constant 0 : i32
    %c0_i32_0 = arith.constant 0 : i32
    %c0_i32_1 = arith.constant 0 : i32
    %c0_i32_2 = arith.constant 0 : i32
    return %arg0, %c0_i32, %c0_i32_0, %c0_i32_1 : i32, i32, i32, i32
  }
  func.func @transform_1(%arg0: i32) -> (i32, i32, i32) {
    %c0_i32 = arith.constant 0 : i32
    %c0_i32_0 = arith.constant 0 : i32
    %c0_i32_1 = arith.constant 0 : i32
    %c0_i32_2 = arith.constant 0 : i32
    return %c0_i32, %c0_i32_0, %c0_i32_1 : i32, i32, i32
  }
  func.func @transform_2(%arg0: i32) -> (i32, i32) {
    %c0_i32 = arith.constant 0 : i32
    %c0_i32_0 = arith.constant 0 : i32
    %c0_i32_1 = arith.constant 0 : i32
    return %c0_i32, %c0_i32_0 : i32, i32
  }
  func.func @transform_3(%arg0: i32) -> (i32, i32, i32) {
    %c0_i32 = arith.constant 0 : i32
    %c0_i32_0 = arith.constant 0 : i32
    %c0_i32_1 = arith.constant 0 : i32
    %c0_i32_2 = arith.constant 0 : i32
    return %c0_i32, %c0_i32_0, %c0_i32_1 : i32, i32, i32
  }
  func.func @transform_4(%arg0: i32) -> (i32, i32) {
    %c0_i32 = arith.constant 0 : i32
    %c0_i32_0 = arith.constant 0 : i32
    %c0_i32_1 = arith.constant 0 : i32
    return %c0_i32, %c0_i32_0 : i32, i32
  }
  func.func @transform_5(%arg0: i32) -> (i32, i32, i32) {
    %c0_i32 = arith.constant 0 : i32
    %c0_i32_0 = arith.constant 0 : i32
    %c0_i32_1 = arith.constant 0 : i32
    %c0_i32_2 = arith.constant 0 : i32
    return %c0_i32, %c0_i32_0, %c0_i32_1 : i32, i32, i32
  }
  func.func @transform_6(%arg0: i32) -> (i32, i32) {
    %c0_i32 = arith.constant 0 : i32
    %c0_i32_0 = arith.constant 0 : i32
    %c0_i32_1 = arith.constant 0 : i32
    return %c0_i32, %c0_i32_0 : i32, i32
  }
  func.func @transform_7(%arg0: i32) -> (i32, i32, i32) {
    %c0_i32 = arith.constant 0 : i32
    %c0_i32_0 = arith.constant 0 : i32
    %c0_i32_1 = arith.constant 0 : i32
    %c0_i32_2 = arith.constant 0 : i32
    return %c0_i32, %c0_i32_0, %c0_i32_1 : i32, i32, i32
  }
  func.func @transform_8(%arg0: i32) -> (i32, i32) {
    %c0_i32 = arith.constant 0 : i32
    %c0_i32_0 = arith.constant 0 : i32
    %c0_i32_1 = arith.constant 0 : i32
    return %c0_i32, %c0_i32_0 : i32, i32
  }
  func.func @transform_9(%arg0: i32) -> (i32, i32, i32) {
    %c0_i32 = arith.constant 0 : i32
    %c0_i32_0 = arith.constant 0 : i32
    %c0_i32_1 = arith.constant 0 : i32
    %c0_i32_2 = arith.constant 0 : i32
    return %c0_i32, %c0_i32_0, %c0_i32_1 : i32, i32, i32
  }
  func.func @transform_10(%arg0: i32) -> (i32, i32) {
    %c0_i32 = arith.constant 0 : i32
    %c0_i32_0 = arith.constant 0 : i32
    %c0_i32_1 = arith.constant 0 : i32
    return %c0_i32, %c0_i32_0 : i32, i32
  }
  func.func @transform_11(%arg0: i32) -> (i32, i32, i32) {
    %c0_i32 = arith.constant 0 : i32
    %c0_i32_0 = arith.constant 0 : i32
    %c0_i32_1 = arith.constant 0 : i32
    return %arg0, %c0_i32, %c0_i32_0 : i32, i32, i32
  }
}

</mosaic_0001>

<llo_original>
// kernel: dvdnet_forward.1
$region0: #{dvdnet_forward.1}
  #allocation0 [shape = 'u32[]', space=smem, size = 0x4, offset = 0x4, fixed_abs, tag = 'smem constant byte address 0x4 - core index']
  #allocation1 [shape = 'u32[72,128]{1,0:T(1,128)}', space=vmem, size = 0x9000, scoped, tag = 'internal scratch']
  #allocation2 [shape = 'bf16[2,16,180]{2,1,0:T(8,128)(2,1)}', space=vmem, size = 0x4000, scoped, tag = 'scratch operand']
  #allocation3 [shape = 'bf16[2,8,180]{2,1,0:T(8,128)(2,1)}', space=vmem, size = 0x2000, scoped, tag = 'scratch operand']
  #allocation4 [shape = 'bf16[2,16,180]{2,1,0:T(8,128)(2,1)}', space=vmem, size = 0x4000, scoped, tag = 'scratch operand']
  %s0 = inlined_call_operand.vmem [shape: bf16[2,2,3,180], index: 0, kind: input, shape index: {}]
  %s1 = inlined_call_operand.vmem [shape: bf16[9,16,3], index: 1, kind: input, shape index: {}]
  %s2 = inlined_call_operand.vmem [shape: f32[16,1], index: 2, kind: input, shape index: {}]
  %s3 = inlined_call_operand.vmem [shape: bf16[9,16,16], index: 3, kind: input, shape index: {}]
  %s4 = inlined_call_operand.vmem [shape: f32[16,1], index: 4, kind: input, shape index: {}]
  %s5 = inlined_call_operand.vmem [shape: bf16[1,8,16], index: 5, kind: input, shape index: {}]
  %s6 = inlined_call_operand.vmem [shape: f32[8,1], index: 6, kind: input, shape index: {}]
  %s7 = inlined_call_operand.vmem [shape: bf16[9,16,8], index: 7, kind: input, shape index: {}]
  %s8 = inlined_call_operand.vmem [shape: f32[16,1], index: 8, kind: input, shape index: {}]
  %s9 = inlined_call_operand.vmem [shape: bf16[9,6,16], index: 9, kind: input, shape index: {}]
  %s10 = inlined_call_operand.vmem [shape: f32[6,1], index: 10, kind: input, shape index: {}]
  %s11 = inlined_call_operand.vmem [shape: f32[2,6,144], index: 11, kind: output, shape index: {}]
  %s12 = sld [smem:[#allocation0]]
  $region77: #{dvdnet_forward.1} parent=0
    _
  %s14 = ssub.s32 1, %s12
  %s15 = scalar_select 0, %s14, %s12
  loop: start=0, step=1, limit=4
  $region2: #{dvdnet_forward.1} parent=0 // loop_pre_header
    _
  $region3: #{dvdnet_forward.1} parent=0 // loop_header
    %s17 = sphi 0, %s21
    %p18 = scmp.ge.s32.totalorder %s17, 4
    %s27 = sphi 0, %s29
    %s30 = sphi 0, %s27
    %s31 = sphi 0, %s30
    %s47 = sphi 0, %s31
    %s51 = sphi 0, %s51
    %s53 = sphi 0, %s51
    %s54 = sphi 0, %s53
    %s68 = sphi 0, %s54
    %s72 = sphi 0, %s72
    %s74 = sphi 0, %s72
    %s75 = sphi 0, %s74
    %s89 = sphi 0, %s75
    %s93 = sphi 0, %s93
    %s95 = sphi 0, %s93
    %s96 = sphi 0, %s95
    %s110 = sphi 0, %s96
    %s114 = sphi 0, %s114
    %s116 = sphi 0, %s114
    %s117 = sphi 0, %s116
    %s131 = sphi 0, %s117
    %s135 = sphi 0, %s135
    %s137 = sphi 0, %s135
    %s138 = sphi 0, %s137
    %s152 = sphi 0, %s138
    %s156 = sphi 0, %s156
    %s158 = sphi 0, %s156
    %s159 = sphi 0, %s158
    %s173 = sphi 0, %s159
    %s177 = sphi 0, %s177
    %s179 = sphi 0, %s177
    %s180 = sphi 0, %s179
    %s194 = sphi 0, %s180
    %s198 = sphi 0, %s198
    %s200 = sphi 0, %s198
    %s201 = sphi 0, %s200
    %s215 = sphi 0, %s201
    %s219 = sphi 0, %s219
    %s221 = sphi 0, %s219
    %s222 = sphi 0, %s221
    %s236 = sphi 0, %s222
    %s240 = sphi 0, %s240
    %s242 = sphi 0, %s240
    %s243 = sphi 0, %s242
    %s257 = sphi 0, %s243
    %s263 = sphi 0, %s265
    %s266 = sphi 0, %s263
    %s267 = sphi 0, %s266
    %s283 = sphi 0, %s267
  $region4: #{dvdnet_forward.1} parent=0 // loop_header_branch
    %20 = sbr.rel (%p18) target = $region8
  $region5: #{dvdnet_forward.1} parent=0 // loop_body
    %s22 = ssub.s32 %s17, 1
    %s23 = ssub.s32 %s17, 2
    %s24 = sadd.s32 %s17, 1
    %s25 = ssub.s32 %s17, %s24
    %p26 = scmp.eq.s32.totalorder %s25, 0
    %s28 = sadd.s32 %s27, 1
    %s29 = scalar_select %p26, %s27, %s28
    %p32 = pneg %p26
    %p33 = scmp.eq.s32.totalorder %s17, 1
    %p34 = por %p32, %p33
    %p35 = scmp.ne.s32.totalorder %s27, %s30
    %p36 = scmp.eq.s32.totalorder %s17, 0
    %p37 = por %p35, %p36
    %p38 = scmp.ne.s32.totalorder %s27, %s30
    %p39 = scmp.eq.s32.totalorder %s22, 1
    %p40 = por %p38, %p39
    %p41 = scmp.ne.s32.totalorder %s30, %s31
    %p42 = scmp.eq.s32.totalorder %s22, 0
    %p43 = por %p41, %p42
    %p44 = scmp.ne.s32.totalorder %s30, %s31
    %p45 = scmp.eq.s32.totalorder %s23, 1
    %p46 = por %p44, %p45
    %p48 = scmp.ne.s32.totalorder %s31, %s47
    %p49 = scmp.eq.s32.totalorder %s23, 0
    %p50 = por %p48, %p49
    %s52 = sadd.s32 %s51, 1
    %p55 = scmp.eq.s32.totalorder %s17, 1
    %p56 = scmp.ne.s32.totalorder %s51, %s53
    %p57 = scmp.eq.s32.totalorder %s17, 0
    %p58 = por %p56, %p57
    %p59 = scmp.ne.s32.totalorder %s51, %s53
    %p60 = scmp.eq.s32.totalorder %s22, 1
    %p61 = por %p59, %p60
    %p62 = scmp.ne.s32.totalorder %s53, %s54
    %p63 = scmp.eq.s32.totalorder %s22, 0
    %p64 = por %p62, %p63
    %p65 = scmp.ne.s32.totalorder %s53, %s54
    %p66 = scmp.eq.s32.totalorder %s23, 1
    %p67 = por %p65, %p66
    %p69 = scmp.ne.s32.totalorder %s54, %s68
    %p70 = scmp.eq.s32.totalorder %s23, 0
    %p71 = por %p69, %p70
    %s73 = sadd.s32 %s72, 1
    %p76 = scmp.eq.s32.totalorder %s17, 1
    %p77 = scmp.ne.s32.totalorder %s72, %s74
    %p78 = scmp.eq.s32.totalorder %s17, 0
    %p79 = por %p77, %p78
    %p80 = scmp.ne.s32.totalorder %s72, %s74
    %p81 = scmp.eq.s32.totalorder %s22, 1
    %p82 = por %p80, %p81
    %p83 = scmp.ne.s32.totalorder %s74, %s75
    %p84 = scmp.eq.s32.totalorder %s22, 0
    %p85 = por %p83, %p84
    %p86 = scmp.ne.s32.totalorder %s74, %s75
    %p87 = scmp.eq.s32.totalorder %s23, 1
    %p88 = por %p86, %p87
    %p90 = scmp.ne.s32.totalorder %s75, %s89
    %p91 = scmp.eq.s32.totalorder %s23, 0
    %p92 = por %p90, %p91
    %s94 = sadd.s32 %s93, 1
    %p97 = scmp.eq.s32.totalorder %s17, 1
    %p98 = scmp.ne.s32.totalorder %s93, %s95
    %p99 = scmp.eq.s32.totalorder %s17, 0
    %p100 = por %p98, %p99
    %p101 = scmp.ne.s32.totalorder %s93, %s95
    %p102 = scmp.eq.s32.totalorder %s22, 1
    %p103 = por %p101, %p102
    %p104 = scmp.ne.s32.totalorder %s95, %s96
    %p105 = scmp.eq.s32.totalorder %s22, 0
    %p106 = por %p104, %p105
    %p107 = scmp.ne.s32.totalorder %s95, %s96
    %p108 = scmp.eq.s32.totalorder %s23, 1
    %p109 = por %p107, %p108
    %p111 = scmp.ne.s32.totalorder %s96, %s110
    %p112 = scmp.eq.s32.totalorder %s23, 0
    %p113 = por %p111, %p112
    %s115 = sadd.s32 %s114, 1
    %p118 = scmp.eq.s32.totalorder %s17, 1
    %p119 = scmp.ne.s32.totalorder %s114, %s116
    %p120 = scmp.eq.s32.totalorder %s17, 0
    %p121 = por %p119, %p120
    %p122 = scmp.ne.s32.totalorder %s114, %s116
    %p123 = scmp.eq.s32.totalorder %s22, 1
    %p124 = por %p122, %p123
    %p125 = scmp.ne.s32.totalorder %s116, %s117
    %p126 = scmp.eq.s32.totalorder %s22, 0
    %p127 = por %p125, %p126
    %p128 = scmp.ne.s32.totalorder %s116, %s117
    %p129 = scmp.eq.s32.totalorder %s23, 1
    %p130 = por %p128, %p129
    %p132 = scmp.ne.s32.totalorder %s117, %s131
    %p133 = scmp.eq.s32.totalorder %s23, 0
    %p134 = por %p132, %p133
    %s136 = sadd.s32 %s135, 1
    %p139 = scmp.eq.s32.totalorder %s17, 1
    %p140 = scmp.ne.s32.totalorder %s135, %s137
    %p141 = scmp.eq.s32.totalorder %s17, 0
    %p142 = por %p140, %p141
    %p143 = scmp.ne.s32.totalorder %s135, %s137
    %p144 = scmp.eq.s32.totalorder %s22, 1
    %p145 = por %p143, %p144
    %p146 = scmp.ne.s32.totalorder %s137, %s138
    %p147 = scmp.eq.s32.totalorder %s22, 0
    %p148 = por %p146, %p147
    %p149 = scmp.ne.s32.totalorder %s137, %s138
    %p150 = scmp.eq.s32.totalorder %s23, 1
    %p151 = por %p149, %p150
    %p153 = scmp.ne.s32.totalorder %s138, %s152
    %p154 = scmp.eq.s32.totalorder %s23, 0
    %p155 = por %p153, %p154
    %s157 = sadd.s32 %s156, 1
    %p160 = scmp.eq.s32.totalorder %s17, 1
    %p161 = scmp.ne.s32.totalorder %s156, %s158
    %p162 = scmp.eq.s32.totalorder %s17, 0
    %p163 = por %p161, %p162
    %p164 = scmp.ne.s32.totalorder %s156, %s158
    %p165 = scmp.eq.s32.totalorder %s22, 1
    %p166 = por %p164, %p165
    %p167 = scmp.ne.s32.totalorder %s158, %s159
    %p168 = scmp.eq.s32.totalorder %s22, 0
    %p169 = por %p167, %p168
    %p170 = scmp.ne.s32.totalorder %s158, %s159
    %p171 = scmp.eq.s32.totalorder %s23, 1
    %p172 = por %p170, %p171
    %p174 = scmp.ne.s32.totalorder %s159, %s173
    %p175 = scmp.eq.s32.totalorder %s23, 0
    %p176 = por %p174, %p175
    %s178 = sadd.s32 %s177, 1
    %p181 = scmp.eq.s32.totalorder %s17, 1
    %p182 = scmp.ne.s32.totalorder %s177, %s179
    %p183 = scmp.eq.s32.totalorder %s17, 0
    %p184 = por %p182, %p183
    %p185 = scmp.ne.s32.totalorder %s177, %s179
    %p186 = scmp.eq.s32.totalorder %s22, 1
    %p187 = por %p185, %p186
    %p188 = scmp.ne.s32.totalorder %s179, %s180
    %p189 = scmp.eq.s32.totalorder %s22, 0
    %p190 = por %p188, %p189
    %p191 = scmp.ne.s32.totalorder %s179, %s180
    %p192 = scmp.eq.s32.totalorder %s23, 1
    %p193 = por %p191, %p192
    %p195 = scmp.ne.s32.totalorder %s180, %s194
    %p196 = scmp.eq.s32.totalorder %s23, 0
    %p197 = por %p195, %p196
    %s199 = sadd.s32 %s198, 1
    %p202 = scmp.eq.s32.totalorder %s17, 1
    %p203 = scmp.ne.s32.totalorder %s198, %s200
    %p204 = scmp.eq.s32.totalorder %s17, 0
    %p205 = por %p203, %p204
    %p206 = scmp.ne.s32.totalorder %s198, %s200
    %p207 = scmp.eq.s32.totalorder %s22, 1
    %p208 = por %p206, %p207
    %p209 = scmp.ne.s32.totalorder %s200, %s201
    %p210 = scmp.eq.s32.totalorder %s22, 0
    %p211 = por %p209, %p210
    %p212 = scmp.ne.s32.totalorder %s200, %s201
    %p213 = scmp.eq.s32.totalorder %s23, 1
    %p214 = por %p212, %p213
    %p216 = scmp.ne.s32.totalorder %s201, %s215
    %p217 = scmp.eq.s32.totalorder %s23, 0
    %p218 = por %p216, %p217
    %s220 = sadd.s32 %s219, 1
    %p223 = scmp.eq.s32.totalorder %s17, 1
    %p224 = scmp.ne.s32.totalorder %s219, %s221
    %p225 = scmp.eq.s32.totalorder %s17, 0
    %p226 = por %p224, %p225
    %p227 = scmp.ne.s32.totalorder %s219, %s221
    %p228 = scmp.eq.s32.totalorder %s22, 1
    %p229 = por %p227, %p228
    %p230 = scmp.ne.s32.totalorder %s221, %s222
    %p231 = scmp.eq.s32.totalorder %s22, 0
    %p232 = por %p230, %p231
    %p233 = scmp.ne.s32.totalorder %s221, %s222
    %p234 = scmp.eq.s32.totalorder %s23, 1
    %p235 = por %p233, %p234
    %p237 = scmp.ne.s32.totalorder %s222, %s236
    %p238 = scmp.eq.s32.totalorder %s23, 0
    %p239 = por %p237, %p238
    %s241 = sadd.s32 %s240, 1
    %p244 = scmp.eq.s32.totalorder %s17, 1
    %p245 = scmp.ne.s32.totalorder %s240, %s242
    %p246 = scmp.eq.s32.totalorder %s17, 0
    %p247 = por %p245, %p246
    %p248 = scmp.ne.s32.totalorder %s240, %s242
    %p249 = scmp.eq.s32.totalorder %s22, 1
    %p250 = por %p248, %p249
    %p251 = scmp.ne.s32.totalorder %s242, %s243
    %p252 = scmp.eq.s32.totalorder %s22, 0
    %p253 = por %p251, %p252
    %p254 = scmp.ne.s32.totalorder %s242, %s243
    %p255 = scmp.eq.s32.totalorder %s23, 1
    %p256 = por %p254, %p255
    %p258 = scmp.ne.s32.totalorder %s243, %s257
    %p259 = scmp.eq.s32.totalorder %s23, 0
    %p260 = por %p258, %p259
    %s261 = ssub.s32 %s17, %s24
    %p262 = scmp.eq.s32.totalorder %s261, 0
    %s264 = sadd.s32 %s263, 1
    %s265 = scalar_select %p262, %s263, %s264
    %p268 = pneg %p262
    %p269 = scmp.eq.s32.totalorder %s17, 1
    %p270 = por %p268, %p269
    %p271 = scmp.ne.s32.totalorder %s263, %s266
    %p272 = scmp.eq.s32.totalorder %s17, 0
    %p273 = por %p271, %p272
    %p274 = scmp.ne.s32.totalorder %s263, %s266
    %p275 = scmp.eq.s32.totalorder %s22, 1
    %p276 = por %p274, %p275
    %p277 = scmp.ne.s32.totalorder %s266, %s267
    %p278 = scmp.eq.s32.totalorder %s22, 0
    %p279 = por %p277, %p278
    %p280 = scmp.ne.s32.totalorder %s266, %s267
    %p281 = scmp.eq.s32.totalorder %s23, 1
    %p282 = por %p280, %p281
    %p284 = scmp.ne.s32.totalorder %s267, %s283
    %p285 = scmp.eq.s32.totalorder %s23, 0
    %p286 = por %p284, %p285
    %p287 = scmp.le.s32.totalorder 1, %s17
    %p288 = scmp.lt.s32.totalorder %s17, 3
    %p289 = pnand %p287, %p288
    %p290 = pneg %p289
    // Predicated region
    $region9: #{dvdnet_forward.1} parent=5 // pred_check
      _
    $region10: #{dvdnet_forward.1} parent=5 // pred_check_branch
      %292 = sbr.rel (%p289) target = $region12
    $region11: #{dvdnet_forward.1} parent=5 // pred_region
      %s293 = ssub.s32 %s17, 1
      // Predicated region
      $region13: #{dvdnet_forward.1} parent=11 // pred_check
        %p294 = pneg %p64
      $region14: #{dvdnet_forward.1} parent=11 // pred_check_branch
        %296 = sbr.rel (%p294) target = $region16
      $region15: #{dvdnet_forward.1} parent=11 // pred_region
        _
      $region16: #{dvdnet_forward.1} parent=11 // pred_fallthru
        _
      // Predicated region
      $region17: #{dvdnet_forward.1} parent=11 // pred_check
        %p297 = pneg %p85
      $region18: #{dvdnet_forward.1} parent=11 // pred_check_branch
        %299 = sbr.rel (%p297) target = $region20
      $region19: #{dvdnet_forward.1} parent=11 // pred_region
        _
      $region20: #{dvdnet_forward.1} parent=11 // pred_fallthru
        _
      // Predicated region
      $region21: #{dvdnet_forward.1} parent=11 // pred_check
        %p300 = pneg %p106
      $region22: #{dvdnet_forward.1} parent=11 // pred_check_branch
        %302 = sbr.rel (%p300) target = $region24
      $region23: #{dvdnet_forward.1} parent=11 // pred_region
        _
      $region24: #{dvdnet_forward.1} parent=11 // pred_fallthru
        _
      // Predicated region
      $region25: #{dvdnet_forward.1} parent=11 // pred_check
        %p303 = pneg %p127
      $region26: #{dvdnet_forward.1} parent=11 // pred_check_branch
        %305 = sbr.rel (%p303) target = $region28
      $region27: #{dvdnet_forward.1} parent=11 // pred_region
        _
      $region28: #{dvdnet_forward.1} parent=11 // pred_fallthru
        _
      // Predicated region
      $region29: #{dvdnet_forward.1} parent=11 // pred_check
        %p306 = pneg %p148
      $region30: #{dvdnet_forward.1} parent=11 // pred_check_branch
        %308 = sbr.rel (%p306) target = $region32
      $region31: #{dvdnet_forward.1} parent=11 // pred_region
        _
      $region32: #{dvdnet_forward.1} parent=11 // pred_fallthru
        _
      // Predicated region
      $region33: #{dvdnet_forward.1} parent=11 // pred_check
        %p309 = pneg %p169
      $region34: #{dvdnet_forward.1} parent=11 // pred_check_branch
        %311 = sbr.rel (%p309) target = $region36
      $region35: #{dvdnet_forward.1} parent=11 // pred_region
        _
      $region36: #{dvdnet_forward.1} parent=11 // pred_fallthru
        _
      // Predicated region
      $region37: #{dvdnet_forward.1} parent=11 // pred_check
        %p312 = pneg %p190
      $region38: #{dvdnet_forward.1} parent=11 // pred_check_branch
        %314 = sbr.rel (%p312) target = $region40
      $region39: #{dvdnet_forward.1} parent=11 // pred_region
        _
      $region40: #{dvdnet_forward.1} parent=11 // pred_fallthru
        _
      // Predicated region
      $region41: #{dvdnet_forward.1} parent=11 // pred_check
        %p315 = pneg %p211
      $region42: #{dvdnet_forward.1} parent=11 // pred_check_branch
        %317 = sbr.rel (%p315) target = $region44
      $region43: #{dvdnet_forward.1} parent=11 // pred_region
        _
      $region44: #{dvdnet_forward.1} parent=11 // pred_fallthru
        _
      // Predicated region
      $region45: #{dvdnet_forward.1} parent=11 // pred_check
        %p318 = pneg %p232
      $region46: #{dvdnet_forward.1} parent=11 // pred_check_branch
        %320 = sbr.rel (%p318) target = $region48
      $region47: #{dvdnet_forward.1} parent=11 // pred_region
        _
      $region48: #{dvdnet_forward.1} parent=11 // pred_fallthru
        _
      // Predicated region
      $region49: #{dvdnet_forward.1} parent=11 // pred_check
        %p321 = pneg %p253
      $region50: #{dvdnet_forward.1} parent=11 // pred_check_branch
        %323 = sbr.rel (%p321) target = $region52
      $region51: #{dvdnet_forward.1} parent=11 // pred_region
        _
      $region52: #{dvdnet_forward.1} parent=11 // pred_fallthru
        _
    $region12: #{dvdnet_forward.1} parent=5 // pred_fallthru
      _
    %p324 = scmp.lt.s32.totalorder %s17, 2
    // Predicated region
    $region53: #{dvdnet_forward.1} parent=5 // pred_check
      %p325 = pneg %p324
    $region54: #{dvdnet_forward.1} parent=5 // pred_check_branch
      %327 = sbr.rel (%p325) target = $region56
    $region55: #{dvdnet_forward.1} parent=5 // pred_region
      // Predicated region
      $region57: #{dvdnet_forward.1} parent=55 // pred_check
        %p328 = pneg %p37
      $region58: #{dvdnet_forward.1} parent=55 // pred_check_branch
        %330 = sbr.rel (%p328) target = $region60
      $region59: #{dvdnet_forward.1} parent=55 // pred_region
        %p331 = scmp.lt.s32.totalorder %s17, 1
        %s332 = scalar_select %p331, %s17, 1
        %s333 = smul.addr %s332, 4
        %s334 = smul.addr %s333, 2
        %s335 = scalar_lea.vmem %s0, %s334
      $region60: #{dvdnet_forward.1} parent=55 // pred_fallthru
        _
    $region56: #{dvdnet_forward.1} parent=5 // pred_fallthru
      _
    %p336 = scmp.le.s32.totalorder 1, %s17
    %p337 = scmp.lt.s32.totalorder %s17, 3
    %p338 = pnand %p336, %p337
    %p339 = pneg %p338
    // Predicated region
    $region61: #{dvdnet_forward.1} parent=5 // pred_check
      _
    $region62: #{dvdnet_forward.1} parent=5 // pred_check_branch
      %341 = sbr.rel (%p338) target = $region64
    $region63: #{dvdnet_forward.1} parent=5 // pred_region
      %s342 = ssub.s32 %s17, 1
      %p343 = scmp.lt.s32.totalorder %s22, 1
      %s344 = scalar_select %p343, %s22, 1
      %s345 = smul.addr %s344, 4
      %s346 = smul.addr %s345, 2
      %s347 = scalar_lea.vmem %s0, %s346
      %p348 = pneg %p43
      %p349 = pneg %p40
      %p350 = pneg %p64
      %p351 = pneg %p61
      %p352 = pneg %p85
      %p353 = pneg %p82
      %p354 = pneg %p106
      %p355 = pneg %p103
      %p356 = pneg %p127
      %p357 = pneg %p124
      %p358 = pneg %p148
      %p359 = pneg %p145
      %p360 = pneg %p169
      %p361 = pneg %p166
      %p362 = pneg %p190
      %p363 = pneg %p187
      %p364 = pneg %p211
      %p365 = pneg %p208
      %p366 = pneg %p232
      %p367 = pneg %p229
      %p368 = pneg %p253
      %p369 = pneg %p250
      %p370 = pneg %p279
      %p371 = pneg %p276
      %p372 = scmp.lt.s32.totalorder %s22, 1
      %s373 = scalar_select %p372, %s22, 1
      %s374 = smul.addr %s373, 2
      %s375 = smul.addr %s374, 8
      %s376 = scalar_lea.vmem %s11, %s375
      %p377 = scmp.lt.s32.totalorder %s22, 1
      %s378 = scalar_select %p377, %s22, 1
      %s379 = smul.addr %s378, 4
      %s380 = smul.addr %s379, 2
      %s381 = scalar_lea.vmem %s0, %s380
      %p382 = scmp.lt.s32.totalorder %s22, 1
      %s383 = scalar_select %p382, %s22, 1
      %s384 = smul.addr %s383, 2
      %s385 = smul.addr %s384, 8
      %s386 = scalar_lea.vmem %s11, %s385
      %v388 = vlaneseq
      %v389 = vand.u32 %v388, 127
      %v390 = vadd.s32 %v389, 128
      %vm391 = vcmp.lt.s32.totalorder %v389, 0
      %v392 = vsub.s32 0, %v389
      %v393 = vsel %vm391, %v392, %v389
      %v394 = vand.u32 %v393, 65535
      %v395 = vshrl.u32 %v393, 16
      %v397 = vmul.u32 %v394, 14564
      %v398 = vmul.u32 %v394, 58254
      %v399 = vmul.u32 %v395, 14564
      %v400 = vmul.u32 %v395, 58254
      %v401 = vshll.u32 %v398, 16
      %v402 = vshrl.u32 %v398, 16
      %v403 = vshll.u32 %v399, 16
      %v404 = vshrl.u32 %v399, 16
      %vm405 = vc.u32 %v397, %v401
      %v406 = vsel %vm405, 1, 0
      %v407 = vadd.s32 %v397, %v401
      %v408 = vadd.s32 %v400, %v406
      %vm409 = vc.u32 %v407, %v403
      %v410 = vsel %vm409, 1, 0
      %v411 = vadd.s32 %v407, %v403
      %v412 = vadd.s32 %v408, %v410
      %v413 = vadd.s32 %v412, %v402
      %v414 = vadd.s32 %v413, %v404
      %v415 = vshrl.u32 %v414, 4
      %v416 = vmul.u32 %v415, 18
      %v417 = vsub.s32 %v393, %v416
      %v418 = vsub.s32 0, %v417
      %v419 = vsel %vm391, %v418, %v417
      %vm420 = vcmp.lt.s32.totalorder %v390, 0
      %v421 = vsub.s32 0, %v390
      %v422 = vsel %vm420, %v421, %v390
      %v423 = vand.u32 %v422, 65535
      %v424 = vshrl.u32 %v422, 16
      %v426 = vmul.u32 %v423, 14564
      %v427 = vmul.u32 %v423, 58254
      %v428 = vmul.u32 %v424, 14564
      %v429 = vmul.u32 %v424, 58254
      %v430 = vshll.u32 %v427, 16
      %v431 = vshrl.u32 %v427, 16
      %v432 = vshll.u32 %v428, 16
      %v433 = vshrl.u32 %v428, 16
      %vm434 = vc.u32 %v426, %v430
      %v435 = vsel %vm434, 1, 0
      %v436 = vadd.s32 %v426, %v430
      %v437 = vadd.s32 %v429, %v435
      %vm438 = vc.u32 %v436, %v432
      %v439 = vsel %vm438, 1, 0
      %v440 = vadd.s32 %v436, %v432
      %v441 = vadd.s32 %v437, %v439
      %v442 = vadd.s32 %v441, %v431
      %v443 = vadd.s32 %v442, %v433
      %v444 = vshrl.u32 %v443, 4
      %v445 = vmul.u32 %v444, 18
      %v446 = vsub.s32 %v422, %v445
      %v447 = vsub.s32 0, %v446
      %v448 = vsel %vm420, %v447, %v446
      %vm449 = vcmp.ne.s32.totalorder %v419, 0
      %vm450 = vcmp.ne.s32.totalorder %v448, 0
      %vm451 = vcmp.lt.s32.totalorder %v419, 0
      %vm452 = vcmp.lt.s32.totalorder %v448, 0
      %vm453 = vmand %vm451, %vm449
      %vm454 = vmand %vm452, %vm450
      %v455 = vadd.s32 %v419, 18
      %v456 = vadd.s32 %v448, 18
      %v457 = vsel %vm453, %v455, %v419
      %v458 = vsel %vm454, %v456, %v448
      %vm459 = vcmp.lt.s32.totalorder %v457, 16
      %vm460 = vcmp.lt.s32.totalorder %v458, 16
      %vm461 = vcmask 150528
      %462 = vst.msk [vmem:[#allocation2] sm:$0xf] %vm461, 0
      %463 = vst.msk [vmem:[#allocation2 + $0x8] sm:$0xf] %vm461, 0
      %s464 = scalar_lea.vmem [#allocation2], 16
      %vm465 = vcmask 3072
      %466 = vst.msk [vmem:[%s464] sm:$0xf] %vm465, 0
      %467 = vst.msk [vmem:[%s464 + $0x8] sm:$0xf] %vm465, 0
      %vm468 = vcmask 273536
      %469 = vst.msk [vmem:[%s464 + $0x4] sm:$0xf] %vm468, 0
      %470 = vst.msk [vmem:[%s464 + $0xc] sm:$0xf] %vm468, 0
      %471 = vst.msk [vmem:[#allocation3] sm:$0xf] %vm461, 0
      %s472 = scalar_lea.vmem [#allocation3], 8
      %473 = vst.msk [vmem:[%s472] sm:$0xf] %vm465, 0
      %474 = vst.msk [vmem:[%s472 + $0x4] sm:$0xf] %vm468, 0
      %475 = vst.msk [vmem:[#allocation4] sm:$0xf] %vm461, 0
      %476 = vst.msk [vmem:[#allocation4 + $0x8] sm:$0xf] %vm461, 0
      %s477 = scalar_lea.vmem [#allocation4], 16
      %478 = vst.msk [vmem:[%s477] sm:$0xf] %vm465, 0
      %479 = vst.msk [vmem:[%s477 + $0x8] sm:$0xf] %vm465, 0
      %480 = vst.msk [vmem:[%s477 + $0x4] sm:$0xf] %vm468, 0
      %481 = vst.msk [vmem:[%s477 + $0xc] sm:$0xf] %vm468, 0
      %v482 = vld [vmem:[%s1] sm:$0xf]
      %v483 = vld [vmem:[%s1 + $0x4] sm:$0xf]
      %v484 = vld [vmem:[%s1 + $0x8] sm:$0xf]
      %v485 = vld [vmem:[%s1 + $0xc] sm:$0xf]
      %v486 = vld [vmem:[%s1 + $0x10] sm:$0xf]
      %v487 = vld [vmem:[%s1 + $0x14] sm:$0xf]
      %v488 = vld [vmem:[%s1 + $0x18] sm:$0xf]
      %v489 = vld [vmem:[%s1 + $0x1c] sm:$0xf]
      %v490 = vld [vmem:[%s1 + $0x20] sm:$0xf]
      %v491 = vld [vmem:[%s1 + $0x24] sm:$0xf]
      %v492 = vld [vmem:[%s1 + $0x28] sm:$0xf]
      %v493 = vld [vmem:[%s1 + $0x2c] sm:$0xf]
      %v494 = vld [vmem:[%s1 + $0x30] sm:$0xf]
      %v495 = vld [vmem:[%s1 + $0x34] sm:$0xf]
      %v496 = vld [vmem:[%s1 + $0x38] sm:$0xf]
      %v497 = vld [vmem:[%s1 + $0x3c] sm:$0xf]
      %v498 = vld [vmem:[%s1 + $0x40] sm:$0xf]
      %v499 = vld [vmem:[%s1 + $0x44] sm:$0xf]
      %v500 = vld [vmem:[%s2] sm:$0xff]
      %v501 = vld [vmem:[%s2 + $0x8] sm:$0xff]
      %v502 = vld [vmem:[%s3] sm:$0xf]
      %v503 = vld [vmem:[%s3 + $0x4] sm:$0xf]
      %v504 = vld [vmem:[%s3 + $0x8] sm:$0xf]
      %v505 = vld [vmem:[%s3 + $0xc] sm:$0xf]
      %v506 = vld [vmem:[%s3 + $0x10] sm:$0xf]
      %v507 = vld [vmem:[%s3 + $0x14] sm:$0xf]
      %v508 = vld [vmem:[%s3 + $0x18] sm:$0xf]
      %v509 = vld [vmem:[%s3 + $0x1c] sm:$0xf]
      %v510 = vld [vmem:[%s3 + $0x20] sm:$0xf]
      %v511 = vld [vmem:[%s3 + $0x24] sm:$0xf]
      %v512 = vld [vmem:[%s3 + $0x28] sm:$0xf]
      %v513 = vld [vmem:[%s3 + $0x2c] sm:$0xf]
      %v514 = vld [vmem:[%s3 + $0x30] sm:$0xf]
      %v515 = vld [vmem:[%s3 + $0x34] sm:$0xf]
      %v516 = vld [vmem:[%s3 + $0x38] sm:$0xf]
      %v517 = vld [vmem:[%s3 + $0x3c] sm:$0xf]
      %v518 = vld [vmem:[%s3 + $0x40] sm:$0xf]
      %v519 = vld [vmem:[%s3 + $0x44] sm:$0xf]
      %v520 = vld [vmem:[%s4] sm:$0xff]
      %v521 = vld [vmem:[%s4 + $0x8] sm:$0xff]
      %v522 = vld [vmem:[%s5] sm:$0xf]
      %v523 = vld [vmem:[%s6] sm:$0xff]
      %v524 = vld [vmem:[%s7] sm:$0xf]
      %v525 = vld [vmem:[%s7 + $0x4] sm:$0xf]
      %v526 = vld [vmem:[%s7 + $0x8] sm:$0xf]
      %v527 = vld [vmem:[%s7 + $0xc] sm:$0xf]
      %v528 = vld [vmem:[%s7 + $0x10] sm:$0xf]
      %v529 = vld [vmem:[%s7 + $0x14] sm:$0xf]
      %v530 = vld [vmem:[%s7 + $0x18] sm:$0xf]
      %v531 = vld [vmem:[%s7 + $0x1c] sm:$0xf]
      %v532 = vld [vmem:[%s7 + $0x20] sm:$0xf]
      %v533 = vld [vmem:[%s7 + $0x24] sm:$0xf]
      %v534 = vld [vmem:[%s7 + $0x28] sm:$0xf]
      %v535 = vld [vmem:[%s7 + $0x2c] sm:$0xf]
      %v536 = vld [vmem:[%s7 + $0x30] sm:$0xf]
      %v537 = vld [vmem:[%s7 + $0x34] sm:$0xf]
      %v538 = vld [vmem:[%s7 + $0x38] sm:$0xf]
      %v539 = vld [vmem:[%s7 + $0x3c] sm:$0xf]
      %v540 = vld [vmem:[%s7 + $0x40] sm:$0xf]
      %v541 = vld [vmem:[%s7 + $0x44] sm:$0xf]
      %v542 = vld [vmem:[%s8] sm:$0xff]
      %v543 = vld [vmem:[%s8 + $0x8] sm:$0xff]
      %v544 = vld [vmem:[%s9] sm:$0x7]
      %v545 = vld [vmem:[%s9 + $0x4] sm:$0x7]
      %v546 = vld [vmem:[%s9 + $0x8] sm:$0x7]
      %v547 = vld [vmem:[%s9 + $0xc] sm:$0x7]
      %v548 = vld [vmem:[%s9 + $0x10] sm:$0x7]
      %v549 = vld [vmem:[%s9 + $0x14] sm:$0x7]
      %v550 = vld [vmem:[%s9 + $0x18] sm:$0x7]
      %v551 = vld [vmem:[%s9 + $0x1c] sm:$0x7]
      %v552 = vld [vmem:[%s9 + $0x20] sm:$0x7]
      %v553 = vld [vmem:[%s10] sm:$0x3f]
      %v554 = vld [vmem:[%s381] sm:$0xf]
      %v557 = vunpack.c.l.b16 %v484
      %v558 = vunpack.c.l.b16 %v485
      %v559 = vpack.c.b16 %v558, %v557
      %561 = vst [vmem:[#allocation1] ss:$4 sm:$0xff] %v554
      %v562 = vld.sshfl [vmem:[#allocation1] sm:$0xff pattern:$0x73625140]
      %v564 = vld.sshfl [vmem:[#allocation1 + $0x8] sm:$0xff pattern:$0x73625140]
      %566 = vrot.lane.b32.xlu0 %v562, 127
      %v567 = vpop.permute.xlu0 %566
      %568 = vrot.lane.b32.xlu0 %v564, 127
      %v569 = vpop.permute.xlu0 %568
      %vm570 = vcmask 1039360
      %v571 = vsel %vm570, %v567, %v569
      %vm572 = vcmask 23552
      %v574 = vsel %vm572, %v559, 0
      %vm576 = vcmask 1040384
      %vm577 = vcmask 1041408
      %v578 = vsel %vm576, 4294967295, 65535
      %v579 = vsel %vm577, %v578, 0
      %v581 = vand.u32 %v571, %v579
      %v584 = vand.u32 %v569, %v579
      %586 = vmatpush.bf16.msra.mxu0 0
      %587 = vmatpush.bf16.msra.mxu0 0
      %588 = vmatpush.bf16.msra.mxu0 0
      %589 = vmatpush.bf16.msra.mxu0 0
      %590 = vmatpush.bf16.msra.mxu0 0
      %591 = vmatpush.bf16.msra.mxu0 0
      %592 = vmatpush.bf16.msra.mxu0 0
      %593 = vmatpush.bf16.msra.mxu0 %v581
      %594 = vmatmul.bf16.gmra.mxu0 %v574
      %v595 = vpop.f32.mrf.mxu0
      %v596 = vadd.f32 0.0, %v595
      %v597 = vpop.f32.mrf.mxu0
      %v598 = vadd.f32 0.0, %v597
      %599 = vdwg.mxu0
      %600 = vmatpush.bf16.msra.mxu0 0
      %601 = vmatpush.bf16.msra.mxu0 0
      %602 = vmatpush.bf16.msra.mxu0 0
      %603 = vmatpush.bf16.msra.mxu0 0
      %604 = vmatpush.bf16.msra.mxu0 0
      %605 = vmatpush.bf16.msra.mxu0 0
      %606 = vmatpush.bf16.msra.mxu0 0
      %607 = vmatpush.bf16.msra.mxu0 %v584
      %608 = vmatmul.bf16.gmra.mxu0 %v574
      %v609 = vpop.f32.mrf.mxu0
      %v610 = vadd.f32 0.0, %v609
      %v611 = vpop.f32.mrf.mxu0
      %v612 = vadd.f32 0.0, %v611
      %613 = vdwg.mxu0
      %v616 = vunpack.c.l.b16 %v482
      %v617 = vunpack.c.l.b16 %v483
      %v618 = vpack.c.b16 %v617, %v616
      %619 = vst [vmem:[#allocation1] ss:$4 sm:$0xff] %v554
      %v620 = vld.sshfl [vmem:[#allocation1] sm:$0xff pattern:$0x73625140]
      %v621 = vld.sshfl [vmem:[#allocation1 + $0x8] sm:$0xff pattern:$0x73625140]
      %v623 = vsel %vm572, %v618, 0
      %v625 = vand.u32 %v620, %v579
      %v627 = vand.u32 %v621, %v579
      %629 = vmatpush.bf16.msra.mxu0 0
      %630 = vmatpush.bf16.msra.mxu0 0
      %631 = vmatpush.bf16.msra.mxu0 0
      %632 = vmatpush.bf16.msra.mxu0 0
      %633 = vmatpush.bf16.msra.mxu0 0
      %634 = vmatpush.bf16.msra.mxu0 0
      %635 = vmatpush.bf16.msra.mxu0 0
      %636 = vmatpush.bf16.msra.mxu0 %v625
      %637 = vmatmul.bf16.gmra.mxu0 %v623
      %v638 = vpop.f32.mrf.mxu0
      %v639 = vadd.f32 %v596, %v638
      %v640 = vpop.f32.mrf.mxu0
      %v641 = vadd.f32 %v598, %v640
      %642 = vdwg.mxu0
      %643 = vmatpush.bf16.msra.mxu0 0
      %644 = vmatpush.bf16.msra.mxu0 0
      %645 = vmatpush.bf16.msra.mxu0 0
      %646 = vmatpush.bf16.msra.mxu0 0
      %647 = vmatpush.bf16.msra.mxu0 0
      %648 = vmatpush.bf16.msra.mxu0 0
      %649 = vmatpush.bf16.msra.mxu0 0
      %650 = vmatpush.bf16.msra.mxu0 %v627
      %651 = vmatmul.bf16.gmra.mxu0 %v623
      %v652 = vpop.f32.mrf.mxu0
      %v653 = vadd.f32 %v610, %v652
      %v654 = vpop.f32.mrf.mxu0
      %v655 = vadd.f32 %v612, %v654
      %656 = vdwg.mxu0
      %v657 = vld [vmem:[%s381] sm:$0xf]
      %v660 = vunpack.c.l.b16 %v486
      %v661 = vunpack.c.l.b16 %v487
      %v662 = vpack.c.b16 %v661, %v660
      %664 = vst [vmem:[#allocation1] ss:$4 sm:$0xff] %v657
      %v665 = vld.sshfl [vmem:[#allocation1] sm:$0xff pattern:$0x73625140]
      %v667 = vld.sshfl [vmem:[#allocation1 + $0x8] sm:$0xff pattern:$0x73625140]
      %669 = vrot.lane.b32.xlu0 %v665, 126
      %v670 = vpop.permute.xlu0 %669
      %671 = vrot.lane.b32.xlu0 %v667, 126
      %v672 = vpop.permute.xlu0 %671
      %vm673 = vcmask 1031168
      %v674 = vsel %vm673, %v670, %v672
      %v676 = vsel %vm572, %v662, 0
      %v679 = vand.u32 %v674, %v579
      %v682 = vand.u32 %v672, %v579
      %684 = vmatpush.bf16.msra.mxu0 0
      %685 = vmatpush.bf16.msra.mxu0 0
      %686 = vmatpush.bf16.msra.mxu0 0
      %687 = vmatpush.bf16.msra.mxu0 0
      %688 = vmatpush.bf16.msra.mxu0 0
      %689 = vmatpush.bf16.msra.mxu0 0
      %690 = vmatpush.bf16.msra.mxu0 0
      %691 = vmatpush.bf16.msra.mxu0 %v679
      %692 = vmatmul.bf16.gmra.mxu0 %v676
      %v693 = vpop.f32.mrf.mxu0
      %v694 = vadd.f32 0.0, %v693
      %v695 = vpop.f32.mrf.mxu0
      %v696 = vadd.f32 0.0, %v695
      %697 = vdwg.mxu0
      %698 = vmatpush.bf16.msra.mxu0 0
      %699 = vmatpush.bf16.msra.mxu0 0
      %700 = vmatpush.bf16.msra.mxu0 0
      %701 = vmatpush.bf16.msra.mxu0 0
      %702 = vmatpush.bf16.msra.mxu0 0
      %703 = vmatpush.bf16.msra.mxu0 0
      %704 = vmatpush.bf16.msra.mxu0 0
      %705 = vmatpush.bf16.msra.mxu0 %v682
      %706 = vmatmul.bf16.gmra.mxu0 %v676
      %v707 = vpop.f32.mrf.mxu0
      %v708 = vadd.f32 0.0, %v707
      %v709 = vpop.f32.mrf.mxu0
      %v710 = vadd.f32 0.0, %v709
      %711 = vdwg.mxu0
      %v712 = vadd.f32 %v639, %v694
      %v713 = vadd.f32 %v653, %v708
      %v714 = vadd.f32 %v641, %v696
      %v715 = vadd.f32 %v655, %v710
      %s716 = scalar_lea.vmem %s381, 4
      %v717 = vld [vmem:[%s716] sm:$0xf]
      %v720 = vunpack.c.l.b16 %v488
      %v721 = vunpack.c.l.b16 %v489
      %v722 = vpack.c.b16 %v721, %v720
      %724 = vst [vmem:[#allocation1] ss:$4 sm:$0xff] %v717
      %v725 = vld.sshfl [vmem:[#allocation1] sm:$0xff pattern:$0x73625140]
      %v726 = vld.sshfl [vmem:[#allocation1 + $0x8] sm:$0xff pattern:$0x73625140]
      %v728 = vsel %vm572, %v722, 0
      %v730 = vand.u32 %v725, %v579
      %v732 = vand.u32 %v726, %v579
      %734 = vmatpush.bf16.msra.mxu0 0
      %735 = vmatpush.bf16.msra.mxu0 0
      %736 = vmatpush.bf16.msra.mxu0 0
      %737 = vmatpush.bf16.msra.mxu0 0
      %738 = vmatpush.bf16.msra.mxu0 0
      %739 = vmatpush.bf16.msra.mxu0 0
      %740 = vmatpush.bf16.msra.mxu0 0
      %741 = vmatpush.bf16.msra.mxu0 %v730
      %742 = vmatmul.bf16.gmra.mxu0 %v728
      %v743 = vpop.f32.mrf.mxu0
      %v744 = vadd.f32 0.0, %v743
      %v745 = vpop.f32.mrf.mxu0
      %v746 = vadd.f32 0.0, %v745
      %747 = vdwg.mxu0
      %748 = vmatpush.bf16.msra.mxu0 0
      %749 = vmatpush.bf16.msra.mxu0 0
      %750 = vmatpush.bf16.msra.mxu0 0
      %751 = vmatpush.bf16.msra.mxu0 0
      %752 = vmatpush.bf16.msra.mxu0 0
      %753 = vmatpush.bf16.msra.mxu0 0
      %754 = vmatpush.bf16.msra.mxu0 0
      %755 = vmatpush.bf16.msra.mxu0 %v732
      %756 = vmatmul.bf16.gmra.mxu0 %v728
      %v757 = vpop.f32.mrf.mxu0
      %v758 = vadd.f32 0.0, %v757
      %v759 = vpop.f32.mrf.mxu0
      %v760 = vadd.f32 0.0, %v759
      %761 = vdwg.mxu0
      %v762 = vadd.f32 %v712, %v744
      %v763 = vadd.f32 %v713, %v758
      %v764 = vadd.f32 %v714, %v746
      %v765 = vadd.f32 %v715, %v760
      %v766 = vld [vmem:[%s716] sm:$0xf]
      %v769 = vunpack.c.l.b16 %v490
      %v770 = vunpack.c.l.b16 %v491
      %v771 = vpack.c.b16 %v770, %v769
      %773 = vst [vmem:[#allocation1] ss:$4 sm:$0xff] %v766
      %v774 = vld.sshfl [vmem:[#allocation1] sm:$0xff pattern:$0x73625140]
      %v776 = vld.sshfl [vmem:[#allocation1 + $0x8] sm:$0xff pattern:$0x73625140]
      %778 = vrot.lane.b32.xlu0 %v774, 127
      %v779 = vpop.permute.xlu0 %778
      %780 = vrot.lane.b32.xlu0 %v776, 127
      %v781 = vpop.permute.xlu0 %780
      %v782 = vsel %vm570, %v779, %v781
      %v784 = vsel %vm572, %v771, 0
      %v787 = vand.u32 %v782, %v579
      %v790 = vand.u32 %v781, %v579
      %792 = vmatpush.bf16.msra.mxu0 0
      %793 = vmatpush.bf16.msra.mxu0 0
      %794 = vmatpush.bf16.msra.mxu0 0
      %795 = vmatpush.bf16.msra.mxu0 0
      %796 = vmatpush.bf16.msra.mxu0 0
      %797 = vmatpush.bf16.msra.mxu0 0
      %798 = vmatpush.bf16.msra.mxu0 0
      %799 = vmatpush.bf16.msra.mxu0 %v787
      %800 = vmatmul.bf16.gmra.mxu0 %v784
      %v801 = vpop.f32.mrf.mxu0
      %v802 = vadd.f32 0.0, %v801
      %v803 = vpop.f32.mrf.mxu0
      %v804 = vadd.f32 0.0, %v803
      %805 = vdwg.mxu0
      %806 = vmatpush.bf16.msra.mxu0 0
      %807 = vmatpush.bf16.msra.mxu0 0
      %808 = vmatpush.bf16.msra.mxu0 0
      %809 = vmatpush.bf16.msra.mxu0 0
      %810 = vmatpush.bf16.msra.mxu0 0
      %811 = vmatpush.bf16.msra.mxu0 0
      %812 = vmatpush.bf16.msra.mxu0 0
      %813 = vmatpush.bf16.msra.mxu0 %v790
      %814 = vmatmul.bf16.gmra.mxu0 %v784
      %v815 = vpop.f32.mrf.mxu0
      %v816 = vadd.f32 0.0, %v815
      %v817 = vpop.f32.mrf.mxu0
      %v818 = vadd.f32 0.0, %v817
      %819 = vdwg.mxu0
      %v820 = vadd.f32 %v762, %v802
      %v821 = vadd.f32 %v763, %v816
      %v822 = vadd.f32 %v764, %v804
      %v823 = vadd.f32 %v765, %v818
      %v824 = vld [vmem:[%s716] sm:$0xf]
      %v827 = vunpack.c.l.b16 %v492
      %v828 = vunpack.c.l.b16 %v493
      %v829 = vpack.c.b16 %v828, %v827
      %831 = vst [vmem:[#allocation1] ss:$4 sm:$0xff] %v824
      %v832 = vld.sshfl [vmem:[#allocation1] sm:$0xff pattern:$0x73625140]
      %v834 = vld.sshfl [vmem:[#allocation1 + $0x8] sm:$0xff pattern:$0x73625140]
      %836 = vrot.lane.b32.xlu0 %v832, 126
      %v837 = vpop.permute.xlu0 %836
      %838 = vrot.lane.b32.xlu0 %v834, 126
      %v839 = vpop.permute.xlu0 %838
      %v840 = vsel %vm673, %v837, %v839
      %v842 = vsel %vm572, %v829, 0
      %v845 = vand.u32 %v840, %v579
      %v848 = vand.u32 %v839, %v579
      %850 = vmatpush.bf16.msra.mxu0 0
      %851 = vmatpush.bf16.msra.mxu0 0
      %852 = vmatpush.bf16.msra.mxu0 0
      %853 = vmatpush.bf16.msra.mxu0 0
      %854 = vmatpush.bf16.msra.mxu0 0
      %855 = vmatpush.bf16.msra.mxu0 0
      %856 = vmatpush.bf16.msra.mxu0 0
      %857 = vmatpush.bf16.msra.mxu0 %v845
      %858 = vmatmul.bf16.gmra.mxu0 %v842
      %v859 = vpop.f32.mrf.mxu0
      %v860 = vadd.f32 0.0, %v859
      %v861 = vpop.f32.mrf.mxu0
      %v862 = vadd.f32 0.0, %v861
      %863 = vdwg.mxu0
      %864 = vmatpush.bf16.msra.mxu0 0
      %865 = vmatpush.bf16.msra.mxu0 0
      %866 = vmatpush.bf16.msra.mxu0 0
      %867 = vmatpush.bf16.msra.mxu0 0
      %868 = vmatpush.bf16.msra.mxu0 0
      %869 = vmatpush.bf16.msra.mxu0 0
      %870 = vmatpush.bf16.msra.mxu0 0
      %871 = vmatpush.bf16.msra.mxu0 %v848
      %872 = vmatmul.bf16.gmra.mxu0 %v842
      %v873 = vpop.f32.mrf.mxu0
      %v874 = vadd.f32 0.0, %v873
      %v875 = vpop.f32.mrf.mxu0
      %v876 = vadd.f32 0.0, %v875
      %877 = vdwg.mxu0
      %v878 = vadd.f32 %v820, %v860
      %v879 = vadd.f32 %v821, %v874
      %v880 = vadd.f32 %v822, %v862
      %v881 = vadd.f32 %v823, %v876
      %v882 = vld [vmem:[%s381] sm:$0xf]
      %v885 = vunpack.c.l.b16 %v494
      %v886 = vunpack.c.l.b16 %v495
      %v887 = vpack.c.b16 %v886, %v885
      %889 = vst [vmem:[#allocation1] ss:$4 sm:$0xff] %v882
      %v890 = vld.sshfl [vmem:[#allocation1] sm:$0xff pattern:$0x73625140]
      %v892 = vld.sshfl [vmem:[#allocation1 + $0x8] sm:$0xff pattern:$0x73625140]
      %894 = vrot.lane.b32.xlu0 %v890, 110
      %v895 = vpop.permute.xlu0 %894
      %896 = vrot.lane.b32.xlu0 %v892, 110
      %v897 = vpop.permute.xlu0 %896
      %vm898 = vcmask 900096
      %v899 = vsel %vm898, %v895, %v897
      %v901 = vsel %vm572, %v887, 0
      %v904 = vand.u32 %v899, %v579
      %v907 = vand.u32 %v897, %v579
      %909 = vmatpush.bf16.msra.mxu0 0
      %910 = vmatpush.bf16.msra.mxu0 0
      %911 = vmatpush.bf16.msra.mxu0 0
      %912 = vmatpush.bf16.msra.mxu0 0
      %913 = vmatpush.bf16.msra.mxu0 0
      %914 = vmatpush.bf16.msra.mxu0 0
      %915 = vmatpush.bf16.msra.mxu0 0
      %916 = vmatpush.bf16.msra.mxu0 %v904
      %917 = vmatmul.bf16.gmra.mxu0 %v901
      %v918 = vpop.f32.mrf.mxu0
      %v919 = vadd.f32 0.0, %v918
      %v920 = vpop.f32.mrf.mxu0
      %v921 = vadd.f32 0.0, %v920
      %922 = vdwg.mxu0
      %923 = vmatpush.bf16.msra.mxu0 0
      %924 = vmatpush.bf16.msra.mxu0 0
      %925 = vmatpush.bf16.msra.mxu0 0
      %926 = vmatpush.bf16.msra.mxu0 0
      %927 = vmatpush.bf16.msra.mxu0 0
      %928 = vmatpush.bf16.msra.mxu0 0
      %929 = vmatpush.bf16.msra.mxu0 0
      %930 = vmatpush.bf16.msra.mxu0 %v907
      %931 = vmatmul.bf16.gmra.mxu0 %v901
      %v932 = vpop.f32.mrf.mxu0
      %v933 = vadd.f32 0.0, %v932
      %v934 = vpop.f32.mrf.mxu0
      %v935 = vadd.f32 0.0, %v934
      %936 = vdwg.mxu0
      %v937 = vadd.f32 %v878, %v919
      %v938 = vadd.f32 %v879, %v933
      %v939 = vadd.f32 %v880, %v921
      %v940 = vadd.f32 %v881, %v935
      %v941 = vld [vmem:[%s381] sm:$0xf]
      %v944 = vunpack.c.l.b16 %v496
      %v945 = vunpack.c.l.b16 %v497
      %v946 = vpack.c.b16 %v945, %v944
      %948 = vst [vmem:[#allocation1] ss:$4 sm:$0xff] %v941
      %v949 = vld.sshfl [vmem:[#allocation1] sm:$0xff pattern:$0x73625140]
      %v951 = vld.sshfl [vmem:[#allocation1 + $0x8] sm:$0xff pattern:$0x73625140]
      %953 = vrot.lane.b32.xlu0 %v949, 109
      %v954 = vpop.permute.xlu0 %953
      %955 = vrot.lane.b32.xlu0 %v951, 109
      %v956 = vpop.permute.xlu0 %955
      %vm957 = vcmask 891904
      %v958 = vsel %vm957, %v954, %v956
      %v960 = vsel %vm572, %v946, 0
      %v963 = vand.u32 %v958, %v579
      %v966 = vand.u32 %v956, %v579
      %968 = vmatpush.bf16.msra.mxu0 0
      %969 = vmatpush.bf16.msra.mxu0 0
      %970 = vmatpush.bf16.msra.mxu0 0
      %971 = vmatpush.bf16.msra.mxu0 0
      %972 = vmatpush.bf16.msra.mxu0 0
      %973 = vmatpush.bf16.msra.mxu0 0
      %974 = vmatpush.bf16.msra.mxu0 0
      %975 = vmatpush.bf16.msra.mxu0 %v963
      %976 = vmatmul.bf16.gmra.mxu0 %v960
      %v977 = vpop.f32.mrf.mxu0
      %v978 = vadd.f32 0.0, %v977
      %v979 = vpop.f32.mrf.mxu0
      %v980 = vadd.f32 0.0, %v979
      %981 = vdwg.mxu0
      %982 = vmatpush.bf16.msra.mxu0 0
      %983 = vmatpush.bf16.msra.mxu0 0
      %984 = vmatpush.bf16.msra.mxu0 0
      %985 = vmatpush.bf16.msra.mxu0 0
      %986 = vmatpush.bf16.msra.mxu0 0
      %987 = vmatpush.bf16.msra.mxu0 0
      %988 = vmatpush.bf16.msra.mxu0 0
      %989 = vmatpush.bf16.msra.mxu0 %v966
      %990 = vmatmul.bf16.gmra.mxu0 %v960
      %v991 = vpop.f32.mrf.mxu0
      %v992 = vadd.f32 0.0, %v991
      %v993 = vpop.f32.mrf.mxu0
      %v994 = vadd.f32 0.0, %v993
      %995 = vdwg.mxu0
      %v996 = vadd.f32 %v937, %v978
      %v997 = vadd.f32 %v938, %v992
      %v998 = vadd.f32 %v939, %v980
      %v999 = vadd.f32 %v940, %v994
      %v1000 = vld [vmem:[%s381] sm:$0xf]
      %v1003 = vunpack.c.l.b16 %v498
      %v1004 = vunpack.c.l.b16 %v499
      %v1005 = vpack.c.b16 %v1004, %v1003
      %1007 = vst [vmem:[#allocation1] ss:$4 sm:$0xff] %v1000
      %v1008 = vld.sshfl [vmem:[#allocation1] sm:$0xff pattern:$0x73625140]
      %v1010 = vld.sshfl [vmem:[#allocation1 + $0x8] sm:$0xff pattern:$0x73625140]
      %1012 = vrot.lane.b32.xlu0 %v1008, 108
      %v1013 = vpop.permute.xlu0 %1012
      %1014 = vrot.lane.b32.xlu0 %v1010, 108
      %v1015 = vpop.permute.xlu0 %1014
      %vm1016 = vcmask 883712
      %v1017 = vsel %vm1016, %v1013, %v1015
      %v1019 = vsel %vm572, %v1005, 0
      %v1022 = vand.u32 %v1017, %v579
      %v1025 = vand.u32 %v1015, %v579
      %1027 = vmatpush.bf16.msra.mxu0 0
      %1028 = vmatpush.bf16.msra.mxu0 0
      %1029 = vmatpush.bf16.msra.mxu0 0
      %1030 = vmatpush.bf16.msra.mxu0 0
      %1031 = vmatpush.bf16.msra.mxu0 0
      %1032 = vmatpush.bf16.msra.mxu0 0
      %1033 = vmatpush.bf16.msra.mxu0 0
      %1034 = vmatpush.bf16.msra.mxu0 %v1022
      %1035 = vmatmul.bf16.gmra.mxu0 %v1019
      %v1036 = vpop.f32.mrf.mxu0
      %v1037 = vadd.f32 0.0, %v1036
      %v1038 = vpop.f32.mrf.mxu0
      %v1039 = vadd.f32 0.0, %v1038
      %1040 = vdwg.mxu0
      %1041 = vmatpush.bf16.msra.mxu0 0
      %1042 = vmatpush.bf16.msra.mxu0 0
      %1043 = vmatpush.bf16.msra.mxu0 0
      %1044 = vmatpush.bf16.msra.mxu0 0
      %1045 = vmatpush.bf16.msra.mxu0 0
      %1046 = vmatpush.bf16.msra.mxu0 0
      %1047 = vmatpush.bf16.msra.mxu0 0
      %1048 = vmatpush.bf16.msra.mxu0 %v1025
      %1049 = vmatmul.bf16.gmra.mxu0 %v1019
      %v1050 = vpop.f32.mrf.mxu0
      %v1051 = vadd.f32 0.0, %v1050
      %v1052 = vpop.f32.mrf.mxu0
      %v1053 = vadd.f32 0.0, %v1052
      %1054 = vdwg.mxu0
      %v1055 = vadd.f32 %v996, %v1037
      %v1056 = vadd.f32 %v997, %v1051
      %v1057 = vadd.f32 %v998, %v1039
      %v1058 = vadd.f32 %v999, %v1053
      %1060 = vset.pattern.permute.xlu0 0
      %1061 = vperm.xlu0 %1060, %v500
      %v1062 = vpop.permute.xlu0 %1061
      %1065 = vset.pattern.permute.xlu0 0
      %1066 = vperm.xlu0 %1065, %v501
      %v1067 = vpop.permute.xlu0 %1066
      %v1069 = vadd.f32 %v1055, %v1062
      %v1070 = vadd.f32 %v1056, %v1062
      %v1071 = vadd.f32 %v1057, %v1067
      %v1072 = vadd.f32 %v1058, %v1067
      %v1073 = vmax.f32 %v1069, 0.0
      %v1074 = vmax.f32 %v1070, 0.0
      %v1075 = vmax.f32 %v1071, 0.0
      %v1076 = vmax.f32 %v1072, 0.0
      %v1077 = vsel %vm459, 1, 0
      %v1078 = vsel %vm460, 1, 0
      %vm1079 = vcmp.eq.s32.totalorder %v1077, 1
      %vm1080 = vcmp.eq.s32.totalorder %v1078, 1
      %v1081 = vsel %vm1079, %v1073, 0.0
      %v1082 = vsel %vm1080, %v1074, 0.0
      %v1083 = vsel %vm1079, %v1075, 0.0
      %v1084 = vsel %vm1080, %v1076, 0.0
      %v1085 = vpack.c.bf16 %v1082, %v1081
      %v1086 = vpack.c.bf16 %v1084, %v1083
      %1089 = vrot.lane.b32.xlu0 %v1085, 1
      %v1090 = vpop.permute.xlu0 %1089
      %1091 = vrot.lane.b32.xlu0 %v1086, 1
      %v1092 = vpop.permute.xlu0 %1091
      %v1093 = vrot.slane %v1090, 4
      %v1094 = vrot.slane %v1092, 4
      %vm1095 = vcmask 7168
      %v1096 = vsel %vm1095, %v1093, %v1090
      %v1097 = vsel %vm1095, %v1094, %v1092
      %vm1100 = vcmask 1043464
      %vm1101 = vcmask 138244
      %vm1102 = vmor %vm1101, %vm1100
      %1103 = vst.msk [vmem:[%s464] sm:$0xff] %vm1102, %v1096
      %1104 = vst.msk [vmem:[%s464 + $0x8] sm:$0xff] %vm1102, %v1097
      %v1105 = vld [vmem:[%s716] sm:$0xf]
      %1107 = vst [vmem:[#allocation1] ss:$4 sm:$0xff] %v1105
      %v1108 = vld.sshfl [vmem:[#allocation1] sm:$0xff pattern:$0x73625140]
      %v1110 = vld.sshfl [vmem:[#allocation1 + $0x8] sm:$0xff pattern:$0x73625140]
      %1112 = vrot.lane.b32.xlu0 %v1108, 127
      %v1113 = vpop.permute.xlu0 %1112
      %1114 = vrot.lane.b32.xlu0 %v1110, 127
      %v1115 = vpop.permute.xlu0 %1114
      %v1116 = vsel %vm570, %v1113, %v1115
      %v1118 = vand.u32 %v1116, %v579
      %v1121 = vand.u32 %v1115, %v579
      %1123 = vmatpush.bf16.msra.mxu0 0
      %1124 = vmatpush.bf16.msra.mxu0 0
      %1125 = vmatpush.bf16.msra.mxu0 0
      %1126 = vmatpush.bf16.msra.mxu0 0
      %1127 = vmatpush.bf16.msra.mxu0 0
      %1128 = vmatpush.bf16.msra.mxu0 0
      %1129 = vmatpush.bf16.msra.mxu0 0
      %1130 = vmatpush.bf16.msra.mxu0 %v1118
      %1131 = vmatmul.bf16.gmra.mxu0 %v574
      %v1132 = vpop.f32.mrf.mxu0
      %v1133 = vadd.f32 0.0, %v1132
      %v1134 = vpop.f32.mrf.mxu0
      %v1135 = vadd.f32 0.0, %v1134
      %1136 = vdwg.mxu0
      %1137 = vmatpush.bf16.msra.mxu0 0
      %1138 = vmatpush.bf16.msra.mxu0 0
      %1139 = vmatpush.bf16.msra.mxu0 0
      %1140 = vmatpush.bf16.msra.mxu0 0
      %1141 = vmatpush.bf16.msra.mxu0 0
      %1142 = vmatpush.bf16.msra.mxu0 0
      %1143 = vmatpush.bf16.msra.mxu0 0
      %1144 = vmatpush.bf16.msra.mxu0 %v1121
      %1145 = vmatmul.bf16.gmra.mxu0 %v574
      %v1146 = vpop.f32.mrf.mxu0
      %v1147 = vadd.f32 0.0, %v1146
      %v1148 = vpop.f32.mrf.mxu0
      %v1149 = vadd.f32 0.0, %v1148
      %1150 = vdwg.mxu0
      %1151 = vst [vmem:[#allocation1] ss:$4 sm:$0xff] %v1105
      %v1152 = vld.sshfl [vmem:[#allocation1] sm:$0xff pattern:$0x73625140]
      %v1153 = vld.sshfl [vmem:[#allocation1 + $0x8] sm:$0xff pattern:$0x73625140]
      %v1154 = vand.u32 %v1152, %v579
      %v1156 = vand.u32 %v1153, %v579
      %1158 = vmatpush.bf16.msra.mxu0 0
      %1159 = vmatpush.bf16.msra.mxu0 0
      %1160 = vmatpush.bf16.msra.mxu0 0
      %1161 = vmatpush.bf16.msra.mxu0 0
      %1162 = vmatpush.bf16.msra.mxu0 0
      %1163 = vmatpush.bf16.msra.mxu0 0
      %1164 = vmatpush.bf16.msra.mxu0 0
      %1165 = vmatpush.bf16.msra.mxu0 %v1154
      %1166 = vmatmul.bf16.gmra.mxu0 %v623
      %v1167 = vpop.f32.mrf.mxu0
      %v1168 = vadd.f32 %v1133, %v1167
      %v1169 = vpop.f32.mrf.mxu0
      %v1170 = vadd.f32 %v1135, %v1169
      %1171 = vdwg.mxu0
      %1172 = vmatpush.bf16.msra.mxu0 0
      %1173 = vmatpush.bf16.msra.mxu0 0
      %1174 = vmatpush.bf16.msra.mxu0 0
      %1175 = vmatpush.bf16.msra.mxu0 0
      %1176 = vmatpush.bf16.msra.mxu0 0
      %1177 = vmatpush.bf16.msra.mxu0 0
      %1178 = vmatpush.bf16.msra.mxu0 0
      %1179 = vmatpush.bf16.msra.mxu0 %v1156
      %1180 = vmatmul.bf16.gmra.mxu0 %v623
      %v1181 = vpop.f32.mrf.mxu0
      %v1182 = vadd.f32 %v1147, %v1181
      %v1183 = vpop.f32.mrf.mxu0
      %v1184 = vadd.f32 %v1149, %v1183
      %1185 = vdwg.mxu0
      %v1186 = vld [vmem:[%s716] sm:$0xf]
      %1188 = vst [vmem:[#allocation1] ss:$4 sm:$0xff] %v1186
      %v1189 = vld.sshfl [vmem:[#allocation1] sm:$0xff pattern:$0x73625140]
      %v1191 = vld.sshfl [vmem:[#allocation1 + $0x8] sm:$0xff pattern:$0x73625140]
      %1193 = vrot.lane.b32.xlu0 %v1189, 126
      %v1194 = vpop.permute.xlu0 %1193
      %1195 = vrot.lane.b32.xlu0 %v1191, 126
      %v1196 = vpop.permute.xlu0 %1195
      %v1197 = vsel %vm673, %v1194, %v1196
      %v1199 = vand.u32 %v1197, %v579
      %v1202 = vand.u32 %v1196, %v579
      %1204 = vmatpush.bf16.msra.mxu0 0
      %1205 = vmatpush.bf16.msra.mxu0 0
      %1206 = vmatpush.bf16.msra.mxu0 0
      %1207 = vmatpush.bf16.msra.mxu0 0
      %1208 = vmatpush.bf16.msra.mxu0 0
      %1209 = vmatpush.bf16.msra.mxu0 0
      %1210 = vmatpush.bf16.msra.mxu0 0
      %1211 = vmatpush.bf16.msra.mxu0 %v1199
      %1212 = vmatmul.bf16.gmra.mxu0 %v676
      %v1213 = vpop.f32.mrf.mxu0
      %v1214 = vadd.f32 0.0, %v1213
      %v1215 = vpop.f32.mrf.mxu0
      %v1216 = vadd.f32 0.0, %v1215
      %1217 = vdwg.mxu0
      %1218 = vmatpush.bf16.msra.mxu0 0
      %1219 = vmatpush.bf16.msra.mxu0 0
      %1220 = vmatpush.bf16.msra.mxu0 0
      %1221 = vmatpush.bf16.msra.mxu0 0
      %1222 = vmatpush.bf16.msra.mxu0 0
      %1223 = vmatpush.bf16.msra.mxu0 0
      %1224 = vmatpush.bf16.msra.mxu0 0
      %1225 = vmatpush.bf16.msra.mxu0 %v1202
      %1226 = vmatmul.bf16.gmra.mxu0 %v676
      %v1227 = vpop.f32.mrf.mxu0
      %v1228 = vadd.f32 0.0, %v1227
      %v1229 = vpop.f32.mrf.mxu0
      %v1230 = vadd.f32 0.0, %v1229
      %1231 = vdwg.mxu0
      %v1232 = vadd.f32 %v1168, %v1214
      %v1233 = vadd.f32 %v1182, %v1228
      %v1234 = vadd.f32 %v1170, %v1216
      %v1235 = vadd.f32 %v1184, %v1230
      %v1236 = vld [vmem:[%s381] sm:$0xf]
      %1238 = vst [vmem:[#allocation1] ss:$4 sm:$0xff] %v1236
      %v1239 = vld.sshfl [vmem:[#allocation1] sm:$0xff pattern:$0x73625140]
      %v1241 = vld.sshfl [vmem:[#allocation1 + $0x8] sm:$0xff pattern:$0x73625140]
      %1243 = vrot.lane.b32.xlu0 %v1239, 110
      %v1244 = vpop.permute.xlu0 %1243
      %1245 = vrot.lane.b32.xlu0 %v1241, 110
      %v1246 = vpop.permute.xlu0 %1245
      %v1247 = vsel %vm898, %v1244, %v1246
      %v1249 = vand.u32 %v1247, %v579
      %v1252 = vand.u32 %v1246, %v579
      %1254 = vmatpush.bf16.msra.mxu0 0
      %1255 = vmatpush.bf16.msra.mxu0 0
      %1256 = vmatpush.bf16.msra.mxu0 0
      %1257 = vmatpush.bf16.msra.mxu0 0
      %1258 = vmatpush.bf16.msra.mxu0 0
      %1259 = vmatpush.bf16.msra.mxu0 0
      %1260 = vmatpush.bf16.msra.mxu0 0
      %1261 = vmatpush.bf16.msra.mxu0 %v1249
      %1262 = vmatmul.bf16.gmra.mxu0 %v728
      %v1263 = vpop.f32.mrf.mxu0
      %v1264 = vadd.f32 0.0, %v1263
      %v1265 = vpop.f32.mrf.mxu0
      %v1266 = vadd.f32 0.0, %v1265
      %1267 = vdwg.mxu0
      %1268 = vmatpush.bf16.msra.mxu0 0
      %1269 = vmatpush.bf16.msra.mxu0 0
      %1270 = vmatpush.bf16.msra.mxu0 0
      %1271 = vmatpush.bf16.msra.mxu0 0
      %1272 = vmatpush.bf16.msra.mxu0 0
      %1273 = vmatpush.bf16.msra.mxu0 0
      %1274 = vmatpush.bf16.msra.mxu0 0
      %1275 = vmatpush.bf16.msra.mxu0 %v1252
      %1276 = vmatmul.bf16.gmra.mxu0 %v728
      %v1277 = vpop.f32.mrf.mxu0
      %v1278 = vadd.f32 0.0, %v1277
      %v1279 = vpop.f32.mrf.mxu0
      %v1280 = vadd.f32 0.0, %v1279
      %1281 = vdwg.mxu0
      %v1282 = vadd.f32 %v1232, %v1264
      %v1283 = vadd.f32 %v1233, %v1278
      %v1284 = vadd.f32 %v1234, %v1266
      %v1285 = vadd.f32 %v1235, %v1280
      %v1286 = vld [vmem:[%s381] sm:$0xf]
      %1288 = vst [vmem:[#allocation1] ss:$4 sm:$0xff] %v1286
      %v1289 = vld.sshfl [vmem:[#allocation1] sm:$0xff pattern:$0x73625140]
      %v1291 = vld.sshfl [vmem:[#allocation1 + $0x8] sm:$0xff pattern:$0x73625140]
      %1293 = vrot.lane.b32.xlu0 %v1289, 109
      %v1294 = vpop.permute.xlu0 %1293
      %1295 = vrot.lane.b32.xlu0 %v1291, 109
      %v1296 = vpop.permute.xlu0 %1295
      %v1297 = vsel %vm957, %v1294, %v1296
      %v1299 = vand.u32 %v1297, %v579
      %v1302 = vand.u32 %v1296, %v579
      %1304 = vmatpush.bf16.msra.mxu0 0
      %1305 = vmatpush.bf16.msra.mxu0 0
      %1306 = vmatpush.bf16.msra.mxu0 0
      %1307 = vmatpush.bf16.msra.mxu0 0
      %1308 = vmatpush.bf16.msra.mxu0 0
      %1309 = vmatpush.bf16.msra.mxu0 0
      %1310 = vmatpush.bf16.msra.mxu0 0
      %1311 = vmatpush.bf16.msra.mxu0 %v1299
      %1312 = vmatmul.bf16.gmra.mxu0 %v784
      %v1313 = vpop.f32.mrf.mxu0
      %v1314 = vadd.f32 0.0, %v1313
      %v1315 = vpop.f32.mrf.mxu0
      %v1316 = vadd.f32 0.0, %v1315
      %1317 = vdwg.mxu0
      %1318 = vmatpush.bf16.msra.mxu0 0
      %1319 = vmatpush.bf16.msra.mxu0 0
      %1320 = vmatpush.bf16.msra.mxu0 0
      %1321 = vmatpush.bf16.msra.mxu0 0
      %1322 = vmatpush.bf16.msra.mxu0 0
      %1323 = vmatpush.bf16.msra.mxu0 0
      %1324 = vmatpush.bf16.msra.mxu0 0
      %1325 = vmatpush.bf16.msra.mxu0 %v1302
      %1326 = vmatmul.bf16.gmra.mxu0 %v784
      %v1327 = vpop.f32.mrf.mxu0
      %v1328 = vadd.f32 0.0, %v1327
      %v1329 = vpop.f32.mrf.mxu0
      %v1330 = vadd.f32 0.0, %v1329
      %1331 = vdwg.mxu0
      %v1332 = vadd.f32 %v1282, %v1314
      %v1333 = vadd.f32 %v1283, %v1328
      %v1334 = vadd.f32 %v1284, %v1316
      %v1335 = vadd.f32 %v1285, %v1330
      %v1336 = vld [vmem:[%s381] sm:$0xf]
      %1338 = vst [vmem:[#allocation1] ss:$4 sm:$0xff] %v1336
      %v1339 = vld.sshfl [vmem:[#allocation1] sm:$0xff pattern:$0x73625140]
      %v1341 = vld.sshfl [vmem:[#allocation1 + $0x8] sm:$0xff pattern:$0x73625140]
      %1343 = vrot.lane.b32.xlu0 %v1339, 108
      %v1344 = vpop.permute.xlu0 %1343
      %1345 = vrot.lane.b32.xlu0 %v1341, 108
      %v1346 = vpop.permute.xlu0 %1345
      %v1347 = vsel %vm1016, %v1344, %v1346
      %v1349 = vand.u32 %v1347, %v579
      %v1352 = vand.u32 %v1346, %v579
      %1354 = vmatpush.bf16.msra.mxu0 0
      %1355 = vmatpush.bf16.msra.mxu0 0
      %1356 = vmatpush.bf16.msra.mxu0 0
      %1357 = vmatpush.bf16.msra.mxu0 0
      %1358 = vmatpush.bf16.msra.mxu0 0
      %1359 = vmatpush.bf16.msra.mxu0 0
      %1360 = vmatpush.bf16.msra.mxu0 0
      %1361 = vmatpush.bf16.msra.mxu0 %v1349
      %1362 = vmatmul.bf16.gmra.mxu0 %v842
      %v1363 = vpop.f32.mrf.mxu0
      %v1364 = vadd.f32 0.0, %v1363
      %v1365 = vpop.f32.mrf.mxu0
      %v1366 = vadd.f32 0.0, %v1365
      %1367 = vdwg.mxu0
      %1368 = vmatpush.bf16.msra.mxu0 0
      %1369 = vmatpush.bf16.msra.mxu0 0
      %1370 = vmatpush.bf16.msra.mxu0 0
      %1371 = vmatpush.bf16.msra.mxu0 0
      %1372 = vmatpush.bf16.msra.mxu0 0
      %1373 = vmatpush.bf16.msra.mxu0 0
      %1374 = vmatpush.bf16.msra.mxu0 0
      %1375 = vmatpush.bf16.msra.mxu0 %v1352
      %1376 = vmatmul.bf16.gmra.mxu0 %v842
      %v1377 = vpop.f32.mrf.mxu0
      %v1378 = vadd.f32 0.0, %v1377
      %v1379 = vpop.f32.mrf.mxu0
      %v1380 = vadd.f32 0.0, %v1379
      %1381 = vdwg.mxu0
      %v1382 = vadd.f32 %v1332, %v1364
      %v1383 = vadd.f32 %v1333, %v1378
      %v1384 = vadd.f32 %v1334, %v1366
      %v1385 = vadd.f32 %v1335, %v1380
      %v1386 = vld [vmem:[%s716] sm:$0xf]
      %1388 = vst [vmem:[#allocation1] ss:$4 sm:$0xff] %v1386
      %v1389 = vld.sshfl [vmem:[#allocation1] sm:$0xff pattern:$0x73625140]
      %v1391 = vld.sshfl [vmem:[#allocation1 + $0x8] sm:$0xff pattern:$0x73625140]
      %1393 = vrot.lane.b32.xlu0 %v1389, 110
      %v1394 = vpop.permute.xlu0 %1393
      %1395 = vrot.lane.b32.xlu0 %v1391, 110
      %v1396 = vpop.permute.xlu0 %1395
      %v1397 = vsel %vm898, %v1394, %v1396
      %v1399 = vand.u32 %v1397, %v579
      %v1402 = vand.u32 %v1396, %v579
      %1404 = vmatpush.bf16.msra.mxu0 0
      %1405 = vmatpush.bf16.msra.mxu0 0
      %1406 = vmatpush.bf16.msra.mxu0 0
      %1407 = vmatpush.bf16.msra.mxu0 0
      %1408 = vmatpush.bf16.msra.mxu0 0
      %1409 = vmatpush.bf16.msra.mxu0 0
      %1410 = vmatpush.bf16.msra.mxu0 0
      %1411 = vmatpush.bf16.msra.mxu0 %v1399
      %1412 = vmatmul.bf16.gmra.mxu0 %v901
      %v1413 = vpop.f32.mrf.mxu0
      %v1414 = vadd.f32 0.0, %v1413
      %v1415 = vpop.f32.mrf.mxu0
      %v1416 = vadd.f32 0.0, %v1415
      %1417 = vdwg.mxu0
      %1418 = vmatpush.bf16.msra.mxu0 0
      %1419 = vmatpush.bf16.msra.mxu0 0
      %1420 = vmatpush.bf16.msra.mxu0 0
      %1421 = vmatpush.bf16.msra.mxu0 0
      %1422 = vmatpush.bf16.msra.mxu0 0
      %1423 = vmatpush.bf16.msra.mxu0 0
      %1424 = vmatpush.bf16.msra.mxu0 0
      %1425 = vmatpush.bf16.msra.mxu0 %v1402
      %1426 = vmatmul.bf16.gmra.mxu0 %v901
      %v1427 = vpop.f32.mrf.mxu0
      %v1428 = vadd.f32 0.0, %v1427
      %v1429 = vpop.f32.mrf.mxu0
      %v1430 = vadd.f32 0.0, %v1429
      %1431 = vdwg.mxu0
      %v1432 = vadd.f32 %v1382, %v1414
      %v1433 = vadd.f32 %v1383, %v1428
      %v1434 = vadd.f32 %v1384, %v1416
      %v1435 = vadd.f32 %v1385, %v1430
      %v1436 = vld [vmem:[%s716] sm:$0xf]
      %1438 = vst [vmem:[#allocation1] ss:$4 sm:$0xff] %v1436
      %v1439 = vld.sshfl [vmem:[#allocation1] sm:$0xff pattern:$0x73625140]
      %v1441 = vld.sshfl [vmem:[#allocation1 + $0x8] sm:$0xff pattern:$0x73625140]
      %1443 = vrot.lane.b32.xlu0 %v1439, 109
      %v1444 = vpop.permute.xlu0 %1443
      %1445 = vrot.lane.b32.xlu0 %v1441, 109
      %v1446 = vpop.permute.xlu0 %1445
      %v1447 = vsel %vm957, %v1444, %v1446
      %v1449 = vand.u32 %v1447, %v579
      %v1452 = vand.u32 %v1446, %v579
      %1454 = vmatpush.bf16.msra.mxu0 0
      %1455 = vmatpush.bf16.msra.mxu0 0
      %1456 = vmatpush.bf16.msra.mxu0 0
      %1457 = vmatpush.bf16.msra.mxu0 0
      %1458 = vmatpush.bf16.msra.mxu0 0
      %1459 = vmatpush.bf16.msra.mxu0 0
      %1460 = vmatpush.bf16.msra.mxu0 0
      %1461 = vmatpush.bf16.msra.mxu0 %v1449
      %1462 = vmatmul.bf16.gmra.mxu0 %v960
      %v1463 = vpop.f32.mrf.mxu0
      %v1464 = vadd.f32 0.0, %v1463
      %v1465 = vpop.f32.mrf.mxu0
      %v1466 = vadd.f32 0.0, %v1465
      %1467 = vdwg.mxu0
      %1468 = vmatpush.bf16.msra.mxu0 0
      %1469 = vmatpush.bf16.msra.mxu0 0
      %1470 = vmatpush.bf16.msra.mxu0 0
      %1471 = vmatpush.bf16.msra.mxu0 0
      %1472 = vmatpush.bf16.msra.mxu0 0
      %1473 = vmatpush.bf16.msra.mxu0 0
      %1474 = vmatpush.bf16.msra.mxu0 0
      %1475 = vmatpush.bf16.msra.mxu0 %v1452
      %1476 = vmatmul.bf16.gmra.mxu0 %v960
      %v1477 = vpop.f32.mrf.mxu0
      %v1478 = vadd.f32 0.0, %v1477
      %v1479 = vpop.f32.mrf.mxu0
      %v1480 = vadd.f32 0.0, %v1479
      %1481 = vdwg.mxu0
      %v1482 = vadd.f32 %v1432, %v1464
      %v1483 = vadd.f32 %v1433, %v1478
      %v1484 = vadd.f32 %v1434, %v1466
      %v1485 = vadd.f32 %v1435, %v1480
      %v1486 = vld [vmem:[%s716] sm:$0xf]
      %1488 = vst [vmem:[#allocation1] ss:$4 sm:$0xff] %v1486
      %v1489 = vld.sshfl [vmem:[#allocation1] sm:$0xff pattern:$0x73625140]
      %v1491 = vld.sshfl [vmem:[#allocation1 + $0x8] sm:$0xff pattern:$0x73625140]
      %1493 = vrot.lane.b32.xlu0 %v1489, 108
      %v1494 = vpop.permute.xlu0 %1493
      %1495 = vrot.lane.b32.xlu0 %v1491, 108
      %v1496 = vpop.permute.xlu0 %1495
      %v1497 = vsel %vm1016, %v1494, %v1496
      %v1499 = vand.u32 %v1497, %v579
      %v1502 = vand.u32 %v1496, %v579
      %1504 = vmatpush.bf16.msra.mxu0 0
      %1505 = vmatpush.bf16.msra.mxu0 0
      %1506 = vmatpush.bf16.msra.mxu0 0
      %1507 = vmatpush.bf16.msra.mxu0 0
      %1508 = vmatpush.bf16.msra.mxu0 0
      %1509 = vmatpush.bf16.msra.mxu0 0
      %1510 = vmatpush.bf16.msra.mxu0 0
      %1511 = vmatpush.bf16.msra.mxu0 %v1499
      %1512 = vmatmul.bf16.gmra.mxu0 %v1019
      %v1513 = vpop.f32.mrf.mxu0
      %v1514 = vadd.f32 0.0, %v1513
      %v1515 = vpop.f32.mrf.mxu0
      %v1516 = vadd.f32 0.0, %v1515
      %1517 = vdwg.mxu0
      %1518 = vmatpush.bf16.msra.mxu0 0
      %1519 = vmatpush.bf16.msra.mxu0 0
      %1520 = vmatpush.bf16.msra.mxu0 0
      %1521 = vmatpush.bf16.msra.mxu0 0
      %1522 = vmatpush.bf16.msra.mxu0 0
      %1523 = vmatpush.bf16.msra.mxu0 0
      %1524 = vmatpush.bf16.msra.mxu0 0
      %1525 = vmatpush.bf16.msra.mxu0 %v1502
      %1526 = vmatmul.bf16.gmra.mxu0 %v1019
      %v1527 = vpop.f32.mrf.mxu0
      %v1528 = vadd.f32 0.0, %v1527
      %v1529 = vpop.f32.mrf.mxu0
      %v1530 = vadd.f32 0.0, %v1529
      %1531 = vdwg.mxu0
      %v1532 = vadd.f32 %v1482, %v1514
      %v1533 = vadd.f32 %v1483, %v1528
      %v1534 = vadd.f32 %v1484, %v1516
      %v1535 = vadd.f32 %v1485, %v1530
      %v1536 = vadd.f32 %v1532, %v1062
      %v1537 = vadd.f32 %v1533, %v1062
      %v1538 = vadd.f32 %v1534, %v1067
      %v1539 = vadd.f32 %v1535, %v1067
      %v1540 = vmax.f32 %v1536, 0.0
      %v1541 = vmax.f32 %v1537, 0.0
      %v1542 = vmax.f32 %v1538, 0.0
      %v1543 = vmax.f32 %v1539, 0.0
      %v1544 = vsel %vm1079, %v1540, 0.0
      %v1545 = vsel %vm1080, %v1541, 0.0
      %v1546 = vsel %vm1079, %v1542, 0.0
      %v1547 = vsel %vm1080, %v1543, 0.0
      %v1548 = vpack.c.bf16 %v1545, %v1544
      %v1549 = vpack.c.bf16 %v1547, %v1546
      %1552 = vrot.lane.b32.xlu0 %v1548, 19
      %v1553 = vpop.permute.xlu0 %1552
      %1554 = vrot.lane.b32.xlu0 %v1549, 19
      %v1555 = vpop.permute.xlu0 %1554
      %v1556 = vrot.slane %v1553, 4
      %v1557 = vrot.slane %v1555, 4
      %vm1558 = vcmask 154624
      %v1559 = vsel %vm1558, %v1556, %v1553
      %v1560 = vsel %vm1558, %v1557, %v1555
      %vm1563 = vcmask 1043608
      %vm1564 = vcmask 285700
      %vm1565 = vmor %vm1564, %vm1563
      %1566 = vst.msk [vmem:[#allocation2] sm:$0xff] %vm1565, %v1559
      %1567 = vst.msk [vmem:[#allocation2 + $0x8] sm:$0xff] %vm1565, %v1560
      %v1568 = vld [vmem:[#allocation2] sm:$0xff]
      %v1569 = vld [vmem:[#allocation2 + $0x8] sm:$0xff]
      %v1572 = vunpack.c.l.b16 %v504
      %v1573 = vunpack.c.l.b16 %v505
      %v1574 = vpack.c.b16 %v1573, %v1572
      %v1577 = vunpack.c.l.b16 %v1568
      %v1578 = vunpack.c.h.b16 %v1568
      %v1579 = vunpack.c.l.b16 %v1569
      %v1580 = vunpack.c.h.b16 %v1569
      %v1581 = vpack.c.b16 %v1579, %v1577
      %v1582 = vpack.c.b16 %v1580, %v1578
      %1583 = vrot.lane.b32.xlu0 %v1581, 127
      %v1584 = vpop.permute.xlu0 %1583
      %1585 = vrot.lane.b32.xlu0 %v1582, 127
      %v1586 = vpop.permute.xlu0 %1585
      %v1587 = vsel %vm570, %v1584, %v1586
      %vm1590 = vcmask 130048
      %v1592 = vsel %vm1590, %v1574, 0
      %1594 = vmatpush.bf16.msra.mxu0 0
      %1595 = vmatpush.bf16.msra.mxu0 0
      %1596 = vmatpush.bf16.msra.mxu0 0
      %1597 = vmatpush.bf16.msra.mxu0 0
      %1598 = vmatpush.bf16.msra.mxu0 0
      %1599 = vmatpush.bf16.msra.mxu0 0
      %1600 = vmatpush.bf16.msra.mxu0 0
      %1601 = vmatpush.bf16.msra.mxu0 %v1587
      %1602 = vmatmul.bf16.gmra.mxu0 %v1592
      %v1603 = vpop.f32.mrf.mxu0
      %v1604 = vadd.f32 0.0, %v1603
      %v1605 = vpop.f32.mrf.mxu0
      %v1606 = vadd.f32 0.0, %v1605
      %1607 = vdwg.mxu0
      %1608 = vmatpush.bf16.msra.mxu0 0
      %1609 = vmatpush.bf16.msra.mxu0 0
      %1610 = vmatpush.bf16.msra.mxu0 0
      %1611 = vmatpush.bf16.msra.mxu0 0
      %1612 = vmatpush.bf16.msra.mxu0 0
      %1613 = vmatpush.bf16.msra.mxu0 0
      %1614 = vmatpush.bf16.msra.mxu0 0
      %1615 = vmatpush.bf16.msra.mxu0 %v1586
      %1616 = vmatmul.bf16.gmra.mxu0 %v1592
      %v1617 = vpop.f32.mrf.mxu0
      %v1618 = vadd.f32 0.0, %v1617
      %v1619 = vpop.f32.mrf.mxu0
      %v1620 = vadd.f32 0.0, %v1619
      %1621 = vdwg.mxu0
      %v1624 = vunpack.c.l.b16 %v502
      %v1625 = vunpack.c.l.b16 %v503
      %v1626 = vpack.c.b16 %v1625, %v1624
      %v1630 = vsel %vm1590, %v1626, 0
      %1632 = vmatpush.bf16.msra.mxu0 0
      %1633 = vmatpush.bf16.msra.mxu0 0
      %1634 = vmatpush.bf16.msra.mxu0 0
      %1635 = vmatpush.bf16.msra.mxu0 0
      %1636 = vmatpush.bf16.msra.mxu0 0
      %1637 = vmatpush.bf16.msra.mxu0 0
      %1638 = vmatpush.bf16.msra.mxu0 0
      %1639 = vmatpush.bf16.msra.mxu0 %v1581
      %1640 = vmatmul.bf16.gmra.mxu0 %v1630
      %v1641 = vpop.f32.mrf.mxu0
      %v1642 = vadd.f32 %v1604, %v1641
      %v1643 = vpop.f32.mrf.mxu0
      %v1644 = vadd.f32 %v1606, %v1643
      %1645 = vdwg.mxu0
      %1646 = vmatpush.bf16.msra.mxu0 0
      %1647 = vmatpush.bf16.msra.mxu0 0
      %1648 = vmatpush.bf16.msra.mxu0 0
      %1649 = vmatpush.bf16.msra.mxu0 0
      %1650 = vmatpush.bf16.msra.mxu0 0
      %1651 = vmatpush.bf16.msra.mxu0 0
      %1652 = vmatpush.bf16.msra.mxu0 0
      %1653 = vmatpush.bf16.msra.mxu0 %v1582
      %1654 = vmatmul.bf16.gmra.mxu0 %v1630
      %v1655 = vpop.f32.mrf.mxu0
      %v1656 = vadd.f32 %v1618, %v1655
      %v1657 = vpop.f32.mrf.mxu0
      %v1658 = vadd.f32 %v1620, %v1657
      %1659 = vdwg.mxu0
      %v1662 = vunpack.c.l.b16 %v506
      %v1663 = vunpack.c.l.b16 %v507
      %v1664 = vpack.c.b16 %v1663, %v1662
      %1665 = vrot.lane.b32.xlu0 %v1581, 126
      %v1666 = vpop.permute.xlu0 %1665
      %1667 = vrot.lane.b32.xlu0 %v1582, 126
      %v1668 = vpop.permute.xlu0 %1667
      %v1669 = vsel %vm673, %v1666, %v1668
      %v1673 = vsel %vm1590, %v1664, 0
      %1675 = vmatpush.bf16.msra.mxu0 0
      %1676 = vmatpush.bf16.msra.mxu0 0
      %1677 = vmatpush.bf16.msra.mxu0 0
      %1678 = vmatpush.bf16.msra.mxu0 0
      %1679 = vmatpush.bf16.msra.mxu0 0
      %1680 = vmatpush.bf16.msra.mxu0 0
      %1681 = vmatpush.bf16.msra.mxu0 0
      %1682 = vmatpush.bf16.msra.mxu0 %v1669
      %1683 = vmatmul.bf16.gmra.mxu0 %v1673
      %v1684 = vpop.f32.mrf.mxu0
      %v1685 = vadd.f32 0.0, %v1684
      %v1686 = vpop.f32.mrf.mxu0
      %v1687 = vadd.f32 0.0, %v1686
      %1688 = vdwg.mxu0
      %1689 = vmatpush.bf16.msra.mxu0 0
      %1690 = vmatpush.bf16.msra.mxu0 0
      %1691 = vmatpush.bf16.msra.mxu0 0
      %1692 = vmatpush.bf16.msra.mxu0 0
      %1693 = vmatpush.bf16.msra.mxu0 0
      %1694 = vmatpush.bf16.msra.mxu0 0
      %1695 = vmatpush.bf16.msra.mxu0 0
      %1696 = vmatpush.bf16.msra.mxu0 %v1668
      %1697 = vmatmul.bf16.gmra.mxu0 %v1673
      %v1698 = vpop.f32.mrf.mxu0
      %v1699 = vadd.f32 0.0, %v1698
      %v1700 = vpop.f32.mrf.mxu0
      %v1701 = vadd.f32 0.0, %v1700
      %1702 = vdwg.mxu0
      %v1703 = vadd.f32 %v1642, %v1685
      %v1704 = vadd.f32 %v1656, %v1699
      %v1705 = vadd.f32 %v1644, %v1687
      %v1706 = vadd.f32 %v1658, %v1701
      %v1707 = vld [vmem:[%s464] sm:$0xff]
      %v1708 = vld [vmem:[%s464 + $0x8] sm:$0xff]
      %v1711 = vunpack.c.l.b16 %v508
      %v1712 = vunpack.c.l.b16 %v509
      %v1713 = vpack.c.b16 %v1712, %v1711
      %v1716 = vunpack.c.l.b16 %v1707
      %v1717 = vunpack.c.h.b16 %v1707
      %v1718 = vunpack.c.l.b16 %v1708
      %v1719 = vunpack.c.h.b16 %v1708
      %v1720 = vpack.c.b16 %v1718, %v1716
      %v1721 = vpack.c.b16 %v1719, %v1717
      %v1725 = vsel %vm1590, %v1713, 0
      %1727 = vmatpush.bf16.msra.mxu0 0
      %1728 = vmatpush.bf16.msra.mxu0 0
      %1729 = vmatpush.bf16.msra.mxu0 0
      %1730 = vmatpush.bf16.msra.mxu0 0
      %1731 = vmatpush.bf16.msra.mxu0 0
      %1732 = vmatpush.bf16.msra.mxu0 0
      %1733 = vmatpush.bf16.msra.mxu0 0
      %1734 = vmatpush.bf16.msra.mxu0 %v1720
      %1735 = vmatmul.bf16.gmra.mxu0 %v1725
      %v1736 = vpop.f32.mrf.mxu0
      %v1737 = vadd.f32 0.0, %v1736
      %v1738 = vpop.f32.mrf.mxu0
      %v1739 = vadd.f32 0.0, %v1738
      %1740 = vdwg.mxu0
      %1741 = vmatpush.bf16.msra.mxu0 0
      %1742 = vmatpush.bf16.msra.mxu0 0
      %1743 = vmatpush.bf16.msra.mxu0 0
      %1744 = vmatpush.bf16.msra.mxu0 0
      %1745 = vmatpush.bf16.msra.mxu0 0
      %1746 = vmatpush.bf16.msra.mxu0 0
      %1747 = vmatpush.bf16.msra.mxu0 0
      %1748 = vmatpush.bf16.msra.mxu0 %v1721
      %1749 = vmatmul.bf16.gmra.mxu0 %v1725
      %v1750 = vpop.f32.mrf.mxu0
      %v1751 = vadd.f32 0.0, %v1750
      %v1752 = vpop.f32.mrf.mxu0
      %v1753 = vadd.f32 0.0, %v1752
      %1754 = vdwg.mxu0
      %v1755 = vadd.f32 %v1703, %v1737
      %v1756 = vadd.f32 %v1704, %v1751
      %v1757 = vadd.f32 %v1705, %v1739
      %v1758 = vadd.f32 %v1706, %v1753
      %v1761 = vunpack.c.l.b16 %v510
      %v1762 = vunpack.c.l.b16 %v511
      %v1763 = vpack.c.b16 %v1762, %v1761
      %1764 = vrot.lane.b32.xlu0 %v1720, 127
      %v1765 = vpop.permute.xlu0 %1764
      %1766 = vrot.lane.b32.xlu0 %v1721, 127
      %v1767 = vpop.permute.xlu0 %1766
      %v1768 = vsel %vm570, %v1765, %v1767
      %v1772 = vsel %vm1590, %v1763, 0
      %1774 = vmatpush.bf16.msra.mxu0 0
      %1775 = vmatpush.bf16.msra.mxu0 0
      %1776 = vmatpush.bf16.msra.mxu0 0
      %1777 = vmatpush.bf16.msra.mxu0 0
      %1778 = vmatpush.bf16.msra.mxu0 0
      %1779 = vmatpush.bf16.msra.mxu0 0
      %1780 = vmatpush.bf16.msra.mxu0 0
      %1781 = vmatpush.bf16.msra.mxu0 %v1768
      %1782 = vmatmul.bf16.gmra.mxu0 %v1772
      %v1783 = vpop.f32.mrf.mxu0
      %v1784 = vadd.f32 0.0, %v1783
      %v1785 = vpop.f32.mrf.mxu0
      %v1786 = vadd.f32 0.0, %v1785
      %1787 = vdwg.mxu0
      %1788 = vmatpush.bf16.msra.mxu0 0
      %1789 = vmatpush.bf16.msra.mxu0 0
      %1790 = vmatpush.bf16.msra.mxu0 0
      %1791 = vmatpush.bf16.msra.mxu0 0
      %1792 = vmatpush.bf16.msra.mxu0 0
      %1793 = vmatpush.bf16.msra.mxu0 0
      %1794 = vmatpush.bf16.msra.mxu0 0
      %1795 = vmatpush.bf16.msra.mxu0 %v1767
      %1796 = vmatmul.bf16.gmra.mxu0 %v1772
      %v1797 = vpop.f32.mrf.mxu0
      %v1798 = vadd.f32 0.0, %v1797
      %v1799 = vpop.f32.mrf.mxu0
      %v1800 = vadd.f32 0.0, %v1799
      %1801 = vdwg.mxu0
      %v1802 = vadd.f32 %v1755, %v1784
      %v1803 = vadd.f32 %v1756, %v1798
      %v1804 = vadd.f32 %v1757, %v1786
      %v1805 = vadd.f32 %v1758, %v1800
      %v1808 = vunpack.c.l.b16 %v512
      %v1809 = vunpack.c.l.b16 %v513
      %v1810 = vpack.c.b16 %v1809, %v1808
      %1811 = vrot.lane.b32.xlu0 %v1720, 126
      %v1812 = vpop.permute.xlu0 %1811
      %1813 = vrot.lane.b32.xlu0 %v1721, 126
      %v1814 = vpop.permute.xlu0 %1813
      %v1815 = vsel %vm673, %v1812, %v1814
      %v1819 = vsel %vm1590, %v1810, 0
      %1821 = vmatpush.bf16.msra.mxu0 0
      %1822 = vmatpush.bf16.msra.mxu0 0
      %1823 = vmatpush.bf16.msra.mxu0 0
      %1824 = vmatpush.bf16.msra.mxu0 0
      %1825 = vmatpush.bf16.msra.mxu0 0
      %1826 = vmatpush.bf16.msra.mxu0 0
      %1827 = vmatpush.bf16.msra.mxu0 0
      %1828 = vmatpush.bf16.msra.mxu0 %v1815
      %1829 = vmatmul.bf16.gmra.mxu0 %v1819
      %v1830 = vpop.f32.mrf.mxu0
      %v1831 = vadd.f32 0.0, %v1830
      %v1832 = vpop.f32.mrf.mxu0
      %v1833 = vadd.f32 0.0, %v1832
      %1834 = vdwg.mxu0
      %1835 = vmatpush.bf16.msra.mxu0 0
      %1836 = vmatpush.bf16.msra.mxu0 0
      %1837 = vmatpush.bf16.msra.mxu0 0
      %1838 = vmatpush.bf16.msra.mxu0 0
      %1839 = vmatpush.bf16.msra.mxu0 0
      %1840 = vmatpush.bf16.msra.mxu0 0
      %1841 = vmatpush.bf16.msra.mxu0 0
      %1842 = vmatpush.bf16.msra.mxu0 %v1814
      %1843 = vmatmul.bf16.gmra.mxu0 %v1819
      %v1844 = vpop.f32.mrf.mxu0
      %v1845 = vadd.f32 0.0, %v1844
      %v1846 = vpop.f32.mrf.mxu0
      %v1847 = vadd.f32 0.0, %v1846
      %1848 = vdwg.mxu0
      %v1849 = vadd.f32 %v1802, %v1831
      %v1850 = vadd.f32 %v1803, %v1845
      %v1851 = vadd.f32 %v1804, %v1833
      %v1852 = vadd.f32 %v1805, %v1847
      %v1855 = vunpack.c.l.b16 %v514
      %v1856 = vunpack.c.l.b16 %v515
      %v1857 = vpack.c.b16 %v1856, %v1855
      %1858 = vrot.lane.b32.xlu0 %v1581, 110
      %v1859 = vpop.permute.xlu0 %1858
      %1860 = vrot.lane.b32.xlu0 %v1582, 110
      %v1861 = vpop.permute.xlu0 %1860
      %v1862 = vsel %vm898, %v1859, %v1861
      %v1866 = vsel %vm1590, %v1857, 0
      %1868 = vmatpush.bf16.msra.mxu0 0
      %1869 = vmatpush.bf16.msra.mxu0 0
      %1870 = vmatpush.bf16.msra.mxu0 0
      %1871 = vmatpush.bf16.msra.mxu0 0
      %1872 = vmatpush.bf16.msra.mxu0 0
      %1873 = vmatpush.bf16.msra.mxu0 0
      %1874 = vmatpush.bf16.msra.mxu0 0
      %1875 = vmatpush.bf16.msra.mxu0 %v1862
      %1876 = vmatmul.bf16.gmra.mxu0 %v1866
      %v1877 = vpop.f32.mrf.mxu0
      %v1878 = vadd.f32 0.0, %v1877
      %v1879 = vpop.f32.mrf.mxu0
      %v1880 = vadd.f32 0.0, %v1879
      %1881 = vdwg.mxu0
      %1882 = vmatpush.bf16.msra.mxu0 0
      %1883 = vmatpush.bf16.msra.mxu0 0
      %1884 = vmatpush.bf16.msra.mxu0 0
      %1885 = vmatpush.bf16.msra.mxu0 0
      %1886 = vmatpush.bf16.msra.mxu0 0
      %1887 = vmatpush.bf16.msra.mxu0 0
      %1888 = vmatpush.bf16.msra.mxu0 0
      %1889 = vmatpush.bf16.msra.mxu0 %v1861
      %1890 = vmatmul.bf16.gmra.mxu0 %v1866
      %v1891 = vpop.f32.mrf.mxu0
      %v1892 = vadd.f32 0.0, %v1891
      %v1893 = vpop.f32.mrf.mxu0
      %v1894 = vadd.f32 0.0, %v1893
      %1895 = vdwg.mxu0
      %v1896 = vadd.f32 %v1849, %v1878
      %v1897 = vadd.f32 %v1850, %v1892
      %v1898 = vadd.f32 %v1851, %v1880
      %v1899 = vadd.f32 %v1852, %v1894
      %v1902 = vunpack.c.l.b16 %v516
      %v1903 = vunpack.c.l.b16 %v517
      %v1904 = vpack.c.b16 %v1903, %v1902
      %1905 = vrot.lane.b32.xlu0 %v1581, 109
      %v1906 = vpop.permute.xlu0 %1905
      %1907 = vrot.lane.b32.xlu0 %v1582, 109
      %v1908 = vpop.permute.xlu0 %1907
      %v1909 = vsel %vm957, %v1906, %v1908
      %v1913 = vsel %vm1590, %v1904, 0
      %1915 = vmatpush.bf16.msra.mxu0 0
      %1916 = vmatpush.bf16.msra.mxu0 0
      %1917 = vmatpush.bf16.msra.mxu0 0
      %1918 = vmatpush.bf16.msra.mxu0 0
      %1919 = vmatpush.bf16.msra.mxu0 0
      %1920 = vmatpush.bf16.msra.mxu0 0
      %1921 = vmatpush.bf16.msra.mxu0 0
      %1922 = vmatpush.bf16.msra.mxu0 %v1909
      %1923 = vmatmul.bf16.gmra.mxu0 %v1913
      %v1924 = vpop.f32.mrf.mxu0
      %v1925 = vadd.f32 0.0, %v1924
      %v1926 = vpop.f32.mrf.mxu0
      %v1927 = vadd.f32 0.0, %v1926
      %1928 = vdwg.mxu0
      %1929 = vmatpush.bf16.msra.mxu0 0
      %1930 = vmatpush.bf16.msra.mxu0 0
      %1931 = vmatpush.bf16.msra.mxu0 0
      %1932 = vmatpush.bf16.msra.mxu0 0
      %1933 = vmatpush.bf16.msra.mxu0 0
      %1934 = vmatpush.bf16.msra.mxu0 0
      %1935 = vmatpush.bf16.msra.mxu0 0
      %1936 = vmatpush.bf16.msra.mxu0 %v1908
      %1937 = vmatmul.bf16.gmra.mxu0 %v1913
      %v1938 = vpop.f32.mrf.mxu0
      %v1939 = vadd.f32 0.0, %v1938
      %v1940 = vpop.f32.mrf.mxu0
      %v1941 = vadd.f32 0.0, %v1940
      %1942 = vdwg.mxu0
      %v1943 = vadd.f32 %v1896, %v1925
      %v1944 = vadd.f32 %v1897, %v1939
      %v1945 = vadd.f32 %v1898, %v1927
      %v1946 = vadd.f32 %v1899, %v1941
      %v1949 = vunpack.c.l.b16 %v518
      %v1950 = vunpack.c.l.b16 %v519
      %v1951 = vpack.c.b16 %v1950, %v1949
      %1952 = vrot.lane.b32.xlu0 %v1581, 108
      %v1953 = vpop.permute.xlu0 %1952
      %1954 = vrot.lane.b32.xlu0 %v1582, 108
      %v1955 = vpop.permute.xlu0 %1954
      %v1956 = vsel %vm1016, %v1953, %v1955
      %v1960 = vsel %vm1590, %v1951, 0
      %1962 = vmatpush.bf16.msra.mxu0 0
      %1963 = vmatpush.bf16.msra.mxu0 0
      %1964 = vmatpush.bf16.msra.mxu0 0
      %1965 = vmatpush.bf16.msra.mxu0 0
      %1966 = vmatpush.bf16.msra.mxu0 0
      %1967 = vmatpush.bf16.msra.mxu0 0
      %1968 = vmatpush.bf16.msra.mxu0 0
      %1969 = vmatpush.bf16.msra.mxu0 %v1956
      %1970 = vmatmul.bf16.gmra.mxu0 %v1960
      %v1971 = vpop.f32.mrf.mxu0
      %v1972 = vadd.f32 0.0, %v1971
      %v1973 = vpop.f32.mrf.mxu0
      %v1974 = vadd.f32 0.0, %v1973
      %1975 = vdwg.mxu0
      %1976 = vmatpush.bf16.msra.mxu0 0
      %1977 = vmatpush.bf16.msra.mxu0 0
      %1978 = vmatpush.bf16.msra.mxu0 0
      %1979 = vmatpush.bf16.msra.mxu0 0
      %1980 = vmatpush.bf16.msra.mxu0 0
      %1981 = vmatpush.bf16.msra.mxu0 0
      %1982 = vmatpush.bf16.msra.mxu0 0
      %1983 = vmatpush.bf16.msra.mxu0 %v1955
      %1984 = vmatmul.bf16.gmra.mxu0 %v1960
      %v1985 = vpop.f32.mrf.mxu0
      %v1986 = vadd.f32 0.0, %v1985
      %v1987 = vpop.f32.mrf.mxu0
      %v1988 = vadd.f32 0.0, %v1987
      %1989 = vdwg.mxu0
      %v1990 = vadd.f32 %v1943, %v1972
      %v1991 = vadd.f32 %v1944, %v1986
      %v1992 = vadd.f32 %v1945, %v1974
      %v1993 = vadd.f32 %v1946, %v1988
      %1995 = vset.pattern.permute.xlu0 0
      %1996 = vperm.xlu0 %1995, %v520
      %v1997 = vpop.permute.xlu0 %1996
      %2000 = vset.pattern.permute.xlu0 0
      %2001 = vperm.xlu0 %2000, %v521
      %v2002 = vpop.permute.xlu0 %2001
      %v2004 = vadd.f32 %v1990, %v1997
      %v2005 = vadd.f32 %v1991, %v1997
      %v2006 = vadd.f32 %v1992, %v2002
      %v2007 = vadd.f32 %v1993, %v2002
      %v2008 = vmax.f32 %v2004, 0.0
      %v2009 = vmax.f32 %v2005, 0.0
      %v2010 = vmax.f32 %v2006, 0.0
      %v2011 = vmax.f32 %v2007, 0.0
      %v2012 = vpack.c.bf16 %v2010, %v2008
      %v2013 = vpack.c.bf16 %v2011, %v2009
      %2015 = vset.pattern.permute.xlu0 0
      %2016 = vperm.xlu0 %2015, %v523
      %v2017 = vpop.permute.xlu0 %2016
      %v2020 = vsel %vm1590, %v522, 0
      %2022 = vmatpush.bf16.msra.mxu0 0
      %2023 = vmatpush.bf16.msra.mxu0 0
      %2024 = vmatpush.bf16.msra.mxu0 0
      %2025 = vmatpush.bf16.msra.mxu0 0
      %2026 = vmatpush.bf16.msra.mxu0 0
      %2027 = vmatpush.bf16.msra.mxu0 0
      %2028 = vmatpush.bf16.msra.mxu0 0
      %2029 = vmatpush.bf16.msra.mxu0 %v2012
      %2030 = vmatmul.bf16.gmra.mxu0 %v2020
      %v2031 = vpop.f32.mrf.mxu0
      %v2032 = vadd.f32 %v2017, %v2031
      %v2033 = vpop.f32.mrf.mxu0
      %2034 = vdwg.mxu0
      %2035 = vmatpush.bf16.msra.mxu0 0
      %2036 = vmatpush.bf16.msra.mxu0 0
      %2037 = vmatpush.bf16.msra.mxu0 0
      %2038 = vmatpush.bf16.msra.mxu0 0
      %2039 = vmatpush.bf16.msra.mxu0 0
      %2040 = vmatpush.bf16.msra.mxu0 0
      %2041 = vmatpush.bf16.msra.mxu0 0
      %2042 = vmatpush.bf16.msra.mxu0 %v2013
      %2043 = vmatmul.bf16.gmra.mxu0 %v2020
      %v2044 = vpop.f32.mrf.mxu0
      %v2045 = vadd.f32 %v2017, %v2044
      %v2046 = vpop.f32.mrf.mxu0
      %2047 = vdwg.mxu0
      %v2048 = vsel %vm1079, %v2032, 0.0
      %v2049 = vsel %vm1080, %v2045, 0.0
      %v2050 = vpack.c.bf16 %v2049, %v2048
      %2052 = vrot.lane.b32.xlu0 %v2050, 1
      %v2053 = vpop.permute.xlu0 %2052
      %v2054 = vrot.slane %v2053, 4
      %v2055 = vsel %vm1095, %v2054, %v2053
      %2057 = vst.msk [vmem:[%s472] sm:$0xff] %vm1102, %v2055
      %v2058 = vld [vmem:[%s464] sm:$0xff]
      %v2059 = vld [vmem:[%s464 + $0x8] sm:$0xff]
      %v2062 = vunpack.c.l.b16 %v2058
      %v2063 = vunpack.c.h.b16 %v2058
      %v2064 = vunpack.c.l.b16 %v2059
      %v2065 = vunpack.c.h.b16 %v2059
      %v2066 = vpack.c.b16 %v2064, %v2062
      %v2067 = vpack.c.b16 %v2065, %v2063
      %2068 = vrot.lane.b32.xlu0 %v2066, 127
      %v2069 = vpop.permute.xlu0 %2068
      %2070 = vrot.lane.b32.xlu0 %v2067, 127
      %v2071 = vpop.permute.xlu0 %2070
      %v2072 = vsel %vm570, %v2069, %v2071
      %2075 = vmatpush.bf16.msra.mxu0 0
      %2076 = vmatpush.bf16.msra.mxu0 0
      %2077 = vmatpush.bf16.msra.mxu0 0
      %2078 = vmatpush.bf16.msra.mxu0 0
      %2079 = vmatpush.bf16.msra.mxu0 0
      %2080 = vmatpush.bf16.msra.mxu0 0
      %2081 = vmatpush.bf16.msra.mxu0 0
      %2082 = vmatpush.bf16.msra.mxu0 %v2072
      %2083 = vmatmul.bf16.gmra.mxu0 %v1592
      %v2084 = vpop.f32.mrf.mxu0
      %v2085 = vadd.f32 0.0, %v2084
      %v2086 = vpop.f32.mrf.mxu0
      %v2087 = vadd.f32 0.0, %v2086
      %2088 = vdwg.mxu0
      %2089 = vmatpush.bf16.msra.mxu0 0
      %2090 = vmatpush.bf16.msra.mxu0 0
      %2091 = vmatpush.bf16.msra.mxu0 0
      %2092 = vmatpush.bf16.msra.mxu0 0
      %2093 = vmatpush.bf16.msra.mxu0 0
      %2094 = vmatpush.bf16.msra.mxu0 0
      %2095 = vmatpush.bf16.msra.mxu0 0
      %2096 = vmatpush.bf16.msra.mxu0 %v2071
      %2097 = vmatmul.bf16.gmra.mxu0 %v1592
      %v2098 = vpop.f32.mrf.mxu0
      %v2099 = vadd.f32 0.0, %v2098
      %v2100 = vpop.f32.mrf.mxu0
      %v2101 = vadd.f32 0.0, %v2100
      %2102 = vdwg.mxu0
      %2105 = vmatpush.bf16.msra.mxu0 0
      %2106 = vmatpush.bf16.msra.mxu0 0
      %2107 = vmatpush.bf16.msra.mxu0 0
      %2108 = vmatpush.bf16.msra.mxu0 0
      %2109 = vmatpush.bf16.msra.mxu0 0
      %2110 = vmatpush.bf16.msra.mxu0 0
      %2111 = vmatpush.bf16.msra.mxu0 0
      %2112 = vmatpush.bf16.msra.mxu0 %v2066
      %2113 = vmatmul.bf16.gmra.mxu0 %v1630
      %v2114 = vpop.f32.mrf.mxu0
      %v2115 = vadd.f32 %v2085, %v2114
      %v2116 = vpop.f32.mrf.mxu0
      %v2117 = vadd.f32 %v2087, %v2116
      %2118 = vdwg.mxu0
      %2119 = vmatpush.bf16.msra.mxu0 0
      %2120 = vmatpush.bf16.msra.mxu0 0
      %2121 = vmatpush.bf16.msra.mxu0 0
      %2122 = vmatpush.bf16.msra.mxu0 0
      %2123 = vmatpush.bf16.msra.mxu0 0
      %2124 = vmatpush.bf16.msra.mxu0 0
      %2125 = vmatpush.bf16.msra.mxu0 0
      %2126 = vmatpush.bf16.msra.mxu0 %v2067
      %2127 = vmatmul.bf16.gmra.mxu0 %v1630
      %v2128 = vpop.f32.mrf.mxu0
      %v2129 = vadd.f32 %v2099, %v2128
      %v2130 = vpop.f32.mrf.mxu0
      %v2131 = vadd.f32 %v2101, %v2130
      %2132 = vdwg.mxu0
      %2133 = vrot.lane.b32.xlu0 %v2066, 126
      %v2134 = vpop.permute.xlu0 %2133
      %2135 = vrot.lane.b32.xlu0 %v2067, 126
      %v2136 = vpop.permute.xlu0 %2135
      %v2137 = vsel %vm673, %v2134, %v2136
      %2140 = vmatpush.bf16.msra.mxu0 0
      %2141 = vmatpush.bf16.msra.mxu0 0
      %2142 = vmatpush.bf16.msra.mxu0 0
      %2143 = vmatpush.bf16.msra.mxu0 0
      %2144 = vmatpush.bf16.msra.mxu0 0
      %2145 = vmatpush.bf16.msra.mxu0 0
      %2146 = vmatpush.bf16.msra.mxu0 0
      %2147 = vmatpush.bf16.msra.mxu0 %v2137
      %2148 = vmatmul.bf16.gmra.mxu0 %v1673
      %v2149 = vpop.f32.mrf.mxu0
      %v2150 = vadd.f32 0.0, %v2149
      %v2151 = vpop.f32.mrf.mxu0
      %v2152 = vadd.f32 0.0, %v2151
      %2153 = vdwg.mxu0
      %2154 = vmatpush.bf16.msra.mxu0 0
      %2155 = vmatpush.bf16.msra.mxu0 0
      %2156 = vmatpush.bf16.msra.mxu0 0
      %2157 = vmatpush.bf16.msra.mxu0 0
      %2158 = vmatpush.bf16.msra.mxu0 0
      %2159 = vmatpush.bf16.msra.mxu0 0
      %2160 = vmatpush.bf16.msra.mxu0 0
      %2161 = vmatpush.bf16.msra.mxu0 %v2136
      %2162 = vmatmul.bf16.gmra.mxu0 %v1673
      %v2163 = vpop.f32.mrf.mxu0
      %v2164 = vadd.f32 0.0, %v2163
      %v2165 = vpop.f32.mrf.mxu0
      %v2166 = vadd.f32 0.0, %v2165
      %2167 = vdwg.mxu0
      %v2168 = vadd.f32 %v2115, %v2150
      %v2169 = vadd.f32 %v2129, %v2164
      %v2170 = vadd.f32 %v2117, %v2152
      %v2171 = vadd.f32 %v2131, %v2166
      %v2172 = vld [vmem:[#allocation2] sm:$0xff]
      %v2173 = vld [vmem:[#allocation2 + $0x8] sm:$0xff]
      %v2176 = vunpack.c.l.b16 %v2172
      %v2177 = vunpack.c.h.b16 %v2172
      %v2178 = vunpack.c.l.b16 %v2173
      %v2179 = vunpack.c.h.b16 %v2173
      %v2180 = vpack.c.b16 %v2178, %v2176
      %v2181 = vpack.c.b16 %v2179, %v2177
      %2182 = vrot.lane.b32.xlu0 %v2180, 110
      %v2183 = vpop.permute.xlu0 %2182
      %2184 = vrot.lane.b32.xlu0 %v2181, 110
      %v2185 = vpop.permute.xlu0 %2184
      %v2186 = vsel %vm898, %v2183, %v2185
      %2189 = vmatpush.bf16.msra.mxu0 0
      %2190 = vmatpush.bf16.msra.mxu0 0
      %2191 = vmatpush.bf16.msra.mxu0 0
      %2192 = vmatpush.bf16.msra.mxu0 0
      %2193 = vmatpush.bf16.msra.mxu0 0
      %2194 = vmatpush.bf16.msra.mxu0 0
      %2195 = vmatpush.bf16.msra.mxu0 0
      %2196 = vmatpush.bf16.msra.mxu0 %v2186
      %2197 = vmatmul.bf16.gmra.mxu0 %v1725
      %v2198 = vpop.f32.mrf.mxu0
      %v2199 = vadd.f32 0.0, %v2198
      %v2200 = vpop.f32.mrf.mxu0
      %v2201 = vadd.f32 0.0, %v2200
      %2202 = vdwg.mxu0
      %2203 = vmatpush.bf16.msra.mxu0 0
      %2204 = vmatpush.bf16.msra.mxu0 0
      %2205 = vmatpush.bf16.msra.mxu0 0
      %2206 = vmatpush.bf16.msra.mxu0 0
      %2207 = vmatpush.bf16.msra.mxu0 0
      %2208 = vmatpush.bf16.msra.mxu0 0
      %2209 = vmatpush.bf16.msra.mxu0 0
      %2210 = vmatpush.bf16.msra.mxu0 %v2185
      %2211 = vmatmul.bf16.gmra.mxu0 %v1725
      %v2212 = vpop.f32.mrf.mxu0
      %v2213 = vadd.f32 0.0, %v2212
      %v2214 = vpop.f32.mrf.mxu0
      %v2215 = vadd.f32 0.0, %v2214
      %2216 = vdwg.mxu0
      %v2217 = vadd.f32 %v2168, %v2199
      %v2218 = vadd.f32 %v2169, %v2213
      %v2219 = vadd.f32 %v2170, %v2201
      %v2220 = vadd.f32 %v2171, %v2215
      %2221 = vrot.lane.b32.xlu0 %v2180, 109
      %v2222 = vpop.permute.xlu0 %2221
      %2223 = vrot.lane.b32.xlu0 %v2181, 109
      %v2224 = vpop.permute.xlu0 %2223
      %v2225 = vsel %vm957, %v2222, %v2224
      %2228 = vmatpush.bf16.msra.mxu0 0
      %2229 = vmatpush.bf16.msra.mxu0 0
      %2230 = vmatpush.bf16.msra.mxu0 0
      %2231 = vmatpush.bf16.msra.mxu0 0
      %2232 = vmatpush.bf16.msra.mxu0 0
      %2233 = vmatpush.bf16.msra.mxu0 0
      %2234 = vmatpush.bf16.msra.mxu0 0
      %2235 = vmatpush.bf16.msra.mxu0 %v2225
      %2236 = vmatmul.bf16.gmra.mxu0 %v1772
      %v2237 = vpop.f32.mrf.mxu0
      %v2238 = vadd.f32 0.0, %v2237
      %v2239 = vpop.f32.mrf.mxu0
      %v2240 = vadd.f32 0.0, %v2239
      %2241 = vdwg.mxu0
      %2242 = vmatpush.bf16.msra.mxu0 0
      %2243 = vmatpush.bf16.msra.mxu0 0
      %2244 = vmatpush.bf16.msra.mxu0 0
      %2245 = vmatpush.bf16.msra.mxu0 0
      %2246 = vmatpush.bf16.msra.mxu0 0
      %2247 = vmatpush.bf16.msra.mxu0 0
      %2248 = vmatpush.bf16.msra.mxu0 0
      %2249 = vmatpush.bf16.msra.mxu0 %v2224
      %2250 = vmatmul.bf16.gmra.mxu0 %v1772
      %v2251 = vpop.f32.mrf.mxu0
      %v2252 = vadd.f32 0.0, %v2251
      %v2253 = vpop.f32.mrf.mxu0
      %v2254 = vadd.f32 0.0, %v2253
      %2255 = vdwg.mxu0
      %v2256 = vadd.f32 %v2217, %v2238
      %v2257 = vadd.f32 %v2218, %v2252
      %v2258 = vadd.f32 %v2219, %v2240
      %v2259 = vadd.f32 %v2220, %v2254
      %2260 = vrot.lane.b32.xlu0 %v2180, 108
      %v2261 = vpop.permute.xlu0 %2260
      %2262 = vrot.lane.b32.xlu0 %v2181, 108
      %v2263 = vpop.permute.xlu0 %2262
      %v2264 = vsel %vm1016, %v2261, %v2263
      %2267 = vmatpush.bf16.msra.mxu0 0
      %2268 = vmatpush.bf16.msra.mxu0 0
      %2269 = vmatpush.bf16.msra.mxu0 0
      %2270 = vmatpush.bf16.msra.mxu0 0
      %2271 = vmatpush.bf16.msra.mxu0 0
      %2272 = vmatpush.bf16.msra.mxu0 0
      %2273 = vmatpush.bf16.msra.mxu0 0
      %2274 = vmatpush.bf16.msra.mxu0 %v2264
      %2275 = vmatmul.bf16.gmra.mxu0 %v1819
      %v2276 = vpop.f32.mrf.mxu0
      %v2277 = vadd.f32 0.0, %v2276
      %v2278 = vpop.f32.mrf.mxu0
      %v2279 = vadd.f32 0.0, %v2278
      %2280 = vdwg.mxu0
      %2281 = vmatpush.bf16.msra.mxu0 0
      %2282 = vmatpush.bf16.msra.mxu0 0
      %2283 = vmatpush.bf16.msra.mxu0 0
      %2284 = vmatpush.bf16.msra.mxu0 0
      %2285 = vmatpush.bf16.msra.mxu0 0
      %2286 = vmatpush.bf16.msra.mxu0 0
      %2287 = vmatpush.bf16.msra.mxu0 0
      %2288 = vmatpush.bf16.msra.mxu0 %v2263
      %2289 = vmatmul.bf16.gmra.mxu0 %v1819
      %v2290 = vpop.f32.mrf.mxu0
      %v2291 = vadd.f32 0.0, %v2290
      %v2292 = vpop.f32.mrf.mxu0
      %v2293 = vadd.f32 0.0, %v2292
      %2294 = vdwg.mxu0
      %v2295 = vadd.f32 %v2256, %v2277
      %v2296 = vadd.f32 %v2257, %v2291
      %v2297 = vadd.f32 %v2258, %v2279
      %v2298 = vadd.f32 %v2259, %v2293
      %2299 = vrot.lane.b32.xlu0 %v2066, 110
      %v2300 = vpop.permute.xlu0 %2299
      %2301 = vrot.lane.b32.xlu0 %v2067, 110
      %v2302 = vpop.permute.xlu0 %2301
      %v2303 = vsel %vm898, %v2300, %v2302
      %2306 = vmatpush.bf16.msra.mxu0 0
      %2307 = vmatpush.bf16.msra.mxu0 0
      %2308 = vmatpush.bf16.msra.mxu0 0
      %2309 = vmatpush.bf16.msra.mxu0 0
      %2310 = vmatpush.bf16.msra.mxu0 0
      %2311 = vmatpush.bf16.msra.mxu0 0
      %2312 = vmatpush.bf16.msra.mxu0 0
      %2313 = vmatpush.bf16.msra.mxu0 %v2303
      %2314 = vmatmul.bf16.gmra.mxu0 %v1866
      %v2315 = vpop.f32.mrf.mxu0
      %v2316 = vadd.f32 0.0, %v2315
      %v2317 = vpop.f32.mrf.mxu0
      %v2318 = vadd.f32 0.0, %v2317
      %2319 = vdwg.mxu0
      %2320 = vmatpush.bf16.msra.mxu0 0
      %2321 = vmatpush.bf16.msra.mxu0 0
      %2322 = vmatpush.bf16.msra.mxu0 0
      %2323 = vmatpush.bf16.msra.mxu0 0
      %2324 = vmatpush.bf16.msra.mxu0 0
      %2325 = vmatpush.bf16.msra.mxu0 0
      %2326 = vmatpush.bf16.msra.mxu0 0
      %2327 = vmatpush.bf16.msra.mxu0 %v2302
      %2328 = vmatmul.bf16.gmra.mxu0 %v1866
      %v2329 = vpop.f32.mrf.mxu0
      %v2330 = vadd.f32 0.0, %v2329
      %v2331 = vpop.f32.mrf.mxu0
      %v2332 = vadd.f32 0.0, %v2331
      %2333 = vdwg.mxu0
      %v2334 = vadd.f32 %v2295, %v2316
      %v2335 = vadd.f32 %v2296, %v2330
      %v2336 = vadd.f32 %v2297, %v2318
      %v2337 = vadd.f32 %v2298, %v2332
      %2338 = vrot.lane.b32.xlu0 %v2066, 109
      %v2339 = vpop.permute.xlu0 %2338
      %2340 = vrot.lane.b32.xlu0 %v2067, 109
      %v2341 = vpop.permute.xlu0 %2340
      %v2342 = vsel %vm957, %v2339, %v2341
      %2345 = vmatpush.bf16.msra.mxu0 0
      %2346 = vmatpush.bf16.msra.mxu0 0
      %2347 = vmatpush.bf16.msra.mxu0 0
      %2348 = vmatpush.bf16.msra.mxu0 0
      %2349 = vmatpush.bf16.msra.mxu0 0
      %2350 = vmatpush.bf16.msra.mxu0 0
      %2351 = vmatpush.bf16.msra.mxu0 0
      %2352 = vmatpush.bf16.msra.mxu0 %v2342
      %2353 = vmatmul.bf16.gmra.mxu0 %v1913
      %v2354 = vpop.f32.mrf.mxu0
      %v2355 = vadd.f32 0.0, %v2354
      %v2356 = vpop.f32.mrf.mxu0
      %v2357 = vadd.f32 0.0, %v2356
      %2358 = vdwg.mxu0
      %2359 = vmatpush.bf16.msra.mxu0 0
      %2360 = vmatpush.bf16.msra.mxu0 0
      %2361 = vmatpush.bf16.msra.mxu0 0
      %2362 = vmatpush.bf16.msra.mxu0 0
      %2363 = vmatpush.bf16.msra.mxu0 0
      %2364 = vmatpush.bf16.msra.mxu0 0
      %2365 = vmatpush.bf16.msra.mxu0 0
      %2366 = vmatpush.bf16.msra.mxu0 %v2341
      %2367 = vmatmul.bf16.gmra.mxu0 %v1913
      %v2368 = vpop.f32.mrf.mxu0
      %v2369 = vadd.f32 0.0, %v2368
      %v2370 = vpop.f32.mrf.mxu0
      %v2371 = vadd.f32 0.0, %v2370
      %2372 = vdwg.mxu0
      %v2373 = vadd.f32 %v2334, %v2355
      %v2374 = vadd.f32 %v2335, %v2369
      %v2375 = vadd.f32 %v2336, %v2357
      %v2376 = vadd.f32 %v2337, %v2371
      %2377 = vrot.lane.b32.xlu0 %v2066, 108
      %v2378 = vpop.permute.xlu0 %2377
      %2379 = vrot.lane.b32.xlu0 %v2067, 108
      %v2380 = vpop.permute.xlu0 %2379
      %v2381 = vsel %vm1016, %v2378, %v2380
      %2384 = vmatpush.bf16.msra.mxu0 0
      %2385 = vmatpush.bf16.msra.mxu0 0
      %2386 = vmatpush.bf16.msra.mxu0 0
      %2387 = vmatpush.bf16.msra.mxu0 0
      %2388 = vmatpush.bf16.msra.mxu0 0
      %2389 = vmatpush.bf16.msra.mxu0 0
      %2390 = vmatpush.bf16.msra.mxu0 0
      %2391 = vmatpush.bf16.msra.mxu0 %v2381
      %2392 = vmatmul.bf16.gmra.mxu0 %v1960
      %v2393 = vpop.f32.mrf.mxu0
      %v2394 = vadd.f32 0.0, %v2393
      %v2395 = vpop.f32.mrf.mxu0
      %v2396 = vadd.f32 0.0, %v2395
      %2397 = vdwg.mxu0
      %2398 = vmatpush.bf16.msra.mxu0 0
      %2399 = vmatpush.bf16.msra.mxu0 0
      %2400 = vmatpush.bf16.msra.mxu0 0
      %2401 = vmatpush.bf16.msra.mxu0 0
      %2402 = vmatpush.bf16.msra.mxu0 0
      %2403 = vmatpush.bf16.msra.mxu0 0
      %2404 = vmatpush.bf16.msra.mxu0 0
      %2405 = vmatpush.bf16.msra.mxu0 %v2380
      %2406 = vmatmul.bf16.gmra.mxu0 %v1960
      %v2407 = vpop.f32.mrf.mxu0
      %v2408 = vadd.f32 0.0, %v2407
      %v2409 = vpop.f32.mrf.mxu0
      %v2410 = vadd.f32 0.0, %v2409
      %2411 = vdwg.mxu0
      %v2412 = vadd.f32 %v2373, %v2394
      %v2413 = vadd.f32 %v2374, %v2408
      %v2414 = vadd.f32 %v2375, %v2396
      %v2415 = vadd.f32 %v2376, %v2410
      %v2416 = vadd.f32 %v2412, %v1997
      %v2417 = vadd.f32 %v2413, %v1997
      %v2418 = vadd.f32 %v2414, %v2002
      %v2419 = vadd.f32 %v2415, %v2002
      %v2420 = vmax.f32 %v2416, 0.0
      %v2421 = vmax.f32 %v2417, 0.0
      %v2422 = vmax.f32 %v2418, 0.0
      %v2423 = vmax.f32 %v2419, 0.0
      %v2424 = vpack.c.bf16 %v2422, %v2420
      %v2425 = vpack.c.bf16 %v2423, %v2421
      %2426 = vmatpush.bf16.msra.mxu0 0
      %2427 = vmatpush.bf16.msra.mxu0 0
      %2428 = vmatpush.bf16.msra.mxu0 0
      %2429 = vmatpush.bf16.msra.mxu0 0
      %2430 = vmatpush.bf16.msra.mxu0 0
      %2431 = vmatpush.bf16.msra.mxu0 0
      %2432 = vmatpush.bf16.msra.mxu0 0
      %2433 = vmatpush.bf16.msra.mxu0 %v2424
      %2434 = vmatmul.bf16.gmra.mxu0 %v2020
      %v2435 = vpop.f32.mrf.mxu0
      %v2436 = vadd.f32 %v2017, %v2435
      %v2437 = vpop.f32.mrf.mxu0
      %2438 = vdwg.mxu0
      %2439 = vmatpush.bf16.msra.mxu0 0
      %2440 = vmatpush.bf16.msra.mxu0 0
      %2441 = vmatpush.bf16.msra.mxu0 0
      %2442 = vmatpush.bf16.msra.mxu0 0
      %2443 = vmatpush.bf16.msra.mxu0 0
      %2444 = vmatpush.bf16.msra.mxu0 0
      %2445 = vmatpush.bf16.msra.mxu0 0
      %2446 = vmatpush.bf16.msra.mxu0 %v2425
      %2447 = vmatmul.bf16.gmra.mxu0 %v2020
      %v2448 = vpop.f32.mrf.mxu0
      %v2449 = vadd.f32 %v2017, %v2448
      %v2450 = vpop.f32.mrf.mxu0
      %2451 = vdwg.mxu0
      %v2452 = vsel %vm1079, %v2436, 0.0
      %v2453 = vsel %vm1080, %v2449, 0.0
      %v2454 = vpack.c.bf16 %v2453, %v2452
      %2456 = vrot.lane.b32.xlu0 %v2454, 19
      %v2457 = vpop.permute.xlu0 %2456
      %v2458 = vrot.slane %v2457, 4
      %v2459 = vsel %vm1558, %v2458, %v2457
      %2461 = vst.msk [vmem:[#allocation3] sm:$0xff] %vm1565, %v2459
      %v2462 = vld [vmem:[#allocation3] sm:$0xff]
      %v2465 = vunpack.c.l.b16 %v526
      %v2466 = vunpack.c.l.b16 %v527
      %v2467 = vpack.c.b16 %v2466, %v2465
      %v2469 = vunpack.c.l.b16 %v2462
      %v2470 = vunpack.c.h.b16 %v2462
      %v2471 = vpack.c.b16 %v2469, %v2469
      %v2472 = vpack.c.b16 %v2470, %v2470
      %2473 = vrot.lane.b32.xlu0 %v2471, 127
      %v2474 = vpop.permute.xlu0 %2473
      %2475 = vrot.lane.b32.xlu0 %v2472, 127
      %v2476 = vpop.permute.xlu0 %2475
      %v2477 = vsel %vm570, %v2474, %v2476
      %vm2478 = vcmask 64512
      %v2480 = vsel %vm2478, %v2467, 0
      %vm2482 = vcmask 1043456
      %v2484 = vsel %vm2482, %v2477, 0
      %v2487 = vsel %vm2482, %v2476, 0
      %2489 = vmatpush.bf16.msra.mxu0 0
      %2490 = vmatpush.bf16.msra.mxu0 0
      %2491 = vmatpush.bf16.msra.mxu0 0
      %2492 = vmatpush.bf16.msra.mxu0 0
      %2493 = vmatpush.bf16.msra.mxu0 0
      %2494 = vmatpush.bf16.msra.mxu0 0
      %2495 = vmatpush.bf16.msra.mxu0 0
      %2496 = vmatpush.bf16.msra.mxu0 %v2484
      %2497 = vmatmul.bf16.gmra.mxu0 %v2480
      %v2498 = vpop.f32.mrf.mxu0
      %v2499 = vadd.f32 0.0, %v2498
      %v2500 = vpop.f32.mrf.mxu0
      %v2501 = vadd.f32 0.0, %v2500
      %2502 = vdwg.mxu0
      %2503 = vmatpush.bf16.msra.mxu0 0
      %2504 = vmatpush.bf16.msra.mxu0 0
      %2505 = vmatpush.bf16.msra.mxu0 0
      %2506 = vmatpush.bf16.msra.mxu0 0
      %2507 = vmatpush.bf16.msra.mxu0 0
      %2508 = vmatpush.bf16.msra.mxu0 0
      %2509 = vmatpush.bf16.msra.mxu0 0
      %2510 = vmatpush.bf16.msra.mxu0 %v2487
      %2511 = vmatmul.bf16.gmra.mxu0 %v2480
      %v2512 = vpop.f32.mrf.mxu0
      %v2513 = vadd.f32 0.0, %v2512
      %v2514 = vpop.f32.mrf.mxu0
      %v2515 = vadd.f32 0.0, %v2514
      %2516 = vdwg.mxu0
      %v2519 = vunpack.c.l.b16 %v524
      %v2520 = vunpack.c.l.b16 %v525
      %v2521 = vpack.c.b16 %v2520, %v2519
      %v2523 = vsel %vm2478, %v2521, 0
      %v2526 = vsel %vm2482, %v2471, 0
      %v2529 = vsel %vm2482, %v2472, 0
      %2531 = vmatpush.bf16.msra.mxu0 0
      %2532 = vmatpush.bf16.msra.mxu0 0
      %2533 = vmatpush.bf16.msra.mxu0 0
      %2534 = vmatpush.bf16.msra.mxu0 0
      %2535 = vmatpush.bf16.msra.mxu0 0
      %2536 = vmatpush.bf16.msra.mxu0 0
      %2537 = vmatpush.bf16.msra.mxu0 0
      %2538 = vmatpush.bf16.msra.mxu0 %v2526
      %2539 = vmatmul.bf16.gmra.mxu0 %v2523
      %v2540 = vpop.f32.mrf.mxu0
      %v2541 = vadd.f32 %v2499, %v2540
      %v2542 = vpop.f32.mrf.mxu0
      %v2543 = vadd.f32 %v2501, %v2542
      %2544 = vdwg.mxu0
      %2545 = vmatpush.bf16.msra.mxu0 0
      %2546 = vmatpush.bf16.msra.mxu0 0
      %2547 = vmatpush.bf16.msra.mxu0 0
      %2548 = vmatpush.bf16.msra.mxu0 0
      %2549 = vmatpush.bf16.msra.mxu0 0
      %2550 = vmatpush.bf16.msra.mxu0 0
      %2551 = vmatpush.bf16.msra.mxu0 0
      %2552 = vmatpush.bf16.msra.mxu0 %v2529
      %2553 = vmatmul.bf16.gmra.mxu0 %v2523
      %v2554 = vpop.f32.mrf.mxu0
      %v2555 = vadd.f32 %v2513, %v2554
      %v2556 = vpop.f32.mrf.mxu0
      %v2557 = vadd.f32 %v2515, %v2556
      %2558 = vdwg.mxu0
      %v2561 = vunpack.c.l.b16 %v528
      %v2562 = vunpack.c.l.b16 %v529
      %v2563 = vpack.c.b16 %v2562, %v2561
      %2564 = vrot.lane.b32.xlu0 %v2471, 126
      %v2565 = vpop.permute.xlu0 %2564
      %2566 = vrot.lane.b32.xlu0 %v2472, 126
      %v2567 = vpop.permute.xlu0 %2566
      %v2568 = vsel %vm673, %v2565, %v2567
      %v2570 = vsel %vm2478, %v2563, 0
      %v2573 = vsel %vm2482, %v2568, 0
      %v2576 = vsel %vm2482, %v2567, 0
      %2578 = vmatpush.bf16.msra.mxu0 0
      %2579 = vmatpush.bf16.msra.mxu0 0
      %2580 = vmatpush.bf16.msra.mxu0 0
      %2581 = vmatpush.bf16.msra.mxu0 0
      %2582 = vmatpush.bf16.msra.mxu0 0
      %2583 = vmatpush.bf16.msra.mxu0 0
      %2584 = vmatpush.bf16.msra.mxu0 0
      %2585 = vmatpush.bf16.msra.mxu0 %v2573
      %2586 = vmatmul.bf16.gmra.mxu0 %v2570
      %v2587 = vpop.f32.mrf.mxu0
      %v2588 = vadd.f32 0.0, %v2587
      %v2589 = vpop.f32.mrf.mxu0
      %v2590 = vadd.f32 0.0, %v2589
      %2591 = vdwg.mxu0
      %2592 = vmatpush.bf16.msra.mxu0 0
      %2593 = vmatpush.bf16.msra.mxu0 0
      %2594 = vmatpush.bf16.msra.mxu0 0
      %2595 = vmatpush.bf16.msra.mxu0 0
      %2596 = vmatpush.bf16.msra.mxu0 0
      %2597 = vmatpush.bf16.msra.mxu0 0
      %2598 = vmatpush.bf16.msra.mxu0 0
      %2599 = vmatpush.bf16.msra.mxu0 %v2576
      %2600 = vmatmul.bf16.gmra.mxu0 %v2570
      %v2601 = vpop.f32.mrf.mxu0
      %v2602 = vadd.f32 0.0, %v2601
      %v2603 = vpop.f32.mrf.mxu0
      %v2604 = vadd.f32 0.0, %v2603
      %2605 = vdwg.mxu0
      %v2606 = vadd.f32 %v2541, %v2588
      %v2607 = vadd.f32 %v2555, %v2602
      %v2608 = vadd.f32 %v2543, %v2590
      %v2609 = vadd.f32 %v2557, %v2604
      %v2610 = vld [vmem:[%s472] sm:$0xff]
      %v2613 = vunpack.c.l.b16 %v530
      %v2614 = vunpack.c.l.b16 %v531
      %v2615 = vpack.c.b16 %v2614, %v2613
      %v2617 = vunpack.c.l.b16 %v2610
      %v2618 = vunpack.c.h.b16 %v2610
      %v2619 = vpack.c.b16 %v2617, %v2617
      %v2620 = vpack.c.b16 %v2618, %v2618
      %v2622 = vsel %vm2478, %v2615, 0
      %v2625 = vsel %vm2482, %v2619, 0
      %v2628 = vsel %vm2482, %v2620, 0
      %2630 = vmatpush.bf16.msra.mxu0 0
      %2631 = vmatpush.bf16.msra.mxu0 0
      %2632 = vmatpush.bf16.msra.mxu0 0
      %2633 = vmatpush.bf16.msra.mxu0 0
      %2634 = vmatpush.bf16.msra.mxu0 0
      %2635 = vmatpush.bf16.msra.mxu0 0
      %2636 = vmatpush.bf16.msra.mxu0 0
      %2637 = vmatpush.bf16.msra.mxu0 %v2625
      %2638 = vmatmul.bf16.gmra.mxu0 %v2622
      %v2639 = vpop.f32.mrf.mxu0
      %v2640 = vadd.f32 0.0, %v2639
      %v2641 = vpop.f32.mrf.mxu0
      %v2642 = vadd.f32 0.0, %v2641
      %2643 = vdwg.mxu0
      %2644 = vmatpush.bf16.msra.mxu0 0
      %2645 = vmatpush.bf16.msra.mxu0 0
      %2646 = vmatpush.bf16.msra.mxu0 0
      %2647 = vmatpush.bf16.msra.mxu0 0
      %2648 = vmatpush.bf16.msra.mxu0 0
      %2649 = vmatpush.bf16.msra.mxu0 0
      %2650 = vmatpush.bf16.msra.mxu0 0
      %2651 = vmatpush.bf16.msra.mxu0 %v2628
      %2652 = vmatmul.bf16.gmra.mxu0 %v2622
      %v2653 = vpop.f32.mrf.mxu0
      %v2654 = vadd.f32 0.0, %v2653
      %v2655 = vpop.f32.mrf.mxu0
      %v2656 = vadd.f32 0.0, %v2655
      %2657 = vdwg.mxu0
      %v2658 = vadd.f32 %v2606, %v2640
      %v2659 = vadd.f32 %v2607, %v2654
      %v2660 = vadd.f32 %v2608, %v2642
      %v2661 = vadd.f32 %v2609, %v2656
      %v2664 = vunpack.c.l.b16 %v532
      %v2665 = vunpack.c.l.b16 %v533
      %v2666 = vpack.c.b16 %v2665, %v2664
      %2667 = vrot.lane.b32.xlu0 %v2619, 127
      %v2668 = vpop.permute.xlu0 %2667
      %2669 = vrot.lane.b32.xlu0 %v2620, 127
      %v2670 = vpop.permute.xlu0 %2669
      %v2671 = vsel %vm570, %v2668, %v2670
      %v2673 = vsel %vm2478, %v2666, 0
      %v2676 = vsel %vm2482, %v2671, 0
      %v2679 = vsel %vm2482, %v2670, 0
      %2681 = vmatpush.bf16.msra.mxu0 0
      %2682 = vmatpush.bf16.msra.mxu0 0
      %2683 = vmatpush.bf16.msra.mxu0 0
      %2684 = vmatpush.bf16.msra.mxu0 0
      %2685 = vmatpush.bf16.msra.mxu0 0
      %2686 = vmatpush.bf16.msra.mxu0 0
      %2687 = vmatpush.bf16.msra.mxu0 0
      %2688 = vmatpush.bf16.msra.mxu0 %v2676
      %2689 = vmatmul.bf16.gmra.mxu0 %v2673
      %v2690 = vpop.f32.mrf.mxu0
      %v2691 = vadd.f32 0.0, %v2690
      %v2692 = vpop.f32.mrf.mxu0
      %v2693 = vadd.f32 0.0, %v2692
      %2694 = vdwg.mxu0
      %2695 = vmatpush.bf16.msra.mxu0 0
      %2696 = vmatpush.bf16.msra.mxu0 0
      %2697 = vmatpush.bf16.msra.mxu0 0
      %2698 = vmatpush.bf16.msra.mxu0 0
      %2699 = vmatpush.bf16.msra.mxu0 0
      %2700 = vmatpush.bf16.msra.mxu0 0
      %2701 = vmatpush.bf16.msra.mxu0 0
      %2702 = vmatpush.bf16.msra.mxu0 %v2679
      %2703 = vmatmul.bf16.gmra.mxu0 %v2673
      %v2704 = vpop.f32.mrf.mxu0
      %v2705 = vadd.f32 0.0, %v2704
      %v2706 = vpop.f32.mrf.mxu0
      %v2707 = vadd.f32 0.0, %v2706
      %2708 = vdwg.mxu0
      %v2709 = vadd.f32 %v2658, %v2691
      %v2710 = vadd.f32 %v2659, %v2705
      %v2711 = vadd.f32 %v2660, %v2693
      %v2712 = vadd.f32 %v2661, %v2707
      %v2715 = vunpack.c.l.b16 %v534
      %v2716 = vunpack.c.l.b16 %v535
      %v2717 = vpack.c.b16 %v2716, %v2715
      %2718 = vrot.lane.b32.xlu0 %v2619, 126
      %v2719 = vpop.permute.xlu0 %2718
      %2720 = vrot.lane.b32.xlu0 %v2620, 126
      %v2721 = vpop.permute.xlu0 %2720
      %v2722 = vsel %vm673, %v2719, %v2721
      %v2724 = vsel %vm2478, %v2717, 0
      %v2727 = vsel %vm2482, %v2722, 0
      %v2730 = vsel %vm2482, %v2721, 0
      %2732 = vmatpush.bf16.msra.mxu0 0
      %2733 = vmatpush.bf16.msra.mxu0 0
      %2734 = vmatpush.bf16.msra.mxu0 0
      %2735 = vmatpush.bf16.msra.mxu0 0
      %2736 = vmatpush.bf16.msra.mxu0 0
      %2737 = vmatpush.bf16.msra.mxu0 0
      %2738 = vmatpush.bf16.msra.mxu0 0
      %2739 = vmatpush.bf16.msra.mxu0 %v2727
      %2740 = vmatmul.bf16.gmra.mxu0 %v2724
      %v2741 = vpop.f32.mrf.mxu0
      %v2742 = vadd.f32 0.0, %v2741
      %v2743 = vpop.f32.mrf.mxu0
      %v2744 = vadd.f32 0.0, %v2743
      %2745 = vdwg.mxu0
      %2746 = vmatpush.bf16.msra.mxu0 0
      %2747 = vmatpush.bf16.msra.mxu0 0
      %2748 = vmatpush.bf16.msra.mxu0 0
      %2749 = vmatpush.bf16.msra.mxu0 0
      %2750 = vmatpush.bf16.msra.mxu0 0
      %2751 = vmatpush.bf16.msra.mxu0 0
      %2752 = vmatpush.bf16.msra.mxu0 0
      %2753 = vmatpush.bf16.msra.mxu0 %v2730
      %2754 = vmatmul.bf16.gmra.mxu0 %v2724
      %v2755 = vpop.f32.mrf.mxu0
      %v2756 = vadd.f32 0.0, %v2755
      %v2757 = vpop.f32.mrf.mxu0
      %v2758 = vadd.f32 0.0, %v2757
      %2759 = vdwg.mxu0
      %v2760 = vadd.f32 %v2709, %v2742
      %v2761 = vadd.f32 %v2710, %v2756
      %v2762 = vadd.f32 %v2711, %v2744
      %v2763 = vadd.f32 %v2712, %v2758
      %v2766 = vunpack.c.l.b16 %v536
      %v2767 = vunpack.c.l.b16 %v537
      %v2768 = vpack.c.b16 %v2767, %v2766
      %2769 = vrot.lane.b32.xlu0 %v2471, 110
      %v2770 = vpop.permute.xlu0 %2769
      %2771 = vrot.lane.b32.xlu0 %v2472, 110
      %v2772 = vpop.permute.xlu0 %2771
      %v2773 = vsel %vm898, %v2770, %v2772
      %v2775 = vsel %vm2478, %v2768, 0
      %v2778 = vsel %vm2482, %v2773, 0
      %v2781 = vsel %vm2482, %v2772, 0
      %2783 = vmatpush.bf16.msra.mxu0 0
      %2784 = vmatpush.bf16.msra.mxu0 0
      %2785 = vmatpush.bf16.msra.mxu0 0
      %2786 = vmatpush.bf16.msra.mxu0 0
      %2787 = vmatpush.bf16.msra.mxu0 0
      %2788 = vmatpush.bf16.msra.mxu0 0
      %2789 = vmatpush.bf16.msra.mxu0 0
      %2790 = vmatpush.bf16.msra.mxu0 %v2778
      %2791 = vmatmul.bf16.gmra.mxu0 %v2775
      %v2792 = vpop.f32.mrf.mxu0
      %v2793 = vadd.f32 0.0, %v2792
      %v2794 = vpop.f32.mrf.mxu0
      %v2795 = vadd.f32 0.0, %v2794
      %2796 = vdwg.mxu0
      %2797 = vmatpush.bf16.msra.mxu0 0
      %2798 = vmatpush.bf16.msra.mxu0 0
      %2799 = vmatpush.bf16.msra.mxu0 0
      %2800 = vmatpush.bf16.msra.mxu0 0
      %2801 = vmatpush.bf16.msra.mxu0 0
      %2802 = vmatpush.bf16.msra.mxu0 0
      %2803 = vmatpush.bf16.msra.mxu0 0
      %2804 = vmatpush.bf16.msra.mxu0 %v2781
      %2805 = vmatmul.bf16.gmra.mxu0 %v2775
      %v2806 = vpop.f32.mrf.mxu0
      %v2807 = vadd.f32 0.0, %v2806
      %v2808 = vpop.f32.mrf.mxu0
      %v2809 = vadd.f32 0.0, %v2808
      %2810 = vdwg.mxu0
      %v2811 = vadd.f32 %v2760, %v2793
      %v2812 = vadd.f32 %v2761, %v2807
      %v2813 = vadd.f32 %v2762, %v2795
      %v2814 = vadd.f32 %v2763, %v2809
      %v2817 = vunpack.c.l.b16 %v538
      %v2818 = vunpack.c.l.b16 %v539
      %v2819 = vpack.c.b16 %v2818, %v2817
      %2820 = vrot.lane.b32.xlu0 %v2471, 109
      %v2821 = vpop.permute.xlu0 %2820
      %2822 = vrot.lane.b32.xlu0 %v2472, 109
      %v2823 = vpop.permute.xlu0 %2822
      %v2824 = vsel %vm957, %v2821, %v2823
      %v2826 = vsel %vm2478, %v2819, 0
      %v2829 = vsel %vm2482, %v2824, 0
      %v2832 = vsel %vm2482, %v2823, 0
      %2834 = vmatpush.bf16.msra.mxu0 0
      %2835 = vmatpush.bf16.msra.mxu0 0
      %2836 = vmatpush.bf16.msra.mxu0 0
      %2837 = vmatpush.bf16.msra.mxu0 0
      %2838 = vmatpush.bf16.msra.mxu0 0
      %2839 = vmatpush.bf16.msra.mxu0 0
      %2840 = vmatpush.bf16.msra.mxu0 0
      %2841 = vmatpush.bf16.msra.mxu0 %v2829
      %2842 = vmatmul.bf16.gmra.mxu0 %v2826
      %v2843 = vpop.f32.mrf.mxu0
      %v2844 = vadd.f32 0.0, %v2843
      %v2845 = vpop.f32.mrf.mxu0
      %v2846 = vadd.f32 0.0, %v2845
      %2847 = vdwg.mxu0
      %2848 = vmatpush.bf16.msra.mxu0 0
      %2849 = vmatpush.bf16.msra.mxu0 0
      %2850 = vmatpush.bf16.msra.mxu0 0
      %2851 = vmatpush.bf16.msra.mxu0 0
      %2852 = vmatpush.bf16.msra.mxu0 0
      %2853 = vmatpush.bf16.msra.mxu0 0
      %2854 = vmatpush.bf16.msra.mxu0 0
      %2855 = vmatpush.bf16.msra.mxu0 %v2832
      %2856 = vmatmul.bf16.gmra.mxu0 %v2826
      %v2857 = vpop.f32.mrf.mxu0
      %v2858 = vadd.f32 0.0, %v2857
      %v2859 = vpop.f32.mrf.mxu0
      %v2860 = vadd.f32 0.0, %v2859
      %2861 = vdwg.mxu0
      %v2862 = vadd.f32 %v2811, %v2844
      %v2863 = vadd.f32 %v2812, %v2858
      %v2864 = vadd.f32 %v2813, %v2846
      %v2865 = vadd.f32 %v2814, %v2860
      %v2868 = vunpack.c.l.b16 %v540
      %v2869 = vunpack.c.l.b16 %v541
      %v2870 = vpack.c.b16 %v2869, %v2868
      %2871 = vrot.lane.b32.xlu0 %v2471, 108
      %v2872 = vpop.permute.xlu0 %2871
      %2873 = vrot.lane.b32.xlu0 %v2472, 108
      %v2874 = vpop.permute.xlu0 %2873
      %v2875 = vsel %vm1016, %v2872, %v2874
      %v2877 = vsel %vm2478, %v2870, 0
      %v2880 = vsel %vm2482, %v2875, 0
      %v2883 = vsel %vm2482, %v2874, 0
      %2885 = vmatpush.bf16.msra.mxu0 0
      %2886 = vmatpush.bf16.msra.mxu0 0
      %2887 = vmatpush.bf16.msra.mxu0 0
      %2888 = vmatpush.bf16.msra.mxu0 0
      %2889 = vmatpush.bf16.msra.mxu0 0
      %2890 = vmatpush.bf16.msra.mxu0 0
      %2891 = vmatpush.bf16.msra.mxu0 0
      %2892 = vmatpush.bf16.msra.mxu0 %v2880
      %2893 = vmatmul.bf16.gmra.mxu0 %v2877
      %v2894 = vpop.f32.mrf.mxu0
      %v2895 = vadd.f32 0.0, %v2894
      %v2896 = vpop.f32.mrf.mxu0
      %v2897 = vadd.f32 0.0, %v2896
      %2898 = vdwg.mxu0
      %2899 = vmatpush.bf16.msra.mxu0 0
      %2900 = vmatpush.bf16.msra.mxu0 0
      %2901 = vmatpush.bf16.msra.mxu0 0
      %2902 = vmatpush.bf16.msra.mxu0 0
      %2903 = vmatpush.bf16.msra.mxu0 0
      %2904 = vmatpush.bf16.msra.mxu0 0
      %2905 = vmatpush.bf16.msra.mxu0 0
      %2906 = vmatpush.bf16.msra.mxu0 %v2883
      %2907 = vmatmul.bf16.gmra.mxu0 %v2877
      %v2908 = vpop.f32.mrf.mxu0
      %v2909 = vadd.f32 0.0, %v2908
      %v2910 = vpop.f32.mrf.mxu0
      %v2911 = vadd.f32 0.0, %v2910
      %2912 = vdwg.mxu0
      %v2913 = vadd.f32 %v2862, %v2895
      %v2914 = vadd.f32 %v2863, %v2909
      %v2915 = vadd.f32 %v2864, %v2897
      %v2916 = vadd.f32 %v2865, %v2911
      %2918 = vset.pattern.permute.xlu0 0
      %2919 = vperm.xlu0 %2918, %v542
      %v2920 = vpop.permute.xlu0 %2919
      %2923 = vset.pattern.permute.xlu0 0
      %2924 = vperm.xlu0 %2923, %v543
      %v2925 = vpop.permute.xlu0 %2924
      %v2927 = vadd.f32 %v2913, %v2920
      %v2928 = vadd.f32 %v2914, %v2920
      %v2929 = vadd.f32 %v2915, %v2925
      %v2930 = vadd.f32 %v2916, %v2925
      %v2931 = vsel %vm1079, %v2927, 0.0
      %v2932 = vsel %vm1080, %v2928, 0.0
      %v2933 = vsel %vm1079, %v2929, 0.0
      %v2934 = vsel %vm1080, %v2930, 0.0
      %v2935 = vpack.c.bf16 %v2932, %v2931
      %v2936 = vpack.c.bf16 %v2934, %v2933
      %2939 = vrot.lane.b32.xlu0 %v2935, 1
      %v2940 = vpop.permute.xlu0 %2939
      %2941 = vrot.lane.b32.xlu0 %v2936, 1
      %v2942 = vpop.permute.xlu0 %2941
      %v2943 = vrot.slane %v2940, 4
      %v2944 = vrot.slane %v2942, 4
      %v2945 = vsel %vm1095, %v2943, %v2940
      %v2946 = vsel %vm1095, %v2944, %v2942
      %2949 = vst.msk [vmem:[%s477] sm:$0xff] %vm1102, %v2945
      %2950 = vst.msk [vmem:[%s477 + $0x8] sm:$0xff] %vm1102, %v2946
      %v2951 = vld [vmem:[%s472] sm:$0xff]
      %v2953 = vunpack.c.l.b16 %v2951
      %v2954 = vunpack.c.h.b16 %v2951
      %v2955 = vpack.c.b16 %v2953, %v2953
      %v2956 = vpack.c.b16 %v2954, %v2954
      %2957 = vrot.lane.b32.xlu0 %v2955, 127
      %v2958 = vpop.permute.xlu0 %2957
      %2959 = vrot.lane.b32.xlu0 %v2956, 127
      %v2960 = vpop.permute.xlu0 %2959
      %v2961 = vsel %vm570, %v2958, %v2960
      %v2963 = vsel %vm2482, %v2961, 0
      %v2966 = vsel %vm2482, %v2960, 0
      %2968 = vmatpush.bf16.msra.mxu0 0
      %2969 = vmatpush.bf16.msra.mxu0 0
      %2970 = vmatpush.bf16.msra.mxu0 0
      %2971 = vmatpush.bf16.msra.mxu0 0
      %2972 = vmatpush.bf16.msra.mxu0 0
      %2973 = vmatpush.bf16.msra.mxu0 0
      %2974 = vmatpush.bf16.msra.mxu0 0
      %2975 = vmatpush.bf16.msra.mxu0 %v2963
      %2976 = vmatmul.bf16.gmra.mxu0 %v2480
      %v2977 = vpop.f32.mrf.mxu0
      %v2978 = vadd.f32 0.0, %v2977
      %v2979 = vpop.f32.mrf.mxu0
      %v2980 = vadd.f32 0.0, %v2979
      %2981 = vdwg.mxu0
      %2982 = vmatpush.bf16.msra.mxu0 0
      %2983 = vmatpush.bf16.msra.mxu0 0
      %2984 = vmatpush.bf16.msra.mxu0 0
      %2985 = vmatpush.bf16.msra.mxu0 0
      %2986 = vmatpush.bf16.msra.mxu0 0
      %2987 = vmatpush.bf16.msra.mxu0 0
      %2988 = vmatpush.bf16.msra.mxu0 0
      %2989 = vmatpush.bf16.msra.mxu0 %v2966
      %2990 = vmatmul.bf16.gmra.mxu0 %v2480
      %v2991 = vpop.f32.mrf.mxu0
      %v2992 = vadd.f32 0.0, %v2991
      %v2993 = vpop.f32.mrf.mxu0
      %v2994 = vadd.f32 0.0, %v2993
      %2995 = vdwg.mxu0
      %v2997 = vsel %vm2482, %v2955, 0
      %v3000 = vsel %vm2482, %v2956, 0
      %3002 = vmatpush.bf16.msra.mxu0 0
      %3003 = vmatpush.bf16.msra.mxu0 0
      %3004 = vmatpush.bf16.msra.mxu0 0
      %3005 = vmatpush.bf16.msra.mxu0 0
      %3006 = vmatpush.bf16.msra.mxu0 0
      %3007 = vmatpush.bf16.msra.mxu0 0
      %3008 = vmatpush.bf16.msra.mxu0 0
      %3009 = vmatpush.bf16.msra.mxu0 %v2997
      %3010 = vmatmul.bf16.gmra.mxu0 %v2523
      %v3011 = vpop.f32.mrf.mxu0
      %v3012 = vadd.f32 %v2978, %v3011
      %v3013 = vpop.f32.mrf.mxu0
      %v3014 = vadd.f32 %v2980, %v3013
      %3015 = vdwg.mxu0
      %3016 = vmatpush.bf16.msra.mxu0 0
      %3017 = vmatpush.bf16.msra.mxu0 0
      %3018 = vmatpush.bf16.msra.mxu0 0
      %3019 = vmatpush.bf16.msra.mxu0 0
      %3020 = vmatpush.bf16.msra.mxu0 0
      %3021 = vmatpush.bf16.msra.mxu0 0
      %3022 = vmatpush.bf16.msra.mxu0 0
      %3023 = vmatpush.bf16.msra.mxu0 %v3000
      %3024 = vmatmul.bf16.gmra.mxu0 %v2523
      %v3025 = vpop.f32.mrf.mxu0
      %v3026 = vadd.f32 %v2992, %v3025
      %v3027 = vpop.f32.mrf.mxu0
      %v3028 = vadd.f32 %v2994, %v3027
      %3029 = vdwg.mxu0
      %3030 = vrot.lane.b32.xlu0 %v2955, 126
      %v3031 = vpop.permute.xlu0 %3030
      %3032 = vrot.lane.b32.xlu0 %v2956, 126
      %v3033 = vpop.permute.xlu0 %3032
      %v3034 = vsel %vm673, %v3031, %v3033
      %v3036 = vsel %vm2482, %v3034, 0
      %v3039 = vsel %vm2482, %v3033, 0
      %3041 = vmatpush.bf16.msra.mxu0 0
      %3042 = vmatpush.bf16.msra.mxu0 0
      %3043 = vmatpush.bf16.msra.mxu0 0
      %3044 = vmatpush.bf16.msra.mxu0 0
      %3045 = vmatpush.bf16.msra.mxu0 0
      %3046 = vmatpush.bf16.msra.mxu0 0
      %3047 = vmatpush.bf16.msra.mxu0 0
      %3048 = vmatpush.bf16.msra.mxu0 %v3036
      %3049 = vmatmul.bf16.gmra.mxu0 %v2570
      %v3050 = vpop.f32.mrf.mxu0
      %v3051 = vadd.f32 0.0, %v3050
      %v3052 = vpop.f32.mrf.mxu0
      %v3053 = vadd.f32 0.0, %v3052
      %3054 = vdwg.mxu0
      %3055 = vmatpush.bf16.msra.mxu0 0
      %3056 = vmatpush.bf16.msra.mxu0 0
      %3057 = vmatpush.bf16.msra.mxu0 0
      %3058 = vmatpush.bf16.msra.mxu0 0
      %3059 = vmatpush.bf16.msra.mxu0 0
      %3060 = vmatpush.bf16.msra.mxu0 0
      %3061 = vmatpush.bf16.msra.mxu0 0
      %3062 = vmatpush.bf16.msra.mxu0 %v3039
      %3063 = vmatmul.bf16.gmra.mxu0 %v2570
      %v3064 = vpop.f32.mrf.mxu0
      %v3065 = vadd.f32 0.0, %v3064
      %v3066 = vpop.f32.mrf.mxu0
      %v3067 = vadd.f32 0.0, %v3066
      %3068 = vdwg.mxu0
      %v3069 = vadd.f32 %v3012, %v3051
      %v3070 = vadd.f32 %v3026, %v3065
      %v3071 = vadd.f32 %v3014, %v3053
      %v3072 = vadd.f32 %v3028, %v3067
      %v3073 = vld [vmem:[#allocation3] sm:$0xff]
      %v3075 = vunpack.c.l.b16 %v3073
      %v3076 = vunpack.c.h.b16 %v3073
      %v3077 = vpack.c.b16 %v3075, %v3075
      %v3078 = vpack.c.b16 %v3076, %v3076
      %3079 = vrot.lane.b32.xlu0 %v3077, 110
      %v3080 = vpop.permute.xlu0 %3079
      %3081 = vrot.lane.b32.xlu0 %v3078, 110
      %v3082 = vpop.permute.xlu0 %3081
      %v3083 = vsel %vm898, %v3080, %v3082
      %v3085 = vsel %vm2482, %v3083, 0
      %v3088 = vsel %vm2482, %v3082, 0
      %3090 = vmatpush.bf16.msra.mxu0 0
      %3091 = vmatpush.bf16.msra.mxu0 0
      %3092 = vmatpush.bf16.msra.mxu0 0
      %3093 = vmatpush.bf16.msra.mxu0 0
      %3094 = vmatpush.bf16.msra.mxu0 0
      %3095 = vmatpush.bf16.msra.mxu0 0
      %3096 = vmatpush.bf16.msra.mxu0 0
      %3097 = vmatpush.bf16.msra.mxu0 %v3085
      %3098 = vmatmul.bf16.gmra.mxu0 %v2622
      %v3099 = vpop.f32.mrf.mxu0
      %v3100 = vadd.f32 0.0, %v3099
      %v3101 = vpop.f32.mrf.mxu0
      %v3102 = vadd.f32 0.0, %v3101
      %3103 = vdwg.mxu0
      %3104 = vmatpush.bf16.msra.mxu0 0
      %3105 = vmatpush.bf16.msra.mxu0 0
      %3106 = vmatpush.bf16.msra.mxu0 0
      %3107 = vmatpush.bf16.msra.mxu0 0
      %3108 = vmatpush.bf16.msra.mxu0 0
      %3109 = vmatpush.bf16.msra.mxu0 0
      %3110 = vmatpush.bf16.msra.mxu0 0
      %3111 = vmatpush.bf16.msra.mxu0 %v3088
      %3112 = vmatmul.bf16.gmra.mxu0 %v2622
      %v3113 = vpop.f32.mrf.mxu0
      %v3114 = vadd.f32 0.0, %v3113
      %v3115 = vpop.f32.mrf.mxu0
      %v3116 = vadd.f32 0.0, %v3115
      %3117 = vdwg.mxu0
      %v3118 = vadd.f32 %v3069, %v3100
      %v3119 = vadd.f32 %v3070, %v3114
      %v3120 = vadd.f32 %v3071, %v3102
      %v3121 = vadd.f32 %v3072, %v3116
      %3122 = vrot.lane.b32.xlu0 %v3077, 109
      %v3123 = vpop.permute.xlu0 %3122
      %3124 = vrot.lane.b32.xlu0 %v3078, 109
      %v3125 = vpop.permute.xlu0 %3124
      %v3126 = vsel %vm957, %v3123, %v3125
      %v3128 = vsel %vm2482, %v3126, 0
      %v3131 = vsel %vm2482, %v3125, 0
      %3133 = vmatpush.bf16.msra.mxu0 0
      %3134 = vmatpush.bf16.msra.mxu0 0
      %3135 = vmatpush.bf16.msra.mxu0 0
      %3136 = vmatpush.bf16.msra.mxu0 0
      %3137 = vmatpush.bf16.msra.mxu0 0
      %3138 = vmatpush.bf16.msra.mxu0 0
      %3139 = vmatpush.bf16.msra.mxu0 0
      %3140 = vmatpush.bf16.msra.mxu0 %v3128
      %3141 = vmatmul.bf16.gmra.mxu0 %v2673
      %v3142 = vpop.f32.mrf.mxu0
      %v3143 = vadd.f32 0.0, %v3142
      %v3144 = vpop.f32.mrf.mxu0
      %v3145 = vadd.f32 0.0, %v3144
      %3146 = vdwg.mxu0
      %3147 = vmatpush.bf16.msra.mxu0 0
      %3148 = vmatpush.bf16.msra.mxu0 0
      %3149 = vmatpush.bf16.msra.mxu0 0
      %3150 = vmatpush.bf16.msra.mxu0 0
      %3151 = vmatpush.bf16.msra.mxu0 0
      %3152 = vmatpush.bf16.msra.mxu0 0
      %3153 = vmatpush.bf16.msra.mxu0 0
      %3154 = vmatpush.bf16.msra.mxu0 %v3131
      %3155 = vmatmul.bf16.gmra.mxu0 %v2673
      %v3156 = vpop.f32.mrf.mxu0
      %v3157 = vadd.f32 0.0, %v3156
      %v3158 = vpop.f32.mrf.mxu0
      %v3159 = vadd.f32 0.0, %v3158
      %3160 = vdwg.mxu0
      %v3161 = vadd.f32 %v3118, %v3143
      %v3162 = vadd.f32 %v3119, %v3157
      %v3163 = vadd.f32 %v3120, %v3145
      %v3164 = vadd.f32 %v3121, %v3159
      %3165 = vrot.lane.b32.xlu0 %v3077, 108
      %v3166 = vpop.permute.xlu0 %3165
      %3167 = vrot.lane.b32.xlu0 %v3078, 108
      %v3168 = vpop.permute.xlu0 %3167
      %v3169 = vsel %vm1016, %v3166, %v3168
      %v3171 = vsel %vm2482, %v3169, 0
      %v3174 = vsel %vm2482, %v3168, 0
      %3176 = vmatpush.bf16.msra.mxu0 0
      %3177 = vmatpush.bf16.msra.mxu0 0
      %3178 = vmatpush.bf16.msra.mxu0 0
      %3179 = vmatpush.bf16.msra.mxu0 0
      %3180 = vmatpush.bf16.msra.mxu0 0
      %3181 = vmatpush.bf16.msra.mxu0 0
      %3182 = vmatpush.bf16.msra.mxu0 0
      %3183 = vmatpush.bf16.msra.mxu0 %v3171
      %3184 = vmatmul.bf16.gmra.mxu0 %v2724
      %v3185 = vpop.f32.mrf.mxu0
      %v3186 = vadd.f32 0.0, %v3185
      %v3187 = vpop.f32.mrf.mxu0
      %v3188 = vadd.f32 0.0, %v3187
      %3189 = vdwg.mxu0
      %3190 = vmatpush.bf16.msra.mxu0 0
      %3191 = vmatpush.bf16.msra.mxu0 0
      %3192 = vmatpush.bf16.msra.mxu0 0
      %3193 = vmatpush.bf16.msra.mxu0 0
      %3194 = vmatpush.bf16.msra.mxu0 0
      %3195 = vmatpush.bf16.msra.mxu0 0
      %3196 = vmatpush.bf16.msra.mxu0 0
      %3197 = vmatpush.bf16.msra.mxu0 %v3174
      %3198 = vmatmul.bf16.gmra.mxu0 %v2724
      %v3199 = vpop.f32.mrf.mxu0
      %v3200 = vadd.f32 0.0, %v3199
      %v3201 = vpop.f32.mrf.mxu0
      %v3202 = vadd.f32 0.0, %v3201
      %3203 = vdwg.mxu0
      %v3204 = vadd.f32 %v3161, %v3186
      %v3205 = vadd.f32 %v3162, %v3200
      %v3206 = vadd.f32 %v3163, %v3188
      %v3207 = vadd.f32 %v3164, %v3202
      %3208 = vrot.lane.b32.xlu0 %v2955, 110
      %v3209 = vpop.permute.xlu0 %3208
      %3210 = vrot.lane.b32.xlu0 %v2956, 110
      %v3211 = vpop.permute.xlu0 %3210
      %v3212 = vsel %vm898, %v3209, %v3211
      %v3214 = vsel %vm2482, %v3212, 0
      %v3217 = vsel %vm2482, %v3211, 0
      %3219 = vmatpush.bf16.msra.mxu0 0
      %3220 = vmatpush.bf16.msra.mxu0 0
      %3221 = vmatpush.bf16.msra.mxu0 0
      %3222 = vmatpush.bf16.msra.mxu0 0
      %3223 = vmatpush.bf16.msra.mxu0 0
      %3224 = vmatpush.bf16.msra.mxu0 0
      %3225 = vmatpush.bf16.msra.mxu0 0
      %3226 = vmatpush.bf16.msra.mxu0 %v3214
      %3227 = vmatmul.bf16.gmra.mxu0 %v2775
      %v3228 = vpop.f32.mrf.mxu0
      %v3229 = vadd.f32 0.0, %v3228
      %v3230 = vpop.f32.mrf.mxu0
      %v3231 = vadd.f32 0.0, %v3230
      %3232 = vdwg.mxu0
      %3233 = vmatpush.bf16.msra.mxu0 0
      %3234 = vmatpush.bf16.msra.mxu0 0
      %3235 = vmatpush.bf16.msra.mxu0 0
      %3236 = vmatpush.bf16.msra.mxu0 0
      %3237 = vmatpush.bf16.msra.mxu0 0
      %3238 = vmatpush.bf16.msra.mxu0 0
      %3239 = vmatpush.bf16.msra.mxu0 0
      %3240 = vmatpush.bf16.msra.mxu0 %v3217
      %3241 = vmatmul.bf16.gmra.mxu0 %v2775
      %v3242 = vpop.f32.mrf.mxu0
      %v3243 = vadd.f32 0.0, %v3242
      %v3244 = vpop.f32.mrf.mxu0
      %v3245 = vadd.f32 0.0, %v3244
      %3246 = vdwg.mxu0
      %v3247 = vadd.f32 %v3204, %v3229
      %v3248 = vadd.f32 %v3205, %v3243
      %v3249 = vadd.f32 %v3206, %v3231
      %v3250 = vadd.f32 %v3207, %v3245
      %3251 = vrot.lane.b32.xlu0 %v2955, 109
      %v3252 = vpop.permute.xlu0 %3251
      %3253 = vrot.lane.b32.xlu0 %v2956, 109
      %v3254 = vpop.permute.xlu0 %3253
      %v3255 = vsel %vm957, %v3252, %v3254
      %v3257 = vsel %vm2482, %v3255, 0
      %v3260 = vsel %vm2482, %v3254, 0
      %3262 = vmatpush.bf16.msra.mxu0 0
      %3263 = vmatpush.bf16.msra.mxu0 0
      %3264 = vmatpush.bf16.msra.mxu0 0
      %3265 = vmatpush.bf16.msra.mxu0 0
      %3266 = vmatpush.bf16.msra.mxu0 0
      %3267 = vmatpush.bf16.msra.mxu0 0
      %3268 = vmatpush.bf16.msra.mxu0 0
      %3269 = vmatpush.bf16.msra.mxu0 %v3257
      %3270 = vmatmul.bf16.gmra.mxu0 %v2826
      %v3271 = vpop.f32.mrf.mxu0
      %v3272 = vadd.f32 0.0, %v3271
      %v3273 = vpop.f32.mrf.mxu0
      %v3274 = vadd.f32 0.0, %v3273
      %3275 = vdwg.mxu0
      %3276 = vmatpush.bf16.msra.mxu0 0
      %3277 = vmatpush.bf16.msra.mxu0 0
      %3278 = vmatpush.bf16.msra.mxu0 0
      %3279 = vmatpush.bf16.msra.mxu0 0
      %3280 = vmatpush.bf16.msra.mxu0 0
      %3281 = vmatpush.bf16.msra.mxu0 0
      %3282 = vmatpush.bf16.msra.mxu0 0
      %3283 = vmatpush.bf16.msra.mxu0 %v3260
      %3284 = vmatmul.bf16.gmra.mxu0 %v2826
      %v3285 = vpop.f32.mrf.mxu0
      %v3286 = vadd.f32 0.0, %v3285
      %v3287 = vpop.f32.mrf.mxu0
      %v3288 = vadd.f32 0.0, %v3287
      %3289 = vdwg.mxu0
      %v3290 = vadd.f32 %v3247, %v3272
      %v3291 = vadd.f32 %v3248, %v3286
      %v3292 = vadd.f32 %v3249, %v3274
      %v3293 = vadd.f32 %v3250, %v3288
      %3294 = vrot.lane.b32.xlu0 %v2955, 108
      %v3295 = vpop.permute.xlu0 %3294
      %3296 = vrot.lane.b32.xlu0 %v2956, 108
      %v3297 = vpop.permute.xlu0 %3296
      %v3298 = vsel %vm1016, %v3295, %v3297
      %v3300 = vsel %vm2482, %v3298, 0
      %v3303 = vsel %vm2482, %v3297, 0
      %3305 = vmatpush.bf16.msra.mxu0 0
      %3306 = vmatpush.bf16.msra.mxu0 0
      %3307 = vmatpush.bf16.msra.mxu0 0
      %3308 = vmatpush.bf16.msra.mxu0 0
      %3309 = vmatpush.bf16.msra.mxu0 0
      %3310 = vmatpush.bf16.msra.mxu0 0
      %3311 = vmatpush.bf16.msra.mxu0 0
      %3312 = vmatpush.bf16.msra.mxu0 %v3300
      %3313 = vmatmul.bf16.gmra.mxu0 %v2877
      %v3314 = vpop.f32.mrf.mxu0
      %v3315 = vadd.f32 0.0, %v3314
      %v3316 = vpop.f32.mrf.mxu0
      %v3317 = vadd.f32 0.0, %v3316
      %3318 = vdwg.mxu0
      %3319 = vmatpush.bf16.msra.mxu0 0
      %3320 = vmatpush.bf16.msra.mxu0 0
      %3321 = vmatpush.bf16.msra.mxu0 0
      %3322 = vmatpush.bf16.msra.mxu0 0
      %3323 = vmatpush.bf16.msra.mxu0 0
      %3324 = vmatpush.bf16.msra.mxu0 0
      %3325 = vmatpush.bf16.msra.mxu0 0
      %3326 = vmatpush.bf16.msra.mxu0 %v3303
      %3327 = vmatmul.bf16.gmra.mxu0 %v2877
      %v3328 = vpop.f32.mrf.mxu0
      %v3329 = vadd.f32 0.0, %v3328
      %v3330 = vpop.f32.mrf.mxu0
      %v3331 = vadd.f32 0.0, %v3330
      %3332 = vdwg.mxu0
      %v3333 = vadd.f32 %v3290, %v3315
      %v3334 = vadd.f32 %v3291, %v3329
      %v3335 = vadd.f32 %v3292, %v3317
      %v3336 = vadd.f32 %v3293, %v3331
      %v3337 = vadd.f32 %v3333, %v2920
      %v3338 = vadd.f32 %v3334, %v2920
      %v3339 = vadd.f32 %v3335, %v2925
      %v3340 = vadd.f32 %v3336, %v2925
      %v3341 = vsel %vm1079, %v3337, 0.0
      %v3342 = vsel %vm1080, %v3338, 0.0
      %v3343 = vsel %vm1079, %v3339, 0.0
      %v3344 = vsel %vm1080, %v3340, 0.0
      %v3345 = vpack.c.bf16 %v3342, %v3341
      %v3346 = vpack.c.bf16 %v3344, %v3343
      %3349 = vrot.lane.b32.xlu0 %v3345, 19
      %v3350 = vpop.permute.xlu0 %3349
      %3351 = vrot.lane.b32.xlu0 %v3346, 19
      %v3352 = vpop.permute.xlu0 %3351
      %v3353 = vrot.slane %v3350, 4
      %v3354 = vrot.slane %v3352, 4
      %v3355 = vsel %vm1558, %v3353, %v3350
      %v3356 = vsel %vm1558, %v3354, %v3352
      %3359 = vst.msk [vmem:[#allocation4] sm:$0xff] %vm1565, %v3355
      %3360 = vst.msk [vmem:[#allocation4 + $0x8] sm:$0xff] %vm1565, %v3356
      %v3361 = vld [vmem:[#allocation4] sm:$0xff]
      %v3362 = vld [vmem:[#allocation4 + $0x8] sm:$0xff]
      %v3365 = vunpack.c.l.b16 %v3361
      %v3366 = vunpack.c.h.b16 %v3361
      %v3367 = vunpack.c.l.b16 %v3362
      %v3368 = vunpack.c.h.b16 %v3362
      %v3369 = vpack.c.b16 %v3367, %v3365
      %v3370 = vpack.c.b16 %v3368, %v3366
      %3371 = vrot.lane.b32.xlu0 %v3369, 127
      %v3372 = vpop.permute.xlu0 %3371
      %3373 = vrot.lane.b32.xlu0 %v3370, 127
      %v3374 = vpop.permute.xlu0 %3373
      %v3375 = vsel %vm570, %v3372, %v3374
      %v3379 = vsel %vm1590, %v545, 0
      %3381 = vmatpush.bf16.msra.mxu0 0
      %3382 = vmatpush.bf16.msra.mxu0 0
      %3383 = vmatpush.bf16.msra.mxu0 0
      %3384 = vmatpush.bf16.msra.mxu0 0
      %3385 = vmatpush.bf16.msra.mxu0 0
      %3386 = vmatpush.bf16.msra.mxu0 0
      %3387 = vmatpush.bf16.msra.mxu0 0
      %3388 = vmatpush.bf16.msra.mxu0 %v3375
      %3389 = vmatmul.bf16.gmra.mxu0 %v3379
      %v3390 = vpop.f32.mrf.mxu0
      %v3391 = vadd.f32 0.0, %v3390
      %v3392 = vpop.f32.mrf.mxu0
      %3393 = vdwg.mxu0
      %3394 = vmatpush.bf16.msra.mxu0 0
      %3395 = vmatpush.bf16.msra.mxu0 0
      %3396 = vmatpush.bf16.msra.mxu0 0
      %3397 = vmatpush.bf16.msra.mxu0 0
      %3398 = vmatpush.bf16.msra.mxu0 0
      %3399 = vmatpush.bf16.msra.mxu0 0
      %3400 = vmatpush.bf16.msra.mxu0 0
      %3401 = vmatpush.bf16.msra.mxu0 %v3374
      %3402 = vmatmul.bf16.gmra.mxu0 %v3379
      %v3403 = vpop.f32.mrf.mxu0
      %v3404 = vadd.f32 0.0, %v3403
      %v3405 = vpop.f32.mrf.mxu0
      %3406 = vdwg.mxu0
      %v3410 = vsel %vm1590, %v544, 0
      %3412 = vmatpush.bf16.msra.mxu0 0
      %3413 = vmatpush.bf16.msra.mxu0 0
      %3414 = vmatpush.bf16.msra.mxu0 0
      %3415 = vmatpush.bf16.msra.mxu0 0
      %3416 = vmatpush.bf16.msra.mxu0 0
      %3417 = vmatpush.bf16.msra.mxu0 0
      %3418 = vmatpush.bf16.msra.mxu0 0
      %3419 = vmatpush.bf16.msra.mxu0 %v3369
      %3420 = vmatmul.bf16.gmra.mxu0 %v3410
      %v3421 = vpop.f32.mrf.mxu0
      %v3422 = vadd.f32 %v3391, %v3421
      %v3423 = vpop.f32.mrf.mxu0
      %3424 = vdwg.mxu0
      %3425 = vmatpush.bf16.msra.mxu0 0
      %3426 = vmatpush.bf16.msra.mxu0 0
      %3427 = vmatpush.bf16.msra.mxu0 0
      %3428 = vmatpush.bf16.msra.mxu0 0
      %3429 = vmatpush.bf16.msra.mxu0 0
      %3430 = vmatpush.bf16.msra.mxu0 0
      %3431 = vmatpush.bf16.msra.mxu0 0
      %3432 = vmatpush.bf16.msra.mxu0 %v3370
      %3433 = vmatmul.bf16.gmra.mxu0 %v3410
      %v3434 = vpop.f32.mrf.mxu0
      %v3435 = vadd.f32 %v3404, %v3434
      %v3436 = vpop.f32.mrf.mxu0
      %3437 = vdwg.mxu0
      %3438 = vrot.lane.b32.xlu0 %v3369, 126
      %v3439 = vpop.permute.xlu0 %3438
      %3440 = vrot.lane.b32.xlu0 %v3370, 126
      %v3441 = vpop.permute.xlu0 %3440
      %v3442 = vsel %vm673, %v3439, %v3441
      %v3446 = vsel %vm1590, %v546, 0
      %3448 = vmatpush.bf16.msra.mxu0 0
      %3449 = vmatpush.bf16.msra.mxu0 0
      %3450 = vmatpush.bf16.msra.mxu0 0
      %3451 = vmatpush.bf16.msra.mxu0 0
      %3452 = vmatpush.bf16.msra.mxu0 0
      %3453 = vmatpush.bf16.msra.mxu0 0
      %3454 = vmatpush.bf16.msra.mxu0 0
      %3455 = vmatpush.bf16.msra.mxu0 %v3442
      %3456 = vmatmul.bf16.gmra.mxu0 %v3446
      %v3457 = vpop.f32.mrf.mxu0
      %v3458 = vadd.f32 0.0, %v3457
      %v3459 = vpop.f32.mrf.mxu0
      %3460 = vdwg.mxu0
      %3461 = vmatpush.bf16.msra.mxu0 0
      %3462 = vmatpush.bf16.msra.mxu0 0
      %3463 = vmatpush.bf16.msra.mxu0 0
      %3464 = vmatpush.bf16.msra.mxu0 0
      %3465 = vmatpush.bf16.msra.mxu0 0
      %3466 = vmatpush.bf16.msra.mxu0 0
      %3467 = vmatpush.bf16.msra.mxu0 0
      %3468 = vmatpush.bf16.msra.mxu0 %v3441
      %3469 = vmatmul.bf16.gmra.mxu0 %v3446
      %v3470 = vpop.f32.mrf.mxu0
      %v3471 = vadd.f32 0.0, %v3470
      %v3472 = vpop.f32.mrf.mxu0
      %3473 = vdwg.mxu0
      %v3474 = vadd.f32 %v3422, %v3458
      %v3475 = vadd.f32 %v3435, %v3471
      %v3476 = vld [vmem:[%s477] sm:$0xff]
      %v3477 = vld [vmem:[%s477 + $0x8] sm:$0xff]
      %v3480 = vunpack.c.l.b16 %v3476
      %v3481 = vunpack.c.h.b16 %v3476
      %v3482 = vunpack.c.l.b16 %v3477
      %v3483 = vunpack.c.h.b16 %v3477
      %v3484 = vpack.c.b16 %v3482, %v3480
      %v3485 = vpack.c.b16 %v3483, %v3481
      %v3489 = vsel %vm1590, %v547, 0
      %3491 = vmatpush.bf16.msra.mxu0 0
      %3492 = vmatpush.bf16.msra.mxu0 0
      %3493 = vmatpush.bf16.msra.mxu0 0
      %3494 = vmatpush.bf16.msra.mxu0 0
      %3495 = vmatpush.bf16.msra.mxu0 0
      %3496 = vmatpush.bf16.msra.mxu0 0
      %3497 = vmatpush.bf16.msra.mxu0 0
      %3498 = vmatpush.bf16.msra.mxu0 %v3484
      %3499 = vmatmul.bf16.gmra.mxu0 %v3489
      %v3500 = vpop.f32.mrf.mxu0
      %v3501 = vadd.f32 0.0, %v3500
      %v3502 = vpop.f32.mrf.mxu0
      %3503 = vdwg.mxu0
      %3504 = vmatpush.bf16.msra.mxu0 0
      %3505 = vmatpush.bf16.msra.mxu0 0
      %3506 = vmatpush.bf16.msra.mxu0 0
      %3507 = vmatpush.bf16.msra.mxu0 0
      %3508 = vmatpush.bf16.msra.mxu0 0
      %3509 = vmatpush.bf16.msra.mxu0 0
      %3510 = vmatpush.bf16.msra.mxu0 0
      %3511 = vmatpush.bf16.msra.mxu0 %v3485
      %3512 = vmatmul.bf16.gmra.mxu0 %v3489
      %v3513 = vpop.f32.mrf.mxu0
      %v3514 = vadd.f32 0.0, %v3513
      %v3515 = vpop.f32.mrf.mxu0
      %3516 = vdwg.mxu0
      %v3517 = vadd.f32 %v3474, %v3501
      %v3518 = vadd.f32 %v3475, %v3514
      %3519 = vrot.lane.b32.xlu0 %v3484, 127
      %v3520 = vpop.permute.xlu0 %3519
      %3521 = vrot.lane.b32.xlu0 %v3485, 127
      %v3522 = vpop.permute.xlu0 %3521
      %v3523 = vsel %vm570, %v3520, %v3522
      %v3527 = vsel %vm1590, %v548, 0
      %3529 = vmatpush.bf16.msra.mxu0 0
      %3530 = vmatpush.bf16.msra.mxu0 0
      %3531 = vmatpush.bf16.msra.mxu0 0
      %3532 = vmatpush.bf16.msra.mxu0 0
      %3533 = vmatpush.bf16.msra.mxu0 0
      %3534 = vmatpush.bf16.msra.mxu0 0
      %3535 = vmatpush.bf16.msra.mxu0 0
      %3536 = vmatpush.bf16.msra.mxu0 %v3523
      %3537 = vmatmul.bf16.gmra.mxu0 %v3527
      %v3538 = vpop.f32.mrf.mxu0
      %v3539 = vadd.f32 0.0, %v3538
      %v3540 = vpop.f32.mrf.mxu0
      %3541 = vdwg.mxu0
      %3542 = vmatpush.bf16.msra.mxu0 0
      %3543 = vmatpush.bf16.msra.mxu0 0
      %3544 = vmatpush.bf16.msra.mxu0 0
      %3545 = vmatpush.bf16.msra.mxu0 0
      %3546 = vmatpush.bf16.msra.mxu0 0
      %3547 = vmatpush.bf16.msra.mxu0 0
      %3548 = vmatpush.bf16.msra.mxu0 0
      %3549 = vmatpush.bf16.msra.mxu0 %v3522
      %3550 = vmatmul.bf16.gmra.mxu0 %v3527
      %v3551 = vpop.f32.mrf.mxu0
      %v3552 = vadd.f32 0.0, %v3551
      %v3553 = vpop.f32.mrf.mxu0
      %3554 = vdwg.mxu0
      %v3555 = vadd.f32 %v3517, %v3539
      %v3556 = vadd.f32 %v3518, %v3552
      %3557 = vrot.lane.b32.xlu0 %v3484, 126
      %v3558 = vpop.permute.xlu0 %3557
      %3559 = vrot.lane.b32.xlu0 %v3485, 126
      %v3560 = vpop.permute.xlu0 %3559
      %v3561 = vsel %vm673, %v3558, %v3560
      %v3565 = vsel %vm1590, %v549, 0
      %3567 = vmatpush.bf16.msra.mxu0 0
      %3568 = vmatpush.bf16.msra.mxu0 0
      %3569 = vmatpush.bf16.msra.mxu0 0
      %3570 = vmatpush.bf16.msra.mxu0 0
      %3571 = vmatpush.bf16.msra.mxu0 0
      %3572 = vmatpush.bf16.msra.mxu0 0
      %3573 = vmatpush.bf16.msra.mxu0 0
      %3574 = vmatpush.bf16.msra.mxu0 %v3561
      %3575 = vmatmul.bf16.gmra.mxu0 %v3565
      %v3576 = vpop.f32.mrf.mxu0
      %v3577 = vadd.f32 0.0, %v3576
      %v3578 = vpop.f32.mrf.mxu0
      %3579 = vdwg.mxu0
      %3580 = vmatpush.bf16.msra.mxu0 0
      %3581 = vmatpush.bf16.msra.mxu0 0
      %3582 = vmatpush.bf16.msra.mxu0 0
      %3583 = vmatpush.bf16.msra.mxu0 0
      %3584 = vmatpush.bf16.msra.mxu0 0
      %3585 = vmatpush.bf16.msra.mxu0 0
      %3586 = vmatpush.bf16.msra.mxu0 0
      %3587 = vmatpush.bf16.msra.mxu0 %v3560
      %3588 = vmatmul.bf16.gmra.mxu0 %v3565
      %v3589 = vpop.f32.mrf.mxu0
      %v3590 = vadd.f32 0.0, %v3589
      %v3591 = vpop.f32.mrf.mxu0
      %3592 = vdwg.mxu0
      %v3593 = vadd.f32 %v3555, %v3577
      %v3594 = vadd.f32 %v3556, %v3590
      %3595 = vrot.lane.b32.xlu0 %v3369, 110
      %v3596 = vpop.permute.xlu0 %3595
      %3597 = vrot.lane.b32.xlu0 %v3370, 110
      %v3598 = vpop.permute.xlu0 %3597
      %v3599 = vsel %vm898, %v3596, %v3598
      %v3603 = vsel %vm1590, %v550, 0
      %3605 = vmatpush.bf16.msra.mxu0 0
      %3606 = vmatpush.bf16.msra.mxu0 0
      %3607 = vmatpush.bf16.msra.mxu0 0
      %3608 = vmatpush.bf16.msra.mxu0 0
      %3609 = vmatpush.bf16.msra.mxu0 0
      %3610 = vmatpush.bf16.msra.mxu0 0
      %3611 = vmatpush.bf16.msra.mxu0 0
      %3612 = vmatpush.bf16.msra.mxu0 %v3599
      %3613 = vmatmul.bf16.gmra.mxu0 %v3603
      %v3614 = vpop.f32.mrf.mxu0
      %v3615 = vadd.f32 0.0, %v3614
      %v3616 = vpop.f32.mrf.mxu0
      %3617 = vdwg.mxu0
      %3618 = vmatpush.bf16.msra.mxu0 0
      %3619 = vmatpush.bf16.msra.mxu0 0
      %3620 = vmatpush.bf16.msra.mxu0 0
      %3621 = vmatpush.bf16.msra.mxu0 0
      %3622 = vmatpush.bf16.msra.mxu0 0
      %3623 = vmatpush.bf16.msra.mxu0 0
      %3624 = vmatpush.bf16.msra.mxu0 0
      %3625 = vmatpush.bf16.msra.mxu0 %v3598
      %3626 = vmatmul.bf16.gmra.mxu0 %v3603
      %v3627 = vpop.f32.mrf.mxu0
      %v3628 = vadd.f32 0.0, %v3627
      %v3629 = vpop.f32.mrf.mxu0
      %3630 = vdwg.mxu0
      %v3631 = vadd.f32 %v3593, %v3615
      %v3632 = vadd.f32 %v3594, %v3628
      %3633 = vrot.lane.b32.xlu0 %v3369, 109
      %v3634 = vpop.permute.xlu0 %3633
      %3635 = vrot.lane.b32.xlu0 %v3370, 109
      %v3636 = vpop.permute.xlu0 %3635
      %v3637 = vsel %vm957, %v3634, %v3636
      %v3641 = vsel %vm1590, %v551, 0
      %3643 = vmatpush.bf16.msra.mxu0 0
      %3644 = vmatpush.bf16.msra.mxu0 0
      %3645 = vmatpush.bf16.msra.mxu0 0
      %3646 = vmatpush.bf16.msra.mxu0 0
      %3647 = vmatpush.bf16.msra.mxu0 0
      %3648 = vmatpush.bf16.msra.mxu0 0
      %3649 = vmatpush.bf16.msra.mxu0 0
      %3650 = vmatpush.bf16.msra.mxu0 %v3637
      %3651 = vmatmul.bf16.gmra.mxu0 %v3641
      %v3652 = vpop.f32.mrf.mxu0
      %v3653 = vadd.f32 0.0, %v3652
      %v3654 = vpop.f32.mrf.mxu0
      %3655 = vdwg.mxu0
      %3656 = vmatpush.bf16.msra.mxu0 0
      %3657 = vmatpush.bf16.msra.mxu0 0
      %3658 = vmatpush.bf16.msra.mxu0 0
      %3659 = vmatpush.bf16.msra.mxu0 0
      %3660 = vmatpush.bf16.msra.mxu0 0
      %3661 = vmatpush.bf16.msra.mxu0 0
      %3662 = vmatpush.bf16.msra.mxu0 0
      %3663 = vmatpush.bf16.msra.mxu0 %v3636
      %3664 = vmatmul.bf16.gmra.mxu0 %v3641
      %v3665 = vpop.f32.mrf.mxu0
      %v3666 = vadd.f32 0.0, %v3665
      %v3667 = vpop.f32.mrf.mxu0
      %3668 = vdwg.mxu0
      %v3669 = vadd.f32 %v3631, %v3653
      %v3670 = vadd.f32 %v3632, %v3666
      %3671 = vrot.lane.b32.xlu0 %v3369, 108
      %v3672 = vpop.permute.xlu0 %3671
      %3673 = vrot.lane.b32.xlu0 %v3370, 108
      %v3674 = vpop.permute.xlu0 %3673
      %v3675 = vsel %vm1016, %v3672, %v3674
      %v3679 = vsel %vm1590, %v552, 0
      %3681 = vmatpush.bf16.msra.mxu0 0
      %3682 = vmatpush.bf16.msra.mxu0 0
      %3683 = vmatpush.bf16.msra.mxu0 0
      %3684 = vmatpush.bf16.msra.mxu0 0
      %3685 = vmatpush.bf16.msra.mxu0 0
      %3686 = vmatpush.bf16.msra.mxu0 0
      %3687 = vmatpush.bf16.msra.mxu0 0
      %3688 = vmatpush.bf16.msra.mxu0 %v3675
      %3689 = vmatmul.bf16.gmra.mxu0 %v3679
      %v3690 = vpop.f32.mrf.mxu0
      %v3691 = vadd.f32 0.0, %v3690
      %v3692 = vpop.f32.mrf.mxu0
      %3693 = vdwg.mxu0
      %3694 = vmatpush.bf16.msra.mxu0 0
      %3695 = vmatpush.bf16.msra.mxu0 0
      %3696 = vmatpush.bf16.msra.mxu0 0
      %3697 = vmatpush.bf16.msra.mxu0 0
      %3698 = vmatpush.bf16.msra.mxu0 0
      %3699 = vmatpush.bf16.msra.mxu0 0
      %3700 = vmatpush.bf16.msra.mxu0 0
      %3701 = vmatpush.bf16.msra.mxu0 %v3674
      %3702 = vmatmul.bf16.gmra.mxu0 %v3679
      %v3703 = vpop.f32.mrf.mxu0
      %v3704 = vadd.f32 0.0, %v3703
      %v3705 = vpop.f32.mrf.mxu0
      %3706 = vdwg.mxu0
      %v3707 = vadd.f32 %v3669, %v3691
      %v3708 = vadd.f32 %v3670, %v3704
      %3710 = vset.pattern.permute.xlu0 0
      %3711 = vperm.xlu0 %3710, %v553
      %v3712 = vpop.permute.xlu0 %3711
      %v3714 = vadd.f32 %v3707, %v3712
      %v3715 = vadd.f32 %v3708, %v3712
      %3716 = vst [vmem:[%s386] sm:$0x3f] %v3714
      %vm3717 = vcmask 128000
      %3718 = vst.msk [vmem:[%s386 + $0x8] sm:$0x3f] %vm3717, %v3715
      %p3719 = scmp.lt.s32.totalorder %s22, 1
      %s3720 = scalar_select %p3719, %s22, 1
      %s3721 = smul.addr %s3720, 2
      %s3722 = smul.addr %s3721, 8
      %s3723 = scalar_lea.vmem %s11, %s3722
      // Predicated region
      $region65: #{dvdnet_forward.1} parent=63 // pred_check
        %p3724 = pneg %p276
      $region66: #{dvdnet_forward.1} parent=63 // pred_check_branch
        %3726 = sbr.rel (%p3724) target = $region68
      $region67: #{dvdnet_forward.1} parent=63 // pred_region
        _
      $region68: #{dvdnet_forward.1} parent=63 // pred_fallthru
        _
    $region64: #{dvdnet_forward.1} parent=5 // pred_fallthru
      _
    %p3727 = scmp.le.s32.totalorder 2, %s17
    // Predicated region
    $region69: #{dvdnet_forward.1} parent=5 // pred_check
      %p3728 = pneg %p3727
    $region70: #{dvdnet_forward.1} parent=5 // pred_check_branch
      %3730 = sbr.rel (%p3728) target = $region72
    $region71: #{dvdnet_forward.1} parent=5 // pred_region
      %s3731 = ssub.s32 %s17, 2
      // Predicated region
      $region73: #{dvdnet_forward.1} parent=71 // pred_check
        %p3732 = pneg %p282
      $region74: #{dvdnet_forward.1} parent=71 // pred_check_branch
        %3734 = sbr.rel (%p3732) target = $region76
      $region75: #{dvdnet_forward.1} parent=71 // pred_region
        %p3735 = scmp.lt.s32.totalorder %s23, 1
        %s3736 = scalar_select %p3735, %s23, 1
        %s3737 = smul.addr %s3736, 2
        %s3738 = smul.addr %s3737, 8
        %s3739 = scalar_lea.vmem %s11, %s3738
      $region76: #{dvdnet_forward.1} parent=71 // pred_fallthru
        _
    $region72: #{dvdnet_forward.1} parent=5 // pred_fallthru
      _
  $region6: #{dvdnet_forward.1} parent=0 // loop_footer
    %s21 = sadd.s32 1, %s17
  $region7: #{dvdnet_forward.1} parent=0 // loop_footer_branch
    %16 = sbr.rel target = $region3
  $region8: #{dvdnet_forward.1} parent=0 // loop_exit
    _

</llo_original>
